<compile_context>
chip_gen: v5e
topology: v5e:2x2
jax: 0.10.0
libtpu: 0.0.40
codegen_flags: <defaults>
</compile_context>

<pallas_src>
import functools

import jax
import jax.numpy as jnp
from jax.experimental import pallas as pl
from jax.experimental.pallas import tpu as pltpu

D_MID = 2048  # hardcoded in the nn.Sequential


def _critic_kernel(x_ref, w1_ref, b1_ref, w2_ref, b2_ref, w3_ref,
                   yp_ref, acc_ref, *, tk):
    """Fused 3-layer MLP over a 2-D grid (j, k).

    j ("parallel")  : column slab of layer-2 output (W2/W3 columns) -> megacore.
    k ("arbitrary") : tile of the 2048-wide layer-1 output / layer-2 contraction.

    Per (j, k): recompute h1_k = relu(x @ W1[:, k-tile] + b1[k-tile]) (cheap, x
    and W1 are VMEM-resident) and accumulate its contribution to the j-th slab
    of layer 2.  On the last k step, bias+ReLU the slab and reduce it against
    the lane-major W3 slab on the VPU, emitting a partial scalar per batch row.
    """
    k = pl.program_id(1)

    @pl.when(k == 0)
    def _():
        acc_ref[...] = jnp.zeros_like(acc_ref)

    # W1/b1 are fully resident; slice the current column tile in-register.
    start = pl.multiple_of(k * tk, 128)
    w1_blk = w1_ref[:, pl.ds(start, tk)]
    b1_blk = b1_ref[:, pl.ds(start, tk)]

    x = x_ref[...].astype(w1_blk.dtype)
    h1 = jnp.dot(x, w1_blk, preferred_element_type=jnp.float32)
    h1 = jnp.maximum(h1 + b1_blk, 0.0)

    # Partial layer 2 for this (k, j) tile of W2, accumulated in f32 VMEM.
    acc_ref[...] += jnp.dot(h1.astype(w2_ref.dtype), w2_ref[...],
                            preferred_element_type=jnp.float32)

    @pl.when(k == pl.num_programs(1) - 1)
    def _():
        h2 = jnp.maximum(acc_ref[...] + b2_ref[...], 0.0)
        # Lane-major W3: VPU multiply + lane reduce instead of an MXU pass with
        # N=1 (avoids a lane-padded (2048, 1) VMEM block).
        y = jnp.sum(h2 * w3_ref[...], axis=1, keepdims=True)    # (B, 1)
        yp_ref[...] = y[None].astype(yp_ref.dtype)               # (1, B, 1)


@functools.partial(jax.jit, static_argnames=("tk", "tn", "weight_dtype"))
def critic_forward(x, w1, b1, w2, b2, w3, b3, *, tk=1024, tn=1024,
                   weight_dtype=None):
    B, H = x.shape
    assert w1.shape == (H, D_MID) and w2.shape == (D_MID, D_MID)
    assert w3.shape == (D_MID, 1)
    assert D_MID % tk == 0 and D_MID % tn == 0
    assert tk % 128 == 0 and tn % 128 == 0
    # B and H are used as full-array blocks, so any size is *correct*;
    # (8, 128)-friendly sizes (B % 8 == 0, H % 128 == 0) avoid padding waste.

    if weight_dtype is not None:
        # Optional reduced-precision weight streaming (f32 accumulation kept).
        w1 = w1.astype(weight_dtype)
        w2 = w2.astype(weight_dtype)
        w3 = w3.astype(weight_dtype)

    n_j = D_MID // tn
    n_k = D_MID // tk

    # Biases as 2-D rows (kept f32); W3 lane-major for the VPU reduce.
    b1r = b1.reshape(1, D_MID).astype(jnp.float32)
    b2r = b2.reshape(1, D_MID).astype(jnp.float32)
    w3r = w3.reshape(1, D_MID)

    nbytes = lambda a: a.size * a.dtype.itemsize
    bytes_accessed = (nbytes(x) + nbytes(w1) + nbytes(w2) + nbytes(w3r)
                      + nbytes(b1r) + nbytes(b2r) + n_j * B * 4)
    flops = 2 * B * (H * D_MID + D_MID * D_MID + D_MID)

    partials = pl.pallas_call(
        functools.partial(_critic_kernel, tk=tk),
        out_shape=jax.ShapeDtypeStruct((n_j, B, 1), jnp.float32),
        grid_spec=pltpu.PrefetchScalarGridSpec(
            num_scalar_prefetch=0,
            grid=(n_j, n_k),
            in_specs=[
                pl.BlockSpec((B, H), lambda j, k: (0, 0)),       # x   (resident)
                pl.BlockSpec((H, D_MID), lambda j, k: (0, 0)),   # W1  (resident, 1 DMA)
                pl.BlockSpec((1, D_MID), lambda j, k: (0, 0)),   # b1  (resident)
                pl.BlockSpec((tk, tn), lambda j, k: (k, j)),     # W2 tile (streamed)
                pl.BlockSpec((1, tn), lambda j, k: (0, j)),      # b2 column slab
                pl.BlockSpec((1, tn), lambda j, k: (0, j)),      # W3 (lane-major) slab
            ],
            out_specs=pl.BlockSpec((1, B, 1), lambda j, k: (j, 0, 0)),
            scratch_shapes=[pltpu.VMEM((B, tn), jnp.float32)],
        ),
        compiler_params=pltpu.CompilerParams(
            dimension_semantics=("parallel", "arbitrary"),
            vmem_limit_bytes=28 * 1024 * 1024,
        ),
        cost_estimate=pl.CostEstimate(flops=flops, transcendentals=0,
                                      bytes_accessed=bytes_accessed),
    )(x, w1, b1r, w2, b2r, w3r)

    # Tiny cross-slab reduction (n_j * B floats) + final bias in the wrapper.
    return (partials.sum(axis=0) + b3.reshape(1, 1)).astype(x.dtype)


def _init_linear(key, fan_in, fan_out):
    # Deterministic init mimicking torch.nn.Linear: U(-1/sqrt(fan_in), +1/sqrt(fan_in)).
    kw, kb = jax.random.split(key)
    bound = 1.0 / jnp.sqrt(fan_in)
    w = jax.random.uniform(kw, (fan_in, fan_out), jnp.float32, -bound, bound)
    b = jax.random.uniform(kb, (fan_out,), jnp.float32, -bound, bound)
    return w, b


def _reference(x, w1, b1, w2, b2, w3, b3):
    h1 = jnp.maximum(x @ w1 + b1, 0.0)
    h2 = jnp.maximum(h1 @ w2 + b2, 0.0)
    return h2 @ w3 + b3


if __name__ == "__main__":
    # Small batch / input hidden size (the module's internal widths stay at 2048
    # as hardcoded in the nn.Sequential).
    B, H = 8, 256

    root = jax.random.PRNGKey(0)
    kx, k1, k2, k3 = jax.random.split(root, 4)

    x = jax.random.normal(kx, (B, H), jnp.float32)
    w1, b1 = _init_linear(k1, H, D_MID)
    w2, b2 = _init_linear(k2, D_MID, D_MID)
    w3, b3 = _init_linear(k3, D_MID, 1)

    ref = _reference(x, w1, b1, w2, b2, w3, b3)

    # f32 weight streaming: matches the PyTorch module semantics.
    out = jax.block_until_ready(critic_forward(x, w1, b1, w2, b2, w3, b3))
    assert out.shape == (B, 1)
    assert jnp.allclose(out, ref, atol=1e-4, rtol=1e-4), "f32 mismatch vs reference"

    # Optional bf16 weight streaming (halves HBM bytes on this bandwidth-bound
    # kernel); f32 accumulation keeps the error small.
    out_bf16 = jax.block_until_ready(
        critic_forward(x, w1, b1, w2, b2, w3, b3, weight_dtype=jnp.bfloat16))
    assert out_bf16.shape == (B, 1)
    assert jnp.allclose(out_bf16, ref, atol=5e-2, rtol=5e-2), "bf16 drifted too far"

    print("KERNEL_OK")
</pallas_src>

<mosaic_0001>
module attributes {stable_mosaic.version = 11 : i64} {
  func.func @_critic_kernel(%arg0: i32, %arg1: i32, %arg2: memref<8x256xf32, #tpu.memory_space<vmem>>, %arg3: memref<256x2048xf32, #tpu.memory_space<vmem>>, %arg4: memref<1x2048xf32, #tpu.memory_space<vmem>>, %arg5: memref<1024x1024xf32, #tpu.memory_space<vmem>>, %arg6: memref<1x1024xf32, #tpu.memory_space<vmem>>, %arg7: memref<1x1024xf32, #tpu.memory_space<vmem>>, %arg8: memref<1x8x1xf32, #tpu.memory_space<vmem>>, %arg9: memref<8x1024xf32, #tpu.memory_space<vmem>>) attributes {dimension_semantics = [#tpu.dimension_semantics<parallel>, #tpu.dimension_semantics<arbitrary>], iteration_bounds = array<i64: 2, 2>, scalar_prefetch = 0 : i64, scratch_operands = 1 : i64, tpu.core_type = #tpu.core_type<tc>, window_params = [{pipeline_mode = #tpu.pipeline_mode<synchronous>, transform_indices = @transform_0, window_bounds = array<i64: 8, 256>}, {pipeline_mode = #tpu.pipeline_mode<synchronous>, transform_indices = @transform_1, window_bounds = array<i64: 256, 2048>}, {pipeline_mode = #tpu.pipeline_mode<synchronous>, transform_indices = @transform_2, window_bounds = array<i64: 1, 2048>}, {transform_indices = @transform_3, window_bounds = array<i64: 1024, 1024>}, {transform_indices = @transform_4, window_bounds = array<i64: 1, 1024>}, {transform_indices = @transform_5, window_bounds = array<i64: 1, 1024>}, {transform_indices = @transform_6, window_bounds = array<i64: 1, 8, 1>}]} {
    %c0_i32 = arith.constant 0 : i32
    %0 = arith.cmpi eq, %arg1, %c0_i32 : i32
    %1 = arith.extui %0 : i1 to i32
    %c0_i32_0 = arith.constant 0 : i32
    %2 = arith.cmpi ne, %1, %c0_i32_0 : i32
    scf.if %2 {
      %cst_13 = arith.constant 0.000000e+00 : f32
      %23 = vector.broadcast %cst_13 : f32 to vector<8x1024xf32>
      %c0_14 = arith.constant 0 : index
      %c0_15 = arith.constant 0 : index
      %24 = vector.load %arg9[%c0_14, %c0_15] : memref<8x1024xf32, #tpu.memory_space<vmem>>, vector<8x1024xf32>
      tpu.vector_store %arg9[%c0_14, %c0_15], %23 {strides = array<i32>} : memref<8x1024xf32, #tpu.memory_space<vmem>>, vector<8x1024xf32>,
    } else {
    }
    %c1024_i32 = arith.constant 1024 : i32
    %3 = arith.muli %arg1, %c1024_i32 : i32
    %4 = tpu.assume_multiple %3, 128 : i32
    %c0 = arith.constant 0 : index
    %5 = arith.index_cast %4 : i32 to index
    %6 = vector.load %arg3[%c0, %5] : memref<256x2048xf32, #tpu.memory_space<vmem>>, vector<256x1024xf32>
    %c0_1 = arith.constant 0 : index
    %7 = arith.index_cast %4 : i32 to index
    %8 = vector.load %arg4[%c0_1, %7] : memref<1x2048xf32, #tpu.memory_space<vmem>>, vector<1x1024xf32>
    %c0_2 = arith.constant 0 : index
    %c0_3 = arith.constant 0 : index
    %9 = vector.load %arg2[%c0_2, %c0_3] : memref<8x256xf32, #tpu.memory_space<vmem>>, vector<8x256xf32>
    %cst = arith.constant dense<0.000000e+00> : vector<8x1024xf32>
    %10 = tpu.matmul %9, %6, %cst {dimension_numbers = #tpu.dot_dimension_numbers<[1], [0], [0], [1], [0, 0, 1, 1], [], []>} : vector<8x256xf32>, vector<256x1024xf32>, vector<8x1024xf32> -> vector<8x1024xf32>
    %11 = vector.broadcast %8 : vector<1x1024xf32> to vector<8x1024xf32>
    %12 = arith.addf %10, %11 : vector<8x1024xf32>
    %cst_4 = arith.constant 0.000000e+00 : f32
    %13 = vector.broadcast %cst_4 : f32 to vector<8x1024xf32>
    %14 = arith.maximumf %12, %13 : vector<8x1024xf32>
    %c0_5 = arith.constant 0 : index
    %c0_6 = arith.constant 0 : index
    %15 = vector.load %arg9[%c0_5, %c0_6] : memref<8x1024xf32, #tpu.memory_space<vmem>>, vector<8x1024xf32>
    %c0_7 = arith.constant 0 : index
    %c0_8 = arith.constant 0 : index
    %16 = vector.load %arg5[%c0_7, %c0_8] : memref<1024x1024xf32, #tpu.memory_space<vmem>>, vector<1024x1024xf32>
    %cst_9 = arith.constant dense<0.000000e+00> : vector<8x1024xf32>
    %17 = tpu.matmul %14, %16, %cst_9 {dimension_numbers = #tpu.dot_dimension_numbers<[1], [0], [0], [1], [0, 0, 1, 1], [], []>} : vector<8x1024xf32>, vector<1024x1024xf32>, vector<8x1024xf32> -> vector<8x1024xf32>
    %18 = arith.addf %15, %17 : vector<8x1024xf32>
    %c0_10 = arith.constant 0 : index
    %c0_11 = arith.constant 0 : index
    %19 = vector.load %arg9[%c0_10, %c0_11] : memref<8x1024xf32, #tpu.memory_space<vmem>>, vector<8x1024xf32>
    tpu.vector_store %arg9[%c0_10, %c0_11], %18 {strides = array<i32>} : memref<8x1024xf32, #tpu.memory_space<vmem>>, vector<8x1024xf32>,
    %c1_i32 = arith.constant 1 : i32
    %20 = arith.cmpi eq, %arg1, %c1_i32 : i32
    %21 = arith.extui %20 : i1 to i32
    %c0_i32_12 = arith.constant 0 : i32
    %22 = arith.cmpi ne, %21, %c0_i32_12 : i32
    scf.if %22 {
      %c0_13 = arith.constant 0 : index
      %c0_14 = arith.constant 0 : index
      %23 = vector.load %arg9[%c0_13, %c0_14] : memref<8x1024xf32, #tpu.memory_space<vmem>>, vector<8x1024xf32>
      %c0_15 = arith.constant 0 : index
      %c0_16 = arith.constant 0 : index
      %24 = vector.load %arg6[%c0_15, %c0_16] : memref<1x1024xf32, #tpu.memory_space<vmem>>, vector<1x1024xf32>
      %25 = vector.broadcast %24 : vector<1x1024xf32> to vector<8x1024xf32>
      %26 = arith.addf %23, %25 : vector<8x1024xf32>
      %cst_17 = arith.constant 0.000000e+00 : f32
      %27 = vector.broadcast %cst_17 : f32 to vector<8x1024xf32>
      %28 = arith.maximumf %26, %27 : vector<8x1024xf32>
      %c0_18 = arith.constant 0 : index
      %c0_19 = arith.constant 0 : index
      %29 = vector.load %arg7[%c0_18, %c0_19] : memref<1x1024xf32, #tpu.memory_space<vmem>>, vector<1x1024xf32>
      %30 = vector.broadcast %29 : vector<1x1024xf32> to vector<8x1024xf32>
      %31 = arith.mulf %28, %30 : vector<8x1024xf32>
      %cst_20 = arith.constant dense<0.000000e+00> : vector<8xf32>
      %32 = vector.multi_reduction <add>, %31, %cst_20 [1] : vector<8x1024xf32> to vector<8xf32>
      %33 = vector.shape_cast %32 : vector<8xf32> to vector<8x1xf32>
      %34 = vector.shape_cast %33 : vector<8x1xf32> to vector<1x8x1xf32>
      %c0_21 = arith.constant 0 : index
      %c0_22 = arith.constant 0 : index
      %c0_23 = arith.constant 0 : index
      %35 = vector.load %arg8[%c0_21, %c0_22, %c0_23] : memref<1x8x1xf32, #tpu.memory_space<vmem>>, vector<1x8x1xf32>
      tpu.vector_store %arg8[%c0_21, %c0_22, %c0_23], %34 {strides = array<i32>} : memref<1x8x1xf32, #tpu.memory_space<vmem>>, vector<1x8x1xf32>,
    } else {
    }
    return
  }
  func.func @transform_0(%arg0: i32, %arg1: i32) -> (i32, i32) {
    %c0_i32 = arith.constant 0 : i32
    %c0_i32_0 = arith.constant 0 : i32
    %c0_i32_1 = arith.constant 0 : i32
    return %c0_i32, %c0_i32_0 : i32, i32
  }
  func.func @transform_1(%arg0: i32, %arg1: i32) -> (i32, i32) {
    %c0_i32 = arith.constant 0 : i32
    %c0_i32_0 = arith.constant 0 : i32
    %c0_i32_1 = arith.constant 0 : i32
    return %c0_i32, %c0_i32_0 : i32, i32
  }
  func.func @transform_2(%arg0: i32, %arg1: i32) -> (i32, i32) {
    %c0_i32 = arith.constant 0 : i32
    %c0_i32_0 = arith.constant 0 : i32
    %c0_i32_1 = arith.constant 0 : i32
    return %c0_i32, %c0_i32_0 : i32, i32
  }
  func.func @transform_3(%arg0: i32, %arg1: i32) -> (i32, i32) {
    %c0_i32 = arith.constant 0 : i32
    return %arg1, %arg0 : i32, i32
  }
  func.func @transform_4(%arg0: i32, %arg1: i32) -> (i32, i32) {
    %c0_i32 = arith.constant 0 : i32
    %c0_i32_0 = arith.constant 0 : i32
    return %c0_i32, %arg0 : i32, i32
  }
  func.func @transform_5(%arg0: i32, %arg1: i32) -> (i32, i32) {
    %c0_i32 = arith.constant 0 : i32
    %c0_i32_0 = arith.constant 0 : i32
    return %c0_i32, %arg0 : i32, i32
  }
  func.func @transform_6(%arg0: i32, %arg1: i32) -> (i32, i32, i32) {
    %c0_i32 = arith.constant 0 : i32
    %c0_i32_0 = arith.constant 0 : i32
    %c0_i32_1 = arith.constant 0 : i32
    return %arg0, %c0_i32, %c0_i32_0 : i32, i32, i32
  }
}

</mosaic_0001>

<llo_original>
// kernel: critic_forward.1
$region0: #{critic_forward.1}
  #allocation0 [shape = 'u32[]', space=smem, size = 0x4, offset = 0x4, fixed_abs, tag = 'smem constant byte address 0x4 - core index']
  #allocation1 [shape = 'u32[72,128]{1,0:T(1,128)}', space=vmem, size = 0x9000, scoped, tag = 'internal scratch']
  #allocation2 [shape = 'f32[8,1024]{1,0:T(8,128)}', space=vmem, size = 0x8000, scoped, tag = 'scratch operand']
  %s0 = inlined_call_operand.hbm [shape: f32[8,256], index: 0, kind: input, shape index: {}]
  %s1 = inlined_call_operand.hbm [shape: f32[256,2048], index: 1, kind: input, shape index: {}]
  %s2 = inlined_call_operand.hbm [shape: f32[1,2048], index: 2, kind: input, shape index: {}]
  %s3 = inlined_call_operand.hbm [shape: f32[2048,2048], index: 3, kind: input, shape index: {}]
  %s4 = inlined_call_operand.hbm [shape: f32[1,2048], index: 4, kind: input, shape index: {}]
  %s5 = inlined_call_operand.hbm [shape: f32[1,2048], index: 5, kind: input, shape index: {}]
  %s6 = inlined_call_operand.vmem [shape: f32[2,8,1], index: 6, kind: output, shape index: {}]
  %s7 = sld [smem:[#allocation0]]
  $region89: #{critic_forward.1} parent=0
    _
  %s9 = ssub.s32 1, %s7
  %s10 = scalar_select 0, %s9, %s7
  $region1: #{critic_forward.1} parent=0
    #allocation3 [shape = 'u8[8192]{0}', space=vmem, size = 0x2000, scoped, tag = 'input window, operand 0, single buffered']
    #allocation4 [shape = 's32[2]{0}', space=sflag, size = 0x8, scoped, tag = 'scoped memory for critic_forward.1']
    #allocation5 [shape = 'u8[2097152]{0}', space=vmem, size = 0x200000, scoped, tag = 'input window, operand 1, single buffered']
    #allocation6 [shape = 's32[1]{0}', space=sflag, size = 0x4, scoped, tag = 'scoped memory for critic_forward.1']
    #allocation7 [shape = 'u8[8192]{0}', space=vmem, size = 0x2000, scoped, tag = 'input window, operand 2, single buffered']
    #allocation8 [shape = 'u8[8388608]{0}', space=vmem, size = 0x800000, scoped, tag = 'input window, operand 3']
    #allocation9 [shape = 's32[2]{0}', space=sflag, size = 0x8, scoped, tag = 'scoped memory for critic_forward.1']
    #allocation10 [shape = 'u8[8192]{0}', space=vmem, size = 0x2000, scoped, tag = 'input window, operand 4']
    #allocation11 [shape = 'u8[8192]{0}', space=vmem, size = 0x2000, scoped, tag = 'input window, operand 5']
    #allocation12 [shape = 's32[2]{0}', space=sflag, size = 0x8, scoped, tag = 'scoped memory for critic_forward.1']
    %11 = vsyncpa [#allocation4], 0
    %12 = vsyncpa [#allocation6], 0
    %13 = vsyncpa [#allocation9], 0
    %s14 = scalar_lea.sflag [#allocation9], 1
    %15 = vsyncpa %s14, 0
    %16 = vsyncpa [#allocation12], 0
    %s17 = scalar_lea.sflag [#allocation12], 1
    %18 = vsyncpa %s17, 0
    loop: start=0, step=1, limit=6
    $region2: #{critic_forward.1} parent=1 // loop_pre_header
      _
    $region3: #{critic_forward.1} parent=1 // loop_header
      %s20 = sphi 0, %s24
      %p21 = scmp.ge.s32.totalorder %s20, 6
      %s27 = sphi 0, %s39
      %s28 = sphi 0, %s35
      %s29 = sphi 0, %s27
      %s30 = sphi 0, %s28
      %s31 = sphi 0, %s29
      %s32 = sphi 0, %s30
      %s40 = sphi 0, %s40
      %s42 = sphi 0, %s40
      %s43 = sphi 0, %s42
      %s57 = sphi 0, %s43
      %s61 = sphi 0, %s61
      %s63 = sphi 0, %s61
      %s64 = sphi 0, %s63
      %s78 = sphi 0, %s64
      %s82 = sphi 0, %s82
      %s84 = sphi 0, %s82
      %s85 = sphi 0, %s84
      %s99 = sphi 0, %s85
      %s107 = sphi 0, %s109
      %s110 = sphi 0, %s107
      %s111 = sphi 0, %s110
      %s127 = sphi 0, %s111
      %s133 = sphi 0, %s135
      %s136 = sphi 0, %s133
      %s137 = sphi 0, %s136
      %s153 = sphi 0, %s137
      %s159 = sphi 0, %s161
      %s162 = sphi 0, %s159
      %s163 = sphi 0, %s162
      %s179 = sphi 0, %s163
      %s185 = sphi 0, %s187
      %s188 = sphi 0, %s185
      %s189 = sphi 0, %s188
      %s205 = sphi 0, %s189
    $region4: #{critic_forward.1} parent=1 // loop_header_branch
      %23 = sbr.rel (%p21) target = $region8
    $region5: #{critic_forward.1} parent=1 // loop_body
      %s25 = ssub.s32 %s20, 1
      %s26 = ssub.s32 %s20, 2
      %s33 = sadd.s32 1, %s28
      %p34 = scmp.ge.s32.totalorder %s33, 2
      %s35 = scalar_select %p34, 0, %s33
      %s36 = sadd.s32 1, %s27
      %s37 = scalar_select %p34, %s36, %s27
      %p38 = scmp.ge.s32.totalorder %s37, 2
      %s39 = scalar_select %p38, 0, %s37
      %s41 = sadd.s32 %s40, 1
      %p44 = scmp.eq.s32.totalorder %s20, 3
      %p45 = scmp.ne.s32.totalorder %s40, %s42
      %p46 = scmp.eq.s32.totalorder %s20, 0
      %p47 = por %p45, %p46
      %p48 = scmp.ne.s32.totalorder %s40, %s42
      %p49 = scmp.eq.s32.totalorder %s25, 3
      %p50 = por %p48, %p49
      %p51 = scmp.ne.s32.totalorder %s42, %s43
      %p52 = scmp.eq.s32.totalorder %s25, 0
      %p53 = por %p51, %p52
      %p54 = scmp.ne.s32.totalorder %s42, %s43
      %p55 = scmp.eq.s32.totalorder %s26, 3
      %p56 = por %p54, %p55
      %p58 = scmp.ne.s32.totalorder %s43, %s57
      %p59 = scmp.eq.s32.totalorder %s26, 0
      %p60 = por %p58, %p59
      %s62 = sadd.s32 %s61, 1
      %p65 = scmp.eq.s32.totalorder %s20, 3
      %p66 = scmp.ne.s32.totalorder %s61, %s63
      %p67 = scmp.eq.s32.totalorder %s20, 0
      %p68 = por %p66, %p67
      %p69 = scmp.ne.s32.totalorder %s61, %s63
      %p70 = scmp.eq.s32.totalorder %s25, 3
      %p71 = por %p69, %p70
      %p72 = scmp.ne.s32.totalorder %s63, %s64
      %p73 = scmp.eq.s32.totalorder %s25, 0
      %p74 = por %p72, %p73
      %p75 = scmp.ne.s32.totalorder %s63, %s64
      %p76 = scmp.eq.s32.totalorder %s26, 3
      %p77 = por %p75, %p76
      %p79 = scmp.ne.s32.totalorder %s64, %s78
      %p80 = scmp.eq.s32.totalorder %s26, 0
      %p81 = por %p79, %p80
      %s83 = sadd.s32 %s82, 1
      %p86 = scmp.eq.s32.totalorder %s20, 3
      %p87 = scmp.ne.s32.totalorder %s82, %s84
      %p88 = scmp.eq.s32.totalorder %s20, 0
      %p89 = por %p87, %p88
      %p90 = scmp.ne.s32.totalorder %s82, %s84
      %p91 = scmp.eq.s32.totalorder %s25, 3
      %p92 = por %p90, %p91
      %p93 = scmp.ne.s32.totalorder %s84, %s85
      %p94 = scmp.eq.s32.totalorder %s25, 0
      %p95 = por %p93, %p94
      %p96 = scmp.ne.s32.totalorder %s84, %s85
      %p97 = scmp.eq.s32.totalorder %s26, 3
      %p98 = por %p96, %p97
      %p100 = scmp.ne.s32.totalorder %s85, %s99
      %p101 = scmp.eq.s32.totalorder %s26, 0
      %p102 = por %p100, %p101
      %s103 = ssub.s32 %s28, %s35
      %s104 = ssub.s32 %s27, %s39
      %s105 = sor.u32 %s103, %s104
      %p106 = scmp.eq.s32.totalorder %s105, 0
      %s108 = sadd.s32 %s107, 1
      %s109 = scalar_select %p106, %s107, %s108
      %p112 = pneg %p106
      %p113 = scmp.eq.s32.totalorder %s20, 3
      %p114 = por %p112, %p113
      %p115 = scmp.ne.s32.totalorder %s107, %s110
      %p116 = scmp.eq.s32.totalorder %s20, 0
      %p117 = por %p115, %p116
      %p118 = scmp.ne.s32.totalorder %s107, %s110
      %p119 = scmp.eq.s32.totalorder %s25, 3
      %p120 = por %p118, %p119
      %p121 = scmp.ne.s32.totalorder %s110, %s111
      %p122 = scmp.eq.s32.totalorder %s25, 0
      %p123 = por %p121, %p122
      %p124 = scmp.ne.s32.totalorder %s110, %s111
      %p125 = scmp.eq.s32.totalorder %s26, 3
      %p126 = por %p124, %p125
      %p128 = scmp.ne.s32.totalorder %s111, %s127
      %p129 = scmp.eq.s32.totalorder %s26, 0
      %p130 = por %p128, %p129
      %s131 = ssub.s32 %s27, %s39
      %p132 = scmp.eq.s32.totalorder %s131, 0
      %s134 = sadd.s32 %s133, 1
      %s135 = scalar_select %p132, %s133, %s134
      %p138 = pneg %p132
      %p139 = scmp.eq.s32.totalorder %s20, 3
      %p140 = por %p138, %p139
      %p141 = scmp.ne.s32.totalorder %s133, %s136
      %p142 = scmp.eq.s32.totalorder %s20, 0
      %p143 = por %p141, %p142
      %p144 = scmp.ne.s32.totalorder %s133, %s136
      %p145 = scmp.eq.s32.totalorder %s25, 3
      %p146 = por %p144, %p145
      %p147 = scmp.ne.s32.totalorder %s136, %s137
      %p148 = scmp.eq.s32.totalorder %s25, 0
      %p149 = por %p147, %p148
      %p150 = scmp.ne.s32.totalorder %s136, %s137
      %p151 = scmp.eq.s32.totalorder %s26, 3
      %p152 = por %p150, %p151
      %p154 = scmp.ne.s32.totalorder %s137, %s153
      %p155 = scmp.eq.s32.totalorder %s26, 0
      %p156 = por %p154, %p155
      %s157 = ssub.s32 %s27, %s39
      %p158 = scmp.eq.s32.totalorder %s157, 0
      %s160 = sadd.s32 %s159, 1
      %s161 = scalar_select %p158, %s159, %s160
      %p164 = pneg %p158
      %p165 = scmp.eq.s32.totalorder %s20, 3
      %p166 = por %p164, %p165
      %p167 = scmp.ne.s32.totalorder %s159, %s162
      %p168 = scmp.eq.s32.totalorder %s20, 0
      %p169 = por %p167, %p168
      %p170 = scmp.ne.s32.totalorder %s159, %s162
      %p171 = scmp.eq.s32.totalorder %s25, 3
      %p172 = por %p170, %p171
      %p173 = scmp.ne.s32.totalorder %s162, %s163
      %p174 = scmp.eq.s32.totalorder %s25, 0
      %p175 = por %p173, %p174
      %p176 = scmp.ne.s32.totalorder %s162, %s163
      %p177 = scmp.eq.s32.totalorder %s26, 3
      %p178 = por %p176, %p177
      %p180 = scmp.ne.s32.totalorder %s163, %s179
      %p181 = scmp.eq.s32.totalorder %s26, 0
      %p182 = por %p180, %p181
      %s183 = ssub.s32 %s27, %s39
      %p184 = scmp.eq.s32.totalorder %s183, 0
      %s186 = sadd.s32 %s185, 1
      %s187 = scalar_select %p184, %s185, %s186
      %p190 = pneg %p184
      %p191 = scmp.eq.s32.totalorder %s20, 3
      %p192 = por %p190, %p191
      %p193 = scmp.ne.s32.totalorder %s185, %s188
      %p194 = scmp.eq.s32.totalorder %s20, 0
      %p195 = por %p193, %p194
      %p196 = scmp.ne.s32.totalorder %s185, %s188
      %p197 = scmp.eq.s32.totalorder %s25, 3
      %p198 = por %p196, %p197
      %p199 = scmp.ne.s32.totalorder %s188, %s189
      %p200 = scmp.eq.s32.totalorder %s25, 0
      %p201 = por %p199, %p200
      %p202 = scmp.ne.s32.totalorder %s188, %s189
      %p203 = scmp.eq.s32.totalorder %s26, 3
      %p204 = por %p202, %p203
      %p206 = scmp.ne.s32.totalorder %s189, %s205
      %p207 = scmp.eq.s32.totalorder %s26, 0
      %p208 = por %p206, %p207
      %p209 = scmp.le.s32.totalorder 1, %s20
      %p210 = scmp.lt.s32.totalorder %s20, 5
      %p211 = pnand %p209, %p210
      %p212 = pneg %p211
      // Predicated region
      $region9: #{critic_forward.1} parent=5 // pred_check
        _
      $region10: #{critic_forward.1} parent=5 // pred_check_branch
        %214 = sbr.rel (%p211) target = $region12
      $region11: #{critic_forward.1} parent=5 // pred_region
        %s215 = ssub.s32 %s20, 1
        // Predicated region
        $region13: #{critic_forward.1} parent=11 // pred_check
          %p216 = pneg %p53
        $region14: #{critic_forward.1} parent=11 // pred_check_branch
          %218 = sbr.rel (%p216) target = $region16
        $region15: #{critic_forward.1} parent=11 // pred_region
          %220 = vsyncadd [#allocation4], 0
          %s222 = sshll.u32 %s0, 4
          %s223 = int_to_ptr.hbm [resolvable:$true] %s222
          %s224 = sshll.u32 [#allocation3], 4
          %s225 = int_to_ptr.vmem [resolvable:$true] %s224
          %227 = dma.hbm_to_vmem [thread:$0]  %s223, 256, %s225, [#allocation4]
        $region16: #{critic_forward.1} parent=11 // pred_fallthru
          _
        // Predicated region
        $region17: #{critic_forward.1} parent=11 // pred_check
          %p228 = pneg %p74
        $region18: #{critic_forward.1} parent=11 // pred_check_branch
          %230 = sbr.rel (%p228) target = $region20
        $region19: #{critic_forward.1} parent=11 // pred_region
          %232 = vsyncadd [#allocation6], 0
          %s233 = sshll.u32 %s1, 4
          %s234 = int_to_ptr.hbm [resolvable:$true] %s233
          %s235 = sshll.u32 [#allocation5], 4
          %s236 = int_to_ptr.vmem [resolvable:$true] %s235
          %241 = dma.hbm_to_vmem [thread:$0]  %s234, 65536, %s236, [#allocation6], 2048, 2048, 128
        $region20: #{critic_forward.1} parent=11 // pred_fallthru
          _
        // Predicated region
        $region21: #{critic_forward.1} parent=11 // pred_check
          %p242 = pneg %p95
        $region22: #{critic_forward.1} parent=11 // pred_check_branch
          %244 = sbr.rel (%p242) target = $region24
        $region23: #{critic_forward.1} parent=11 // pred_region
          %246 = vsyncadd [#allocation6], 0
          %s248 = sshll.u32 %s2, 4
          %s249 = int_to_ptr.hbm [resolvable:$true] %s248
          %s250 = sshll.u32 [#allocation7], 4
          %s251 = int_to_ptr.vmem [resolvable:$true] %s250
          %253 = dma.hbm_to_vmem [thread:$0]  %s249, 256, %s251, [#allocation6]
        $region24: #{critic_forward.1} parent=11 // pred_fallthru
          _
      $region12: #{critic_forward.1} parent=5 // pred_fallthru
        _
      %p254 = scmp.lt.s32.totalorder %s20, 4
      // Predicated region
      $region25: #{critic_forward.1} parent=5 // pred_check
        %p255 = pneg %p254
      $region26: #{critic_forward.1} parent=5 // pred_check_branch
        %257 = sbr.rel (%p255) target = $region28
      $region27: #{critic_forward.1} parent=5 // pred_region
        // Predicated region
        $region29: #{critic_forward.1} parent=27 // pred_check
          %p258 = pneg %p117
        $region30: #{critic_forward.1} parent=27 // pred_check_branch
          %260 = sbr.rel (%p258) target = $region32
        $region31: #{critic_forward.1} parent=27 // pred_region
          %s261 = sand.u32 %s20, 1
          %s262 = scalar_lea.sflag [#allocation9], %s261
          %s263 = sand.u32 %s107, 1
          %s264 = smul.addr %s263, 8192
          %s265 = scalar_lea.vmem [#allocation8], %s264
          %s266 = smul.u32 128, %s28
          %s267 = smul.u32 8, %s27
          %269 = vsyncadd %s262, 0
          %s270 = smul.addr %s266, 16
          %s271 = sadd.s32 %s267, %s270
          %s272 = smul.addr %s271, 8
          %s273 = scalar_lea.hbm %s3, %s272
          %s274 = sshll.u32 %s273, 4
          %s275 = int_to_ptr.hbm [resolvable:$true] %s274
          %s276 = sshll.u32 %s265, 4
          %s277 = int_to_ptr.vmem [resolvable:$true] %s276
          %282 = dma.hbm_to_vmem [thread:$0]  %s275, 131072, %s277, %s262, 2048, 1024, 64
        $region32: #{critic_forward.1} parent=27 // pred_fallthru
          _
        // Predicated region
        $region33: #{critic_forward.1} parent=27 // pred_check
          %p283 = pneg %p143
        $region34: #{critic_forward.1} parent=27 // pred_check_branch
          %285 = sbr.rel (%p283) target = $region36
        $region35: #{critic_forward.1} parent=27 // pred_region
          %s286 = sand.u32 %s20, 1
          %s287 = scalar_lea.sflag [#allocation9], %s286
          %s288 = sand.u32 %s133, 1
          %s289 = smul.addr %s288, 8
          %s290 = scalar_lea.vmem [#allocation10], %s289
          %s291 = smul.u32 8, %s27
          %293 = vsyncadd %s287, 0
          %s294 = scalar_lea.hbm %s4, %s291
          %s296 = sshll.u32 %s294, 4
          %s297 = int_to_ptr.hbm [resolvable:$true] %s296
          %s298 = sshll.u32 %s290, 4
          %s299 = int_to_ptr.vmem [resolvable:$true] %s298
          %301 = dma.hbm_to_vmem [thread:$0]  %s297, 128, %s299, %s287
        $region36: #{critic_forward.1} parent=27 // pred_fallthru
          _
        // Predicated region
        $region37: #{critic_forward.1} parent=27 // pred_check
          %p302 = pneg %p169
        $region38: #{critic_forward.1} parent=27 // pred_check_branch
          %304 = sbr.rel (%p302) target = $region40
        $region39: #{critic_forward.1} parent=27 // pred_region
          %s305 = sand.u32 %s159, 1
          %s306 = scalar_lea.sflag [#allocation12], %s305
          %s307 = sand.u32 %s159, 1
          %s308 = smul.addr %s307, 8
          %s309 = scalar_lea.vmem [#allocation11], %s308
          %s310 = smul.u32 8, %s27
          %312 = vsyncadd %s306, 0
          %s313 = scalar_lea.hbm %s5, %s310
          %s315 = sshll.u32 %s313, 4
          %s316 = int_to_ptr.hbm [resolvable:$true] %s315
          %s317 = sshll.u32 %s309, 4
          %s318 = int_to_ptr.vmem [resolvable:$true] %s317
          %320 = dma.hbm_to_vmem [thread:$0]  %s316, 128, %s318, %s306
        $region40: #{critic_forward.1} parent=27 // pred_fallthru
          _
      $region28: #{critic_forward.1} parent=5 // pred_fallthru
        _
      %p321 = scmp.le.s32.totalorder 1, %s20
      %p322 = scmp.lt.s32.totalorder %s20, 5
      %p323 = pnand %p321, %p322
      %p324 = pneg %p323
      // Predicated region
      $region41: #{critic_forward.1} parent=5 // pred_check
        _
      $region42: #{critic_forward.1} parent=5 // pred_check_branch
        %326 = sbr.rel (%p323) target = $region44
      $region43: #{critic_forward.1} parent=5 // pred_region
        %s327 = ssub.s32 %s20, 1
        // Predicated region
        $region45: #{critic_forward.1} parent=43 // pred_check
          %p328 = pneg %p53
        $region46: #{critic_forward.1} parent=43 // pred_check_branch
          %330 = sbr.rel (%p328) target = $region48
        $region47: #{critic_forward.1} parent=43 // pred_region
          %332 = dma.done [#allocation4], 256
        $region48: #{critic_forward.1} parent=43 // pred_fallthru
          _
        // Predicated region
        $region49: #{critic_forward.1} parent=43 // pred_check
          %p333 = pneg %p74
        $region50: #{critic_forward.1} parent=43 // pred_check_branch
          %335 = sbr.rel (%p333) target = $region52
        $region51: #{critic_forward.1} parent=43 // pred_region
          %337 = dma.done [#allocation6], 65536
        $region52: #{critic_forward.1} parent=43 // pred_fallthru
          _
        // Predicated region
        $region53: #{critic_forward.1} parent=43 // pred_check
          %p338 = pneg %p95
        $region54: #{critic_forward.1} parent=43 // pred_check_branch
          %340 = sbr.rel (%p338) target = $region56
        $region55: #{critic_forward.1} parent=43 // pred_region
          %342 = dma.done [#allocation6], 256
        $region56: #{critic_forward.1} parent=43 // pred_fallthru
          _
        %s343 = sand.u32 %s25, 1
        %s344 = scalar_lea.sflag [#allocation9], %s343
        %s345 = sand.u32 %s110, 1
        %s346 = smul.addr %s345, 8192
        %s347 = scalar_lea.vmem [#allocation8], %s346
        // Predicated region
        $region57: #{critic_forward.1} parent=43 // pred_check
          %p348 = pneg %p123
        $region58: #{critic_forward.1} parent=43 // pred_check_branch
          %350 = sbr.rel (%p348) target = $region60
        $region59: #{critic_forward.1} parent=43 // pred_region
          %352 = dma.done %s344, 131072
        $region60: #{critic_forward.1} parent=43 // pred_fallthru
          _
        %s353 = sand.u32 %s25, 1
        %s354 = scalar_lea.sflag [#allocation9], %s353
        %s355 = sand.u32 %s136, 1
        %s356 = smul.addr %s355, 8
        %s357 = scalar_lea.vmem [#allocation10], %s356
        // Predicated region
        $region61: #{critic_forward.1} parent=43 // pred_check
          %p358 = pneg %p149
        $region62: #{critic_forward.1} parent=43 // pred_check_branch
          %360 = sbr.rel (%p358) target = $region64
        $region63: #{critic_forward.1} parent=43 // pred_region
          %362 = dma.done %s354, 128
        $region64: #{critic_forward.1} parent=43 // pred_fallthru
          _
        %s363 = sand.u32 %s162, 1
        %s364 = scalar_lea.sflag [#allocation12], %s363
        %s365 = sand.u32 %s162, 1
        %s366 = smul.addr %s365, 8
        %s367 = scalar_lea.vmem [#allocation11], %s366
        // Predicated region
        $region65: #{critic_forward.1} parent=43 // pred_check
          %p368 = pneg %p175
        $region66: #{critic_forward.1} parent=43 // pred_check_branch
          %370 = sbr.rel (%p368) target = $region68
        $region67: #{critic_forward.1} parent=43 // pred_region
          %372 = dma.done %s364, 128
        $region68: #{critic_forward.1} parent=43 // pred_fallthru
          _
        %p373 = pneg %p53
        %p374 = pneg %p50
        %p375 = pneg %p74
        %p376 = pneg %p71
        %p377 = pneg %p95
        %p378 = pneg %p92
        %s379 = sand.u32 %s25, 1
        %s380 = scalar_lea.sflag [#allocation9], %s379
        %s381 = sand.u32 %s110, 1
        %s382 = smul.addr %s381, 8192
        %s383 = scalar_lea.vmem [#allocation8], %s382
        %p384 = pneg %p123
        %p385 = pneg %p120
        %s386 = sand.u32 %s25, 1
        %s387 = scalar_lea.sflag [#allocation9], %s386
        %s388 = sand.u32 %s136, 1
        %s389 = smul.addr %s388, 8
        %s390 = scalar_lea.vmem [#allocation10], %s389
        %p391 = pneg %p149
        %p392 = pneg %p146
        %s393 = sand.u32 %s162, 1
        %s394 = scalar_lea.sflag [#allocation12], %s393
        %s395 = sand.u32 %s162, 1
        %s396 = smul.addr %s395, 8
        %s397 = scalar_lea.vmem [#allocation11], %s396
        %p398 = pneg %p175
        %p399 = pneg %p172
        %p400 = pneg %p201
        %p401 = pneg %p198
        %p402 = scmp.lt.s32.totalorder %s29, 1
        %s403 = scalar_select %p402, %s29, 1
        %s404 = smul.addr %s403, 8
        %s405 = scalar_lea.vmem %s6, %s404
        %s406 = smul.u32 128, %s30
        %s407 = smul.u32 8, %s29
        %s408 = smul.u32 8, %s29
        %s409 = smul.u32 8, %s29
        %p410 = scmp.lt.s32.totalorder %s29, 1
        %s411 = scalar_select %p410, %s29, 1
        %s412 = smul.addr %s411, 8
        %s413 = scalar_lea.vmem %s6, %s412
        %p414 = scmp.eq.s32.totalorder %s30, 0
        // Predicated region
        $region69: #{critic_forward.1} parent=43 // pred_check
          %p415 = pneg %p414
        $region70: #{critic_forward.1} parent=43 // pred_check_branch
          %417 = sbr.rel (%p415) target = $region72
        $region71: #{critic_forward.1} parent=43 // pred_region
          %418 = vst [vmem:[#allocation2] sm:$0xff] 0.0
          %419 = vst [vmem:[#allocation2 + $0x8] sm:$0xff] 0.0
          %420 = vst [vmem:[#allocation2 + $0x10] sm:$0xff] 0.0
          %421 = vst [vmem:[#allocation2 + $0x18] sm:$0xff] 0.0
          %422 = vst [vmem:[#allocation2 + $0x20] sm:$0xff] 0.0
          %423 = vst [vmem:[#allocation2 + $0x28] sm:$0xff] 0.0
          %424 = vst [vmem:[#allocation2 + $0x30] sm:$0xff] 0.0
          %425 = vst [vmem:[#allocation2 + $0x38] sm:$0xff] 0.0
        $region72: #{critic_forward.1} parent=43 // pred_fallthru
          _
        %s426 = smul.u32 %s30, 1024
        %s427 = sshra.s32 %s426, 7
        %s428 = sand.u32 %s426, 127
        %s429 = smul.addr %s427, 8
        %s430 = scalar_lea.vmem [#allocation5], %s429
        %v431 = vld [vmem:[%s430] sm:$0xff]
        %v432 = vld [vmem:[%s430 + $0x8] sm:$0xff]
        %v433 = vld [vmem:[%s430 + $0x10] sm:$0xff]
        %v434 = vld [vmem:[%s430 + $0x18] sm:$0xff]
        %v435 = vld [vmem:[%s430 + $0x20] sm:$0xff]
        %v436 = vld [vmem:[%s430 + $0x28] sm:$0xff]
        %v437 = vld [vmem:[%s430 + $0x30] sm:$0xff]
        %v438 = vld [vmem:[%s430 + $0x38] sm:$0xff]
        %v439 = vld [vmem:[%s430 + $0x80] sm:$0xff]
        %v440 = vld [vmem:[%s430 + $0x88] sm:$0xff]
        %v441 = vld [vmem:[%s430 + $0x90] sm:$0xff]
        %v442 = vld [vmem:[%s430 + $0x98] sm:$0xff]
        %v443 = vld [vmem:[%s430 + $0xa0] sm:$0xff]
        %v444 = vld [vmem:[%s430 + $0xa8] sm:$0xff]
        %v445 = vld [vmem:[%s430 + $0xb0] sm:$0xff]
        %v446 = vld [vmem:[%s430 + $0xb8] sm:$0xff]
        %v447 = vld [vmem:[%s430 + $0x100] sm:$0xff]
        %v448 = vld [vmem:[%s430 + $0x108] sm:$0xff]
        %v449 = vld [vmem:[%s430 + $0x110] sm:$0xff]
        %v450 = vld [vmem:[%s430 + $0x118] sm:$0xff]
        %v451 = vld [vmem:[%s430 + $0x120] sm:$0xff]
        %v452 = vld [vmem:[%s430 + $0x128] sm:$0xff]
        %v453 = vld [vmem:[%s430 + $0x130] sm:$0xff]
        %v454 = vld [vmem:[%s430 + $0x138] sm:$0xff]
        %v455 = vld [vmem:[%s430 + $0x180] sm:$0xff]
        %v456 = vld [vmem:[%s430 + $0x188] sm:$0xff]
        %v457 = vld [vmem:[%s430 + $0x190] sm:$0xff]
        %v458 = vld [vmem:[%s430 + $0x198] sm:$0xff]
        %v459 = vld [vmem:[%s430 + $0x1a0] sm:$0xff]
        %v460 = vld [vmem:[%s430 + $0x1a8] sm:$0xff]
        %v461 = vld [vmem:[%s430 + $0x1b0] sm:$0xff]
        %v462 = vld [vmem:[%s430 + $0x1b8] sm:$0xff]
        %v463 = vld [vmem:[%s430 + $0x200] sm:$0xff]
        %v464 = vld [vmem:[%s430 + $0x208] sm:$0xff]
        %v465 = vld [vmem:[%s430 + $0x210] sm:$0xff]
        %v466 = vld [vmem:[%s430 + $0x218] sm:$0xff]
        %v467 = vld [vmem:[%s430 + $0x220] sm:$0xff]
        %v468 = vld [vmem:[%s430 + $0x228] sm:$0xff]
        %v469 = vld [vmem:[%s430 + $0x230] sm:$0xff]
        %v470 = vld [vmem:[%s430 + $0x238] sm:$0xff]
        %v471 = vld [vmem:[%s430 + $0x280] sm:$0xff]
        %v472 = vld [vmem:[%s430 + $0x288] sm:$0xff]
        %v473 = vld [vmem:[%s430 + $0x290] sm:$0xff]
        %v474 = vld [vmem:[%s430 + $0x298] sm:$0xff]
        %v475 = vld [vmem:[%s430 + $0x2a0] sm:$0xff]
        %v476 = vld [vmem:[%s430 + $0x2a8] sm:$0xff]
        %v477 = vld [vmem:[%s430 + $0x2b0] sm:$0xff]
        %v478 = vld [vmem:[%s430 + $0x2b8] sm:$0xff]
        %v479 = vld [vmem:[%s430 + $0x300] sm:$0xff]
        %v480 = vld [vmem:[%s430 + $0x308] sm:$0xff]
        %v481 = vld [vmem:[%s430 + $0x310] sm:$0xff]
        %v482 = vld [vmem:[%s430 + $0x318] sm:$0xff]
        %v483 = vld [vmem:[%s430 + $0x320] sm:$0xff]
        %v484 = vld [vmem:[%s430 + $0x328] sm:$0xff]
        %v485 = vld [vmem:[%s430 + $0x330] sm:$0xff]
        %v486 = vld [vmem:[%s430 + $0x338] sm:$0xff]
        %v487 = vld [vmem:[%s430 + $0x380] sm:$0xff]
        %v488 = vld [vmem:[%s430 + $0x388] sm:$0xff]
        %v489 = vld [vmem:[%s430 + $0x390] sm:$0xff]
        %v490 = vld [vmem:[%s430 + $0x398] sm:$0xff]
        %v491 = vld [vmem:[%s430 + $0x3a0] sm:$0xff]
        %v492 = vld [vmem:[%s430 + $0x3a8] sm:$0xff]
        %v493 = vld [vmem:[%s430 + $0x3b0] sm:$0xff]
        %v494 = vld [vmem:[%s430 + $0x3b8] sm:$0xff]
        %v495 = vld [vmem:[%s430 + $0x400] sm:$0xff]
        %v496 = vld [vmem:[%s430 + $0x408] sm:$0xff]
        %v497 = vld [vmem:[%s430 + $0x410] sm:$0xff]
        %v498 = vld [vmem:[%s430 + $0x418] sm:$0xff]
        %v499 = vld [vmem:[%s430 + $0x420] sm:$0xff]
        %v500 = vld [vmem:[%s430 + $0x428] sm:$0xff]
        %v501 = vld [vmem:[%s430 + $0x430] sm:$0xff]
        %v502 = vld [vmem:[%s430 + $0x438] sm:$0xff]
        %v503 = vld [vmem:[%s430 + $0x480] sm:$0xff]
        %v504 = vld [vmem:[%s430 + $0x488] sm:$0xff]
        %v505 = vld [vmem:[%s430 + $0x490] sm:$0xff]
        %v506 = vld [vmem:[%s430 + $0x498] sm:$0xff]
        %v507 = vld [vmem:[%s430 + $0x4a0] sm:$0xff]
        %v508 = vld [vmem:[%s430 + $0x4a8] sm:$0xff]
        %v509 = vld [vmem:[%s430 + $0x4b0] sm:$0xff]
        %v510 = vld [vmem:[%s430 + $0x4b8] sm:$0xff]
        %v511 = vld [vmem:[%s430 + $0x500] sm:$0xff]
        %v512 = vld [vmem:[%s430 + $0x508] sm:$0xff]
        %v513 = vld [vmem:[%s430 + $0x510] sm:$0xff]
        %v514 = vld [vmem:[%s430 + $0x518] sm:$0xff]
        %v515 = vld [vmem:[%s430 + $0x520] sm:$0xff]
        %v516 = vld [vmem:[%s430 + $0x528] sm:$0xff]
        %v517 = vld [vmem:[%s430 + $0x530] sm:$0xff]
        %v518 = vld [vmem:[%s430 + $0x538] sm:$0xff]
        %v519 = vld [vmem:[%s430 + $0x580] sm:$0xff]
        %v520 = vld [vmem:[%s430 + $0x588] sm:$0xff]
        %v521 = vld [vmem:[%s430 + $0x590] sm:$0xff]
        %v522 = vld [vmem:[%s430 + $0x598] sm:$0xff]
        %v523 = vld [vmem:[%s430 + $0x5a0] sm:$0xff]
        %v524 = vld [vmem:[%s430 + $0x5a8] sm:$0xff]
        %v525 = vld [vmem:[%s430 + $0x5b0] sm:$0xff]
        %v526 = vld [vmem:[%s430 + $0x5b8] sm:$0xff]
        %v527 = vld [vmem:[%s430 + $0x600] sm:$0xff]
        %v528 = vld [vmem:[%s430 + $0x608] sm:$0xff]
        %v529 = vld [vmem:[%s430 + $0x610] sm:$0xff]
        %v530 = vld [vmem:[%s430 + $0x618] sm:$0xff]
        %v531 = vld [vmem:[%s430 + $0x620] sm:$0xff]
        %v532 = vld [vmem:[%s430 + $0x628] sm:$0xff]
        %v533 = vld [vmem:[%s430 + $0x630] sm:$0xff]
        %v534 = vld [vmem:[%s430 + $0x638] sm:$0xff]
        %v535 = vld [vmem:[%s430 + $0x680] sm:$0xff]
        %v536 = vld [vmem:[%s430 + $0x688] sm:$0xff]
        %v537 = vld [vmem:[%s430 + $0x690] sm:$0xff]
        %v538 = vld [vmem:[%s430 + $0x698] sm:$0xff]
        %v539 = vld [vmem:[%s430 + $0x6a0] sm:$0xff]
        %v540 = vld [vmem:[%s430 + $0x6a8] sm:$0xff]
        %v541 = vld [vmem:[%s430 + $0x6b0] sm:$0xff]
        %v542 = vld [vmem:[%s430 + $0x6b8] sm:$0xff]
        %v543 = vld [vmem:[%s430 + $0x700] sm:$0xff]
        %v544 = vld [vmem:[%s430 + $0x708] sm:$0xff]
        %v545 = vld [vmem:[%s430 + $0x710] sm:$0xff]
        %v546 = vld [vmem:[%s430 + $0x718] sm:$0xff]
        %v547 = vld [vmem:[%s430 + $0x720] sm:$0xff]
        %v548 = vld [vmem:[%s430 + $0x728] sm:$0xff]
        %v549 = vld [vmem:[%s430 + $0x730] sm:$0xff]
        %v550 = vld [vmem:[%s430 + $0x738] sm:$0xff]
        %v551 = vld [vmem:[%s430 + $0x780] sm:$0xff]
        %v552 = vld [vmem:[%s430 + $0x788] sm:$0xff]
        %v553 = vld [vmem:[%s430 + $0x790] sm:$0xff]
        %v554 = vld [vmem:[%s430 + $0x798] sm:$0xff]
        %v555 = vld [vmem:[%s430 + $0x7a0] sm:$0xff]
        %v556 = vld [vmem:[%s430 + $0x7a8] sm:$0xff]
        %v557 = vld [vmem:[%s430 + $0x7b0] sm:$0xff]
        %v558 = vld [vmem:[%s430 + $0x7b8] sm:$0xff]
        %v559 = vld [vmem:[%s430 + $0x800] sm:$0xff]
        %v560 = vld [vmem:[%s430 + $0x808] sm:$0xff]
        %v561 = vld [vmem:[%s430 + $0x810] sm:$0xff]
        %v562 = vld [vmem:[%s430 + $0x818] sm:$0xff]
        %v563 = vld [vmem:[%s430 + $0x820] sm:$0xff]
        %v564 = vld [vmem:[%s430 + $0x828] sm:$0xff]
        %v565 = vld [vmem:[%s430 + $0x830] sm:$0xff]
        %v566 = vld [vmem:[%s430 + $0x838] sm:$0xff]
        %v567 = vld [vmem:[%s430 + $0x880] sm:$0xff]
        %v568 = vld [vmem:[%s430 + $0x888] sm:$0xff]
        %v569 = vld [vmem:[%s430 + $0x890] sm:$0xff]
        %v570 = vld [vmem:[%s430 + $0x898] sm:$0xff]
        %v571 = vld [vmem:[%s430 + $0x8a0] sm:$0xff]
        %v572 = vld [vmem:[%s430 + $0x8a8] sm:$0xff]
        %v573 = vld [vmem:[%s430 + $0x8b0] sm:$0xff]
        %v574 = vld [vmem:[%s430 + $0x8b8] sm:$0xff]
        %v575 = vld [vmem:[%s430 + $0x900] sm:$0xff]
        %v576 = vld [vmem:[%s430 + $0x908] sm:$0xff]
        %v577 = vld [vmem:[%s430 + $0x910] sm:$0xff]
        %v578 = vld [vmem:[%s430 + $0x918] sm:$0xff]
        %v579 = vld [vmem:[%s430 + $0x920] sm:$0xff]
        %v580 = vld [vmem:[%s430 + $0x928] sm:$0xff]
        %v581 = vld [vmem:[%s430 + $0x930] sm:$0xff]
        %v582 = vld [vmem:[%s430 + $0x938] sm:$0xff]
        %v583 = vld [vmem:[%s430 + $0x980] sm:$0xff]
        %v584 = vld [vmem:[%s430 + $0x988] sm:$0xff]
        %v585 = vld [vmem:[%s430 + $0x990] sm:$0xff]
        %v586 = vld [vmem:[%s430 + $0x998] sm:$0xff]
        %v587 = vld [vmem:[%s430 + $0x9a0] sm:$0xff]
        %v588 = vld [vmem:[%s430 + $0x9a8] sm:$0xff]
        %v589 = vld [vmem:[%s430 + $0x9b0] sm:$0xff]
        %v590 = vld [vmem:[%s430 + $0x9b8] sm:$0xff]
        %v591 = vld [vmem:[%s430 + $0xa00] sm:$0xff]
        %v592 = vld [vmem:[%s430 + $0xa08] sm:$0xff]
        %v593 = vld [vmem:[%s430 + $0xa10] sm:$0xff]
        %v594 = vld [vmem:[%s430 + $0xa18] sm:$0xff]
        %v595 = vld [vmem:[%s430 + $0xa20] sm:$0xff]
        %v596 = vld [vmem:[%s430 + $0xa28] sm:$0xff]
        %v597 = vld [vmem:[%s430 + $0xa30] sm:$0xff]
        %v598 = vld [vmem:[%s430 + $0xa38] sm:$0xff]
        %v599 = vld [vmem:[%s430 + $0xa80] sm:$0xff]
        %v600 = vld [vmem:[%s430 + $0xa88] sm:$0xff]
        %v601 = vld [vmem:[%s430 + $0xa90] sm:$0xff]
        %v602 = vld [vmem:[%s430 + $0xa98] sm:$0xff]
        %v603 = vld [vmem:[%s430 + $0xaa0] sm:$0xff]
        %v604 = vld [vmem:[%s430 + $0xaa8] sm:$0xff]
        %v605 = vld [vmem:[%s430 + $0xab0] sm:$0xff]
        %v606 = vld [vmem:[%s430 + $0xab8] sm:$0xff]
        %v607 = vld [vmem:[%s430 + $0xb00] sm:$0xff]
        %v608 = vld [vmem:[%s430 + $0xb08] sm:$0xff]
        %v609 = vld [vmem:[%s430 + $0xb10] sm:$0xff]
        %v610 = vld [vmem:[%s430 + $0xb18] sm:$0xff]
        %v611 = vld [vmem:[%s430 + $0xb20] sm:$0xff]
        %v612 = vld [vmem:[%s430 + $0xb28] sm:$0xff]
        %v613 = vld [vmem:[%s430 + $0xb30] sm:$0xff]
        %v614 = vld [vmem:[%s430 + $0xb38] sm:$0xff]
        %v615 = vld [vmem:[%s430 + $0xb80] sm:$0xff]
        %v616 = vld [vmem:[%s430 + $0xb88] sm:$0xff]
        %v617 = vld [vmem:[%s430 + $0xb90] sm:$0xff]
        %v618 = vld [vmem:[%s430 + $0xb98] sm:$0xff]
        %v619 = vld [vmem:[%s430 + $0xba0] sm:$0xff]
        %v620 = vld [vmem:[%s430 + $0xba8] sm:$0xff]
        %v621 = vld [vmem:[%s430 + $0xbb0] sm:$0xff]
        %v622 = vld [vmem:[%s430 + $0xbb8] sm:$0xff]
        %v623 = vld [vmem:[%s430 + $0xc00] sm:$0xff]
        %v624 = vld [vmem:[%s430 + $0xc08] sm:$0xff]
        %v625 = vld [vmem:[%s430 + $0xc10] sm:$0xff]
        %v626 = vld [vmem:[%s430 + $0xc18] sm:$0xff]
        %v627 = vld [vmem:[%s430 + $0xc20] sm:$0xff]
        %v628 = vld [vmem:[%s430 + $0xc28] sm:$0xff]
        %v629 = vld [vmem:[%s430 + $0xc30] sm:$0xff]
        %v630 = vld [vmem:[%s430 + $0xc38] sm:$0xff]
        %v631 = vld [vmem:[%s430 + $0xc80] sm:$0xff]
        %v632 = vld [vmem:[%s430 + $0xc88] sm:$0xff]
        %v633 = vld [vmem:[%s430 + $0xc90] sm:$0xff]
        %v634 = vld [vmem:[%s430 + $0xc98] sm:$0xff]
        %v635 = vld [vmem:[%s430 + $0xca0] sm:$0xff]
        %v636 = vld [vmem:[%s430 + $0xca8] sm:$0xff]
        %v637 = vld [vmem:[%s430 + $0xcb0] sm:$0xff]
        %v638 = vld [vmem:[%s430 + $0xcb8] sm:$0xff]
        %v639 = vld [vmem:[%s430 + $0xd00] sm:$0xff]
        %v640 = vld [vmem:[%s430 + $0xd08] sm:$0xff]
        %v641 = vld [vmem:[%s430 + $0xd10] sm:$0xff]
        %v642 = vld [vmem:[%s430 + $0xd18] sm:$0xff]
        %v643 = vld [vmem:[%s430 + $0xd20] sm:$0xff]
        %v644 = vld [vmem:[%s430 + $0xd28] sm:$0xff]
        %v645 = vld [vmem:[%s430 + $0xd30] sm:$0xff]
        %v646 = vld [vmem:[%s430 + $0xd38] sm:$0xff]
        %v647 = vld [vmem:[%s430 + $0xd80] sm:$0xff]
        %v648 = vld [vmem:[%s430 + $0xd88] sm:$0xff]
        %v649 = vld [vmem:[%s430 + $0xd90] sm:$0xff]
        %v650 = vld [vmem:[%s430 + $0xd98] sm:$0xff]
        %v651 = vld [vmem:[%s430 + $0xda0] sm:$0xff]
        %v652 = vld [vmem:[%s430 + $0xda8] sm:$0xff]
        %v653 = vld [vmem:[%s430 + $0xdb0] sm:$0xff]
        %v654 = vld [vmem:[%s430 + $0xdb8] sm:$0xff]
        %v655 = vld [vmem:[%s430 + $0xe00] sm:$0xff]
        %v656 = vld [vmem:[%s430 + $0xe08] sm:$0xff]
        %v657 = vld [vmem:[%s430 + $0xe10] sm:$0xff]
        %v658 = vld [vmem:[%s430 + $0xe18] sm:$0xff]
        %v659 = vld [vmem:[%s430 + $0xe20] sm:$0xff]
        %v660 = vld [vmem:[%s430 + $0xe28] sm:$0xff]
        %v661 = vld [vmem:[%s430 + $0xe30] sm:$0xff]
        %v662 = vld [vmem:[%s430 + $0xe38] sm:$0xff]
        %v663 = vld [vmem:[%s430 + $0xe80] sm:$0xff]
        %v664 = vld [vmem:[%s430 + $0xe88] sm:$0xff]
        %v665 = vld [vmem:[%s430 + $0xe90] sm:$0xff]
        %v666 = vld [vmem:[%s430 + $0xe98] sm:$0xff]
        %v667 = vld [vmem:[%s430 + $0xea0] sm:$0xff]
        %v668 = vld [vmem:[%s430 + $0xea8] sm:$0xff]
        %v669 = vld [vmem:[%s430 + $0xeb0] sm:$0xff]
        %v670 = vld [vmem:[%s430 + $0xeb8] sm:$0xff]
        %v671 = vld [vmem:[%s430 + $0xf00] sm:$0xff]
        %v672 = vld [vmem:[%s430 + $0xf08] sm:$0xff]
        %v673 = vld [vmem:[%s430 + $0xf10] sm:$0xff]
        %v674 = vld [vmem:[%s430 + $0xf18] sm:$0xff]
        %v675 = vld [vmem:[%s430 + $0xf20] sm:$0xff]
        %v676 = vld [vmem:[%s430 + $0xf28] sm:$0xff]
        %v677 = vld [vmem:[%s430 + $0xf30] sm:$0xff]
        %v678 = vld [vmem:[%s430 + $0xf38] sm:$0xff]
        %v679 = vld [vmem:[%s430 + $0xf80] sm:$0xff]
        %v680 = vld [vmem:[%s430 + $0xf88] sm:$0xff]
        %v681 = vld [vmem:[%s430 + $0xf90] sm:$0xff]
        %v682 = vld [vmem:[%s430 + $0xf98] sm:$0xff]
        %v683 = vld [vmem:[%s430 + $0xfa0] sm:$0xff]
        %v684 = vld [vmem:[%s430 + $0xfa8] sm:$0xff]
        %v685 = vld [vmem:[%s430 + $0xfb0] sm:$0xff]
        %v686 = vld [vmem:[%s430 + $0xfb8] sm:$0xff]
        %s687 = scalar_lea.vmem [#allocation7], %s427
        %v688 = vld [vmem:[%s687] sm:$0xff]
        %v689 = vld [vmem:[#allocation3] sm:$0xff]
        %v690 = vld [vmem:[#allocation3 + $0x8] sm:$0xff]
        %v692 = vperm.slane %v688, 0
        %v693 = vperm.slane %v688, 1
        %v694 = vperm.slane %v688, 2
        %v695 = vperm.slane %v688, 3
        %v696 = vperm.slane %v688, 4
        %v697 = vperm.slane %v688, 5
        %v698 = vperm.slane %v688, 6
        %v699 = vperm.slane %v688, 7
        %708 = vmatpush.msra.mxu0 %v551
        %709 = vmatpush.msra.mxu0 %v543
        %710 = vmatpush.msra.mxu0 %v535
        %711 = vmatpush.msra.mxu0 %v527
        %712 = vmatpush.msra.mxu0 %v519
        %713 = vmatpush.msra.mxu0 %v511
        %714 = vmatpush.msra.mxu0 %v503
        %715 = vmatpush.msra.mxu0 %v495
        %716 = vmatpush.msra.mxu0 %v487
        %717 = vmatpush.msra.mxu0 %v479
        %718 = vmatpush.msra.mxu0 %v471
        %719 = vmatpush.msra.mxu0 %v463
        %720 = vmatpush.msra.mxu0 %v455
        %721 = vmatpush.msra.mxu0 %v447
        %722 = vmatpush.msra.mxu0 %v439
        %723 = vmatpush.msra.mxu0 %v431
        %724 = vmatmul.f32.gmra.mxu0 %v689
        %v725 = vpop.f32.mrf.mxu0
        %v726 = vadd.f32 %v692, %v725
        %727 = vdwg.mxu0
        %728 = vmatpush.msra.mxu0 %v679
        %729 = vmatpush.msra.mxu0 %v671
        %730 = vmatpush.msra.mxu0 %v663
        %731 = vmatpush.msra.mxu0 %v655
        %732 = vmatpush.msra.mxu0 %v647
        %733 = vmatpush.msra.mxu0 %v639
        %734 = vmatpush.msra.mxu0 %v631
        %735 = vmatpush.msra.mxu0 %v623
        %736 = vmatpush.msra.mxu0 %v615
        %737 = vmatpush.msra.mxu0 %v607
        %738 = vmatpush.msra.mxu0 %v599
        %739 = vmatpush.msra.mxu0 %v591
        %740 = vmatpush.msra.mxu0 %v583
        %741 = vmatpush.msra.mxu0 %v575
        %742 = vmatpush.msra.mxu0 %v567
        %743 = vmatpush.msra.mxu0 %v559
        %744 = vmatmul.f32.gmra.mxu0 %v690
        %v745 = vpop.f32.mrf.mxu0
        %v746 = vadd.f32 %v726, %v745
        %747 = vdwg.mxu0
        %748 = vmatpush.msra.mxu0 %v552
        %749 = vmatpush.msra.mxu0 %v544
        %750 = vmatpush.msra.mxu0 %v536
        %751 = vmatpush.msra.mxu0 %v528
        %752 = vmatpush.msra.mxu0 %v520
        %753 = vmatpush.msra.mxu0 %v512
        %754 = vmatpush.msra.mxu0 %v504
        %755 = vmatpush.msra.mxu0 %v496
        %756 = vmatpush.msra.mxu0 %v488
        %757 = vmatpush.msra.mxu0 %v480
        %758 = vmatpush.msra.mxu0 %v472
        %759 = vmatpush.msra.mxu0 %v464
        %760 = vmatpush.msra.mxu0 %v456
        %761 = vmatpush.msra.mxu0 %v448
        %762 = vmatpush.msra.mxu0 %v440
        %763 = vmatpush.msra.mxu0 %v432
        %764 = vmatmul.f32.gmra.mxu0 %v689
        %v765 = vpop.f32.mrf.mxu0
        %v766 = vadd.f32 %v693, %v765
        %767 = vdwg.mxu0
        %768 = vmatpush.msra.mxu0 %v680
        %769 = vmatpush.msra.mxu0 %v672
        %770 = vmatpush.msra.mxu0 %v664
        %771 = vmatpush.msra.mxu0 %v656
        %772 = vmatpush.msra.mxu0 %v648
        %773 = vmatpush.msra.mxu0 %v640
        %774 = vmatpush.msra.mxu0 %v632
        %775 = vmatpush.msra.mxu0 %v624
        %776 = vmatpush.msra.mxu0 %v616
        %777 = vmatpush.msra.mxu0 %v608
        %778 = vmatpush.msra.mxu0 %v600
        %779 = vmatpush.msra.mxu0 %v592
        %780 = vmatpush.msra.mxu0 %v584
        %781 = vmatpush.msra.mxu0 %v576
        %782 = vmatpush.msra.mxu0 %v568
        %783 = vmatpush.msra.mxu0 %v560
        %784 = vmatmul.f32.gmra.mxu0 %v690
        %v785 = vpop.f32.mrf.mxu0
        %v786 = vadd.f32 %v766, %v785
        %787 = vdwg.mxu0
        %788 = vmatpush.msra.mxu0 %v553
        %789 = vmatpush.msra.mxu0 %v545
        %790 = vmatpush.msra.mxu0 %v537
        %791 = vmatpush.msra.mxu0 %v529
        %792 = vmatpush.msra.mxu0 %v521
        %793 = vmatpush.msra.mxu0 %v513
        %794 = vmatpush.msra.mxu0 %v505
        %795 = vmatpush.msra.mxu0 %v497
        %796 = vmatpush.msra.mxu0 %v489
        %797 = vmatpush.msra.mxu0 %v481
        %798 = vmatpush.msra.mxu0 %v473
        %799 = vmatpush.msra.mxu0 %v465
        %800 = vmatpush.msra.mxu0 %v457
        %801 = vmatpush.msra.mxu0 %v449
        %802 = vmatpush.msra.mxu0 %v441
        %803 = vmatpush.msra.mxu0 %v433
        %804 = vmatmul.f32.gmra.mxu0 %v689
        %v805 = vpop.f32.mrf.mxu0
        %v806 = vadd.f32 %v694, %v805
        %807 = vdwg.mxu0
        %808 = vmatpush.msra.mxu0 %v681
        %809 = vmatpush.msra.mxu0 %v673
        %810 = vmatpush.msra.mxu0 %v665
        %811 = vmatpush.msra.mxu0 %v657
        %812 = vmatpush.msra.mxu0 %v649
        %813 = vmatpush.msra.mxu0 %v641
        %814 = vmatpush.msra.mxu0 %v633
        %815 = vmatpush.msra.mxu0 %v625
        %816 = vmatpush.msra.mxu0 %v617
        %817 = vmatpush.msra.mxu0 %v609
        %818 = vmatpush.msra.mxu0 %v601
        %819 = vmatpush.msra.mxu0 %v593
        %820 = vmatpush.msra.mxu0 %v585
        %821 = vmatpush.msra.mxu0 %v577
        %822 = vmatpush.msra.mxu0 %v569
        %823 = vmatpush.msra.mxu0 %v561
        %824 = vmatmul.f32.gmra.mxu0 %v690
        %v825 = vpop.f32.mrf.mxu0
        %v826 = vadd.f32 %v806, %v825
        %827 = vdwg.mxu0
        %828 = vmatpush.msra.mxu0 %v554
        %829 = vmatpush.msra.mxu0 %v546
        %830 = vmatpush.msra.mxu0 %v538
        %831 = vmatpush.msra.mxu0 %v530
        %832 = vmatpush.msra.mxu0 %v522
        %833 = vmatpush.msra.mxu0 %v514
        %834 = vmatpush.msra.mxu0 %v506
        %835 = vmatpush.msra.mxu0 %v498
        %836 = vmatpush.msra.mxu0 %v490
        %837 = vmatpush.msra.mxu0 %v482
        %838 = vmatpush.msra.mxu0 %v474
        %839 = vmatpush.msra.mxu0 %v466
        %840 = vmatpush.msra.mxu0 %v458
        %841 = vmatpush.msra.mxu0 %v450
        %842 = vmatpush.msra.mxu0 %v442
        %843 = vmatpush.msra.mxu0 %v434
        %844 = vmatmul.f32.gmra.mxu0 %v689
        %v845 = vpop.f32.mrf.mxu0
        %v846 = vadd.f32 %v695, %v845
        %847 = vdwg.mxu0
        %848 = vmatpush.msra.mxu0 %v682
        %849 = vmatpush.msra.mxu0 %v674
        %850 = vmatpush.msra.mxu0 %v666
        %851 = vmatpush.msra.mxu0 %v658
        %852 = vmatpush.msra.mxu0 %v650
        %853 = vmatpush.msra.mxu0 %v642
        %854 = vmatpush.msra.mxu0 %v634
        %855 = vmatpush.msra.mxu0 %v626
        %856 = vmatpush.msra.mxu0 %v618
        %857 = vmatpush.msra.mxu0 %v610
        %858 = vmatpush.msra.mxu0 %v602
        %859 = vmatpush.msra.mxu0 %v594
        %860 = vmatpush.msra.mxu0 %v586
        %861 = vmatpush.msra.mxu0 %v578
        %862 = vmatpush.msra.mxu0 %v570
        %863 = vmatpush.msra.mxu0 %v562
        %864 = vmatmul.f32.gmra.mxu0 %v690
        %v865 = vpop.f32.mrf.mxu0
        %v866 = vadd.f32 %v846, %v865
        %867 = vdwg.mxu0
        %868 = vmatpush.msra.mxu0 %v555
        %869 = vmatpush.msra.mxu0 %v547
        %870 = vmatpush.msra.mxu0 %v539
        %871 = vmatpush.msra.mxu0 %v531
        %872 = vmatpush.msra.mxu0 %v523
        %873 = vmatpush.msra.mxu0 %v515
        %874 = vmatpush.msra.mxu0 %v507
        %875 = vmatpush.msra.mxu0 %v499
        %876 = vmatpush.msra.mxu0 %v491
        %877 = vmatpush.msra.mxu0 %v483
        %878 = vmatpush.msra.mxu0 %v475
        %879 = vmatpush.msra.mxu0 %v467
        %880 = vmatpush.msra.mxu0 %v459
        %881 = vmatpush.msra.mxu0 %v451
        %882 = vmatpush.msra.mxu0 %v443
        %883 = vmatpush.msra.mxu0 %v435
        %884 = vmatmul.f32.gmra.mxu0 %v689
        %v885 = vpop.f32.mrf.mxu0
        %v886 = vadd.f32 %v696, %v885
        %887 = vdwg.mxu0
        %888 = vmatpush.msra.mxu0 %v683
        %889 = vmatpush.msra.mxu0 %v675
        %890 = vmatpush.msra.mxu0 %v667
        %891 = vmatpush.msra.mxu0 %v659
        %892 = vmatpush.msra.mxu0 %v651
        %893 = vmatpush.msra.mxu0 %v643
        %894 = vmatpush.msra.mxu0 %v635
        %895 = vmatpush.msra.mxu0 %v627
        %896 = vmatpush.msra.mxu0 %v619
        %897 = vmatpush.msra.mxu0 %v611
        %898 = vmatpush.msra.mxu0 %v603
        %899 = vmatpush.msra.mxu0 %v595
        %900 = vmatpush.msra.mxu0 %v587
        %901 = vmatpush.msra.mxu0 %v579
        %902 = vmatpush.msra.mxu0 %v571
        %903 = vmatpush.msra.mxu0 %v563
        %904 = vmatmul.f32.gmra.mxu0 %v690
        %v905 = vpop.f32.mrf.mxu0
        %v906 = vadd.f32 %v886, %v905
        %907 = vdwg.mxu0
        %908 = vmatpush.msra.mxu0 %v556
        %909 = vmatpush.msra.mxu0 %v548
        %910 = vmatpush.msra.mxu0 %v540
        %911 = vmatpush.msra.mxu0 %v532
        %912 = vmatpush.msra.mxu0 %v524
        %913 = vmatpush.msra.mxu0 %v516
        %914 = vmatpush.msra.mxu0 %v508
        %915 = vmatpush.msra.mxu0 %v500
        %916 = vmatpush.msra.mxu0 %v492
        %917 = vmatpush.msra.mxu0 %v484
        %918 = vmatpush.msra.mxu0 %v476
        %919 = vmatpush.msra.mxu0 %v468
        %920 = vmatpush.msra.mxu0 %v460
        %921 = vmatpush.msra.mxu0 %v452
        %922 = vmatpush.msra.mxu0 %v444
        %923 = vmatpush.msra.mxu0 %v436
        %924 = vmatmul.f32.gmra.mxu0 %v689
        %v925 = vpop.f32.mrf.mxu0
        %v926 = vadd.f32 %v697, %v925
        %927 = vdwg.mxu0
        %928 = vmatpush.msra.mxu0 %v684
        %929 = vmatpush.msra.mxu0 %v676
        %930 = vmatpush.msra.mxu0 %v668
        %931 = vmatpush.msra.mxu0 %v660
        %932 = vmatpush.msra.mxu0 %v652
        %933 = vmatpush.msra.mxu0 %v644
        %934 = vmatpush.msra.mxu0 %v636
        %935 = vmatpush.msra.mxu0 %v628
        %936 = vmatpush.msra.mxu0 %v620
        %937 = vmatpush.msra.mxu0 %v612
        %938 = vmatpush.msra.mxu0 %v604
        %939 = vmatpush.msra.mxu0 %v596
        %940 = vmatpush.msra.mxu0 %v588
        %941 = vmatpush.msra.mxu0 %v580
        %942 = vmatpush.msra.mxu0 %v572
        %943 = vmatpush.msra.mxu0 %v564
        %944 = vmatmul.f32.gmra.mxu0 %v690
        %v945 = vpop.f32.mrf.mxu0
        %v946 = vadd.f32 %v926, %v945
        %947 = vdwg.mxu0
        %948 = vmatpush.msra.mxu0 %v557
        %949 = vmatpush.msra.mxu0 %v549
        %950 = vmatpush.msra.mxu0 %v541
        %951 = vmatpush.msra.mxu0 %v533
        %952 = vmatpush.msra.mxu0 %v525
        %953 = vmatpush.msra.mxu0 %v517
        %954 = vmatpush.msra.mxu0 %v509
        %955 = vmatpush.msra.mxu0 %v501
        %956 = vmatpush.msra.mxu0 %v493
        %957 = vmatpush.msra.mxu0 %v485
        %958 = vmatpush.msra.mxu0 %v477
        %959 = vmatpush.msra.mxu0 %v469
        %960 = vmatpush.msra.mxu0 %v461
        %961 = vmatpush.msra.mxu0 %v453
        %962 = vmatpush.msra.mxu0 %v445
        %963 = vmatpush.msra.mxu0 %v437
        %964 = vmatmul.f32.gmra.mxu0 %v689
        %v965 = vpop.f32.mrf.mxu0
        %v966 = vadd.f32 %v698, %v965
        %967 = vdwg.mxu0
        %968 = vmatpush.msra.mxu0 %v685
        %969 = vmatpush.msra.mxu0 %v677
        %970 = vmatpush.msra.mxu0 %v669
        %971 = vmatpush.msra.mxu0 %v661
        %972 = vmatpush.msra.mxu0 %v653
        %973 = vmatpush.msra.mxu0 %v645
        %974 = vmatpush.msra.mxu0 %v637
        %975 = vmatpush.msra.mxu0 %v629
        %976 = vmatpush.msra.mxu0 %v621
        %977 = vmatpush.msra.mxu0 %v613
        %978 = vmatpush.msra.mxu0 %v605
        %979 = vmatpush.msra.mxu0 %v597
        %980 = vmatpush.msra.mxu0 %v589
        %981 = vmatpush.msra.mxu0 %v581
        %982 = vmatpush.msra.mxu0 %v573
        %983 = vmatpush.msra.mxu0 %v565
        %984 = vmatmul.f32.gmra.mxu0 %v690
        %v985 = vpop.f32.mrf.mxu0
        %v986 = vadd.f32 %v966, %v985
        %987 = vdwg.mxu0
        %988 = vmatpush.msra.mxu0 %v558
        %989 = vmatpush.msra.mxu0 %v550
        %990 = vmatpush.msra.mxu0 %v542
        %991 = vmatpush.msra.mxu0 %v534
        %992 = vmatpush.msra.mxu0 %v526
        %993 = vmatpush.msra.mxu0 %v518
        %994 = vmatpush.msra.mxu0 %v510
        %995 = vmatpush.msra.mxu0 %v502
        %996 = vmatpush.msra.mxu0 %v494
        %997 = vmatpush.msra.mxu0 %v486
        %998 = vmatpush.msra.mxu0 %v478
        %999 = vmatpush.msra.mxu0 %v470
        %1000 = vmatpush.msra.mxu0 %v462
        %1001 = vmatpush.msra.mxu0 %v454
        %1002 = vmatpush.msra.mxu0 %v446
        %1003 = vmatpush.msra.mxu0 %v438
        %1004 = vmatmul.f32.gmra.mxu0 %v689
        %v1005 = vpop.f32.mrf.mxu0
        %v1006 = vadd.f32 %v699, %v1005
        %1007 = vdwg.mxu0
        %1008 = vmatpush.msra.mxu0 %v686
        %1009 = vmatpush.msra.mxu0 %v678
        %1010 = vmatpush.msra.mxu0 %v670
        %1011 = vmatpush.msra.mxu0 %v662
        %1012 = vmatpush.msra.mxu0 %v654
        %1013 = vmatpush.msra.mxu0 %v646
        %1014 = vmatpush.msra.mxu0 %v638
        %1015 = vmatpush.msra.mxu0 %v630
        %1016 = vmatpush.msra.mxu0 %v622
        %1017 = vmatpush.msra.mxu0 %v614
        %1018 = vmatpush.msra.mxu0 %v606
        %1019 = vmatpush.msra.mxu0 %v598
        %1020 = vmatpush.msra.mxu0 %v590
        %1021 = vmatpush.msra.mxu0 %v582
        %1022 = vmatpush.msra.mxu0 %v574
        %1023 = vmatpush.msra.mxu0 %v566
        %1024 = vmatmul.f32.gmra.mxu0 %v690
        %v1025 = vpop.f32.mrf.mxu0
        %v1026 = vadd.f32 %v1006, %v1025
        %1027 = vdwg.mxu0
        %v1028 = vmax.f32 %v746, 0.0
        %v1029 = vmax.f32 %v786, 0.0
        %v1030 = vmax.f32 %v826, 0.0
        %v1031 = vmax.f32 %v866, 0.0
        %v1032 = vmax.f32 %v906, 0.0
        %v1033 = vmax.f32 %v946, 0.0
        %v1034 = vmax.f32 %v986, 0.0
        %v1035 = vmax.f32 %v1026, 0.0
        %v1036 = vld [vmem:[#allocation2] sm:$0xff]
        %v1037 = vld [vmem:[#allocation2 + $0x8] sm:$0xff]
        %v1038 = vld [vmem:[#allocation2 + $0x10] sm:$0xff]
        %v1039 = vld [vmem:[#allocation2 + $0x18] sm:$0xff]
        %v1040 = vld [vmem:[#allocation2 + $0x20] sm:$0xff]
        %v1041 = vld [vmem:[#allocation2 + $0x28] sm:$0xff]
        %v1042 = vld [vmem:[#allocation2 + $0x30] sm:$0xff]
        %v1043 = vld [vmem:[#allocation2 + $0x38] sm:$0xff]
        %v1044 = vld [vmem:[%s347] sm:$0xff]
        %v1045 = vld [vmem:[%s347 + $0x8] sm:$0xff]
        %v1046 = vld [vmem:[%s347 + $0x10] sm:$0xff]
        %v1047 = vld [vmem:[%s347 + $0x18] sm:$0xff]
        %v1048 = vld [vmem:[%s347 + $0x20] sm:$0xff]
        %v1049 = vld [vmem:[%s347 + $0x28] sm:$0xff]
        %v1050 = vld [vmem:[%s347 + $0x30] sm:$0xff]
        %v1051 = vld [vmem:[%s347 + $0x38] sm:$0xff]
        %v1052 = vld [vmem:[%s347 + $0x40] sm:$0xff]
        %v1053 = vld [vmem:[%s347 + $0x48] sm:$0xff]
        %v1054 = vld [vmem:[%s347 + $0x50] sm:$0xff]
        %v1055 = vld [vmem:[%s347 + $0x58] sm:$0xff]
        %v1056 = vld [vmem:[%s347 + $0x60] sm:$0xff]
        %v1057 = vld [vmem:[%s347 + $0x68] sm:$0xff]
        %v1058 = vld [vmem:[%s347 + $0x70] sm:$0xff]
        %v1059 = vld [vmem:[%s347 + $0x78] sm:$0xff]
        %v1060 = vld [vmem:[%s347 + $0x80] sm:$0xff]
        %v1061 = vld [vmem:[%s347 + $0x88] sm:$0xff]
        %v1062 = vld [vmem:[%s347 + $0x90] sm:$0xff]
        %v1063 = vld [vmem:[%s347 + $0x98] sm:$0xff]
        %v1064 = vld [vmem:[%s347 + $0xa0] sm:$0xff]
        %v1065 = vld [vmem:[%s347 + $0xa8] sm:$0xff]
        %v1066 = vld [vmem:[%s347 + $0xb0] sm:$0xff]
        %v1067 = vld [vmem:[%s347 + $0xb8] sm:$0xff]
        %v1068 = vld [vmem:[%s347 + $0xc0] sm:$0xff]
        %v1069 = vld [vmem:[%s347 + $0xc8] sm:$0xff]
        %v1070 = vld [vmem:[%s347 + $0xd0] sm:$0xff]
        %v1071 = vld [vmem:[%s347 + $0xd8] sm:$0xff]
        %v1072 = vld [vmem:[%s347 + $0xe0] sm:$0xff]
        %v1073 = vld [vmem:[%s347 + $0xe8] sm:$0xff]
        %v1074 = vld [vmem:[%s347 + $0xf0] sm:$0xff]
        %v1075 = vld [vmem:[%s347 + $0xf8] sm:$0xff]
        %v1076 = vld [vmem:[%s347 + $0x100] sm:$0xff]
        %v1077 = vld [vmem:[%s347 + $0x108] sm:$0xff]
        %v1078 = vld [vmem:[%s347 + $0x110] sm:$0xff]
        %v1079 = vld [vmem:[%s347 + $0x118] sm:$0xff]
        %v1080 = vld [vmem:[%s347 + $0x120] sm:$0xff]
        %v1081 = vld [vmem:[%s347 + $0x128] sm:$0xff]
        %v1082 = vld [vmem:[%s347 + $0x130] sm:$0xff]
        %v1083 = vld [vmem:[%s347 + $0x138] sm:$0xff]
        %v1084 = vld [vmem:[%s347 + $0x140] sm:$0xff]
        %v1085 = vld [vmem:[%s347 + $0x148] sm:$0xff]
        %v1086 = vld [vmem:[%s347 + $0x150] sm:$0xff]
        %v1087 = vld [vmem:[%s347 + $0x158] sm:$0xff]
        %v1088 = vld [vmem:[%s347 + $0x160] sm:$0xff]
        %v1089 = vld [vmem:[%s347 + $0x168] sm:$0xff]
        %v1090 = vld [vmem:[%s347 + $0x170] sm:$0xff]
        %v1091 = vld [vmem:[%s347 + $0x178] sm:$0xff]
        %v1092 = vld [vmem:[%s347 + $0x180] sm:$0xff]
        %v1093 = vld [vmem:[%s347 + $0x188] sm:$0xff]
        %v1094 = vld [vmem:[%s347 + $0x190] sm:$0xff]
        %v1095 = vld [vmem:[%s347 + $0x198] sm:$0xff]
        %v1096 = vld [vmem:[%s347 + $0x1a0] sm:$0xff]
        %v1097 = vld [vmem:[%s347 + $0x1a8] sm:$0xff]
        %v1098 = vld [vmem:[%s347 + $0x1b0] sm:$0xff]
        %v1099 = vld [vmem:[%s347 + $0x1b8] sm:$0xff]
        %v1100 = vld [vmem:[%s347 + $0x1c0] sm:$0xff]
        %v1101 = vld [vmem:[%s347 + $0x1c8] sm:$0xff]
        %v1102 = vld [vmem:[%s347 + $0x1d0] sm:$0xff]
        %v1103 = vld [vmem:[%s347 + $0x1d8] sm:$0xff]
        %v1104 = vld [vmem:[%s347 + $0x1e0] sm:$0xff]
        %v1105 = vld [vmem:[%s347 + $0x1e8] sm:$0xff]
        %v1106 = vld [vmem:[%s347 + $0x1f0] sm:$0xff]
        %v1107 = vld [vmem:[%s347 + $0x1f8] sm:$0xff]
        %v1108 = vld [vmem:[%s347 + $0x200] sm:$0xff]
        %v1109 = vld [vmem:[%s347 + $0x208] sm:$0xff]
        %v1110 = vld [vmem:[%s347 + $0x210] sm:$0xff]
        %v1111 = vld [vmem:[%s347 + $0x218] sm:$0xff]
        %v1112 = vld [vmem:[%s347 + $0x220] sm:$0xff]
        %v1113 = vld [vmem:[%s347 + $0x228] sm:$0xff]
        %v1114 = vld [vmem:[%s347 + $0x230] sm:$0xff]
        %v1115 = vld [vmem:[%s347 + $0x238] sm:$0xff]
        %v1116 = vld [vmem:[%s347 + $0x240] sm:$0xff]
        %v1117 = vld [vmem:[%s347 + $0x248] sm:$0xff]
        %v1118 = vld [vmem:[%s347 + $0x250] sm:$0xff]
        %v1119 = vld [vmem:[%s347 + $0x258] sm:$0xff]
        %v1120 = vld [vmem:[%s347 + $0x260] sm:$0xff]
        %v1121 = vld [vmem:[%s347 + $0x268] sm:$0xff]
        %v1122 = vld [vmem:[%s347 + $0x270] sm:$0xff]
        %v1123 = vld [vmem:[%s347 + $0x278] sm:$0xff]
        %v1124 = vld [vmem:[%s347 + $0x280] sm:$0xff]
        %v1125 = vld [vmem:[%s347 + $0x288] sm:$0xff]
        %v1126 = vld [vmem:[%s347 + $0x290] sm:$0xff]
        %v1127 = vld [vmem:[%s347 + $0x298] sm:$0xff]
        %v1128 = vld [vmem:[%s347 + $0x2a0] sm:$0xff]
        %v1129 = vld [vmem:[%s347 + $0x2a8] sm:$0xff]
        %v1130 = vld [vmem:[%s347 + $0x2b0] sm:$0xff]
        %v1131 = vld [vmem:[%s347 + $0x2b8] sm:$0xff]
        %v1132 = vld [vmem:[%s347 + $0x2c0] sm:$0xff]
        %v1133 = vld [vmem:[%s347 + $0x2c8] sm:$0xff]
        %v1134 = vld [vmem:[%s347 + $0x2d0] sm:$0xff]
        %v1135 = vld [vmem:[%s347 + $0x2d8] sm:$0xff]
        %v1136 = vld [vmem:[%s347 + $0x2e0] sm:$0xff]
        %v1137 = vld [vmem:[%s347 + $0x2e8] sm:$0xff]
        %v1138 = vld [vmem:[%s347 + $0x2f0] sm:$0xff]
        %v1139 = vld [vmem:[%s347 + $0x2f8] sm:$0xff]
        %v1140 = vld [vmem:[%s347 + $0x300] sm:$0xff]
        %v1141 = vld [vmem:[%s347 + $0x308] sm:$0xff]
        %v1142 = vld [vmem:[%s347 + $0x310] sm:$0xff]
        %v1143 = vld [vmem:[%s347 + $0x318] sm:$0xff]
        %v1144 = vld [vmem:[%s347 + $0x320] sm:$0xff]
        %v1145 = vld [vmem:[%s347 + $0x328] sm:$0xff]
        %v1146 = vld [vmem:[%s347 + $0x330] sm:$0xff]
        %v1147 = vld [vmem:[%s347 + $0x338] sm:$0xff]
        %v1148 = vld [vmem:[%s347 + $0x340] sm:$0xff]
        %v1149 = vld [vmem:[%s347 + $0x348] sm:$0xff]
        %v1150 = vld [vmem:[%s347 + $0x350] sm:$0xff]
        %v1151 = vld [vmem:[%s347 + $0x358] sm:$0xff]
        %v1152 = vld [vmem:[%s347 + $0x360] sm:$0xff]
        %v1153 = vld [vmem:[%s347 + $0x368] sm:$0xff]
        %v1154 = vld [vmem:[%s347 + $0x370] sm:$0xff]
        %v1155 = vld [vmem:[%s347 + $0x378] sm:$0xff]
        %v1156 = vld [vmem:[%s347 + $0x380] sm:$0xff]
        %v1157 = vld [vmem:[%s347 + $0x388] sm:$0xff]
        %v1158 = vld [vmem:[%s347 + $0x390] sm:$0xff]
        %v1159 = vld [vmem:[%s347 + $0x398] sm:$0xff]
        %v1160 = vld [vmem:[%s347 + $0x3a0] sm:$0xff]
        %v1161 = vld [vmem:[%s347 + $0x3a8] sm:$0xff]
        %v1162 = vld [vmem:[%s347 + $0x3b0] sm:$0xff]
        %v1163 = vld [vmem:[%s347 + $0x3b8] sm:$0xff]
        %v1164 = vld [vmem:[%s347 + $0x3c0] sm:$0xff]
        %v1165 = vld [vmem:[%s347 + $0x3c8] sm:$0xff]
        %v1166 = vld [vmem:[%s347 + $0x3d0] sm:$0xff]
        %v1167 = vld [vmem:[%s347 + $0x3d8] sm:$0xff]
        %v1168 = vld [vmem:[%s347 + $0x3e0] sm:$0xff]
        %v1169 = vld [vmem:[%s347 + $0x3e8] sm:$0xff]
        %v1170 = vld [vmem:[%s347 + $0x3f0] sm:$0xff]
        %v1171 = vld [vmem:[%s347 + $0x3f8] sm:$0xff]
        %v1172 = vld [vmem:[%s347 + $0x400] sm:$0xff]
        %v1173 = vld [vmem:[%s347 + $0x408] sm:$0xff]
        %v1174 = vld [vmem:[%s347 + $0x410] sm:$0xff]
        %v1175 = vld [vmem:[%s347 + $0x418] sm:$0xff]
        %v1176 = vld [vmem:[%s347 + $0x420] sm:$0xff]
        %v1177 = vld [vmem:[%s347 + $0x428] sm:$0xff]
        %v1178 = vld [vmem:[%s347 + $0x430] sm:$0xff]
        %v1179 = vld [vmem:[%s347 + $0x438] sm:$0xff]
        %v1180 = vld [vmem:[%s347 + $0x440] sm:$0xff]
        %v1181 = vld [vmem:[%s347 + $0x448] sm:$0xff]
        %v1182 = vld [vmem:[%s347 + $0x450] sm:$0xff]
        %v1183 = vld [vmem:[%s347 + $0x458] sm:$0xff]
        %v1184 = vld [vmem:[%s347 + $0x460] sm:$0xff]
        %v1185 = vld [vmem:[%s347 + $0x468] sm:$0xff]
        %v1186 = vld [vmem:[%s347 + $0x470] sm:$0xff]
        %v1187 = vld [vmem:[%s347 + $0x478] sm:$0xff]
        %v1188 = vld [vmem:[%s347 + $0x480] sm:$0xff]
        %v1189 = vld [vmem:[%s347 + $0x488] sm:$0xff]
        %v1190 = vld [vmem:[%s347 + $0x490] sm:$0xff]
        %v1191 = vld [vmem:[%s347 + $0x498] sm:$0xff]
        %v1192 = vld [vmem:[%s347 + $0x4a0] sm:$0xff]
        %v1193 = vld [vmem:[%s347 + $0x4a8] sm:$0xff]
        %v1194 = vld [vmem:[%s347 + $0x4b0] sm:$0xff]
        %v1195 = vld [vmem:[%s347 + $0x4b8] sm:$0xff]
        %v1196 = vld [vmem:[%s347 + $0x4c0] sm:$0xff]
        %v1197 = vld [vmem:[%s347 + $0x4c8] sm:$0xff]
        %v1198 = vld [vmem:[%s347 + $0x4d0] sm:$0xff]
        %v1199 = vld [vmem:[%s347 + $0x4d8] sm:$0xff]
        %v1200 = vld [vmem:[%s347 + $0x4e0] sm:$0xff]
        %v1201 = vld [vmem:[%s347 + $0x4e8] sm:$0xff]
        %v1202 = vld [vmem:[%s347 + $0x4f0] sm:$0xff]
        %v1203 = vld [vmem:[%s347 + $0x4f8] sm:$0xff]
        %v1204 = vld [vmem:[%s347 + $0x500] sm:$0xff]
        %v1205 = vld [vmem:[%s347 + $0x508] sm:$0xff]
        %v1206 = vld [vmem:[%s347 + $0x510] sm:$0xff]
        %v1207 = vld [vmem:[%s347 + $0x518] sm:$0xff]
        %v1208 = vld [vmem:[%s347 + $0x520] sm:$0xff]
        %v1209 = vld [vmem:[%s347 + $0x528] sm:$0xff]
        %v1210 = vld [vmem:[%s347 + $0x530] sm:$0xff]
        %v1211 = vld [vmem:[%s347 + $0x538] sm:$0xff]
        %v1212 = vld [vmem:[%s347 + $0x540] sm:$0xff]
        %v1213 = vld [vmem:[%s347 + $0x548] sm:$0xff]
        %v1214 = vld [vmem:[%s347 + $0x550] sm:$0xff]
        %v1215 = vld [vmem:[%s347 + $0x558] sm:$0xff]
        %v1216 = vld [vmem:[%s347 + $0x560] sm:$0xff]
        %v1217 = vld [vmem:[%s347 + $0x568] sm:$0xff]
        %v1218 = vld [vmem:[%s347 + $0x570] sm:$0xff]
        %v1219 = vld [vmem:[%s347 + $0x578] sm:$0xff]
        %v1220 = vld [vmem:[%s347 + $0x580] sm:$0xff]
        %v1221 = vld [vmem:[%s347 + $0x588] sm:$0xff]
        %v1222 = vld [vmem:[%s347 + $0x590] sm:$0xff]
        %v1223 = vld [vmem:[%s347 + $0x598] sm:$0xff]
        %v1224 = vld [vmem:[%s347 + $0x5a0] sm:$0xff]
        %v1225 = vld [vmem:[%s347 + $0x5a8] sm:$0xff]
        %v1226 = vld [vmem:[%s347 + $0x5b0] sm:$0xff]
        %v1227 = vld [vmem:[%s347 + $0x5b8] sm:$0xff]
        %v1228 = vld [vmem:[%s347 + $0x5c0] sm:$0xff]
        %v1229 = vld [vmem:[%s347 + $0x5c8] sm:$0xff]
        %v1230 = vld [vmem:[%s347 + $0x5d0] sm:$0xff]
        %v1231 = vld [vmem:[%s347 + $0x5d8] sm:$0xff]
        %v1232 = vld [vmem:[%s347 + $0x5e0] sm:$0xff]
        %v1233 = vld [vmem:[%s347 + $0x5e8] sm:$0xff]
        %v1234 = vld [vmem:[%s347 + $0x5f0] sm:$0xff]
        %v1235 = vld [vmem:[%s347 + $0x5f8] sm:$0xff]
        %v1236 = vld [vmem:[%s347 + $0x600] sm:$0xff]
        %v1237 = vld [vmem:[%s347 + $0x608] sm:$0xff]
        %v1238 = vld [vmem:[%s347 + $0x610] sm:$0xff]
        %v1239 = vld [vmem:[%s347 + $0x618] sm:$0xff]
        %v1240 = vld [vmem:[%s347 + $0x620] sm:$0xff]
        %v1241 = vld [vmem:[%s347 + $0x628] sm:$0xff]
        %v1242 = vld [vmem:[%s347 + $0x630] sm:$0xff]
        %v1243 = vld [vmem:[%s347 + $0x638] sm:$0xff]
        %v1244 = vld [vmem:[%s347 + $0x640] sm:$0xff]
        %v1245 = vld [vmem:[%s347 + $0x648] sm:$0xff]
        %v1246 = vld [vmem:[%s347 + $0x650] sm:$0xff]
        %v1247 = vld [vmem:[%s347 + $0x658] sm:$0xff]
        %v1248 = vld [vmem:[%s347 + $0x660] sm:$0xff]
        %v1249 = vld [vmem:[%s347 + $0x668] sm:$0xff]
        %v1250 = vld [vmem:[%s347 + $0x670] sm:$0xff]
        %v1251 = vld [vmem:[%s347 + $0x678] sm:$0xff]
        %v1252 = vld [vmem:[%s347 + $0x680] sm:$0xff]
        %v1253 = vld [vmem:[%s347 + $0x688] sm:$0xff]
        %v1254 = vld [vmem:[%s347 + $0x690] sm:$0xff]
        %v1255 = vld [vmem:[%s347 + $0x698] sm:$0xff]
        %v1256 = vld [vmem:[%s347 + $0x6a0] sm:$0xff]
        %v1257 = vld [vmem:[%s347 + $0x6a8] sm:$0xff]
        %v1258 = vld [vmem:[%s347 + $0x6b0] sm:$0xff]
        %v1259 = vld [vmem:[%s347 + $0x6b8] sm:$0xff]
        %v1260 = vld [vmem:[%s347 + $0x6c0] sm:$0xff]
        %v1261 = vld [vmem:[%s347 + $0x6c8] sm:$0xff]
        %v1262 = vld [vmem:[%s347 + $0x6d0] sm:$0xff]
        %v1263 = vld [vmem:[%s347 + $0x6d8] sm:$0xff]
        %v1264 = vld [vmem:[%s347 + $0x6e0] sm:$0xff]
        %v1265 = vld [vmem:[%s347 + $0x6e8] sm:$0xff]
        %v1266 = vld [vmem:[%s347 + $0x6f0] sm:$0xff]
        %v1267 = vld [vmem:[%s347 + $0x6f8] sm:$0xff]
        %v1268 = vld [vmem:[%s347 + $0x700] sm:$0xff]
        %v1269 = vld [vmem:[%s347 + $0x708] sm:$0xff]
        %v1270 = vld [vmem:[%s347 + $0x710] sm:$0xff]
        %v1271 = vld [vmem:[%s347 + $0x718] sm:$0xff]
        %v1272 = vld [vmem:[%s347 + $0x720] sm:$0xff]
        %v1273 = vld [vmem:[%s347 + $0x728] sm:$0xff]
        %v1274 = vld [vmem:[%s347 + $0x730] sm:$0xff]
        %v1275 = vld [vmem:[%s347 + $0x738] sm:$0xff]
        %v1276 = vld [vmem:[%s347 + $0x740] sm:$0xff]
        %v1277 = vld [vmem:[%s347 + $0x748] sm:$0xff]
        %v1278 = vld [vmem:[%s347 + $0x750] sm:$0xff]
        %v1279 = vld [vmem:[%s347 + $0x758] sm:$0xff]
        %v1280 = vld [vmem:[%s347 + $0x760] sm:$0xff]
        %v1281 = vld [vmem:[%s347 + $0x768] sm:$0xff]
        %v1282 = vld [vmem:[%s347 + $0x770] sm:$0xff]
        %v1283 = vld [vmem:[%s347 + $0x778] sm:$0xff]
        %v1284 = vld [vmem:[%s347 + $0x780] sm:$0xff]
        %v1285 = vld [vmem:[%s347 + $0x788] sm:$0xff]
        %v1286 = vld [vmem:[%s347 + $0x790] sm:$0xff]
        %v1287 = vld [vmem:[%s347 + $0x798] sm:$0xff]
        %v1288 = vld [vmem:[%s347 + $0x7a0] sm:$0xff]
        %v1289 = vld [vmem:[%s347 + $0x7a8] sm:$0xff]
        %v1290 = vld [vmem:[%s347 + $0x7b0] sm:$0xff]
        %v1291 = vld [vmem:[%s347 + $0x7b8] sm:$0xff]
        %v1292 = vld [vmem:[%s347 + $0x7c0] sm:$0xff]
        %v1293 = vld [vmem:[%s347 + $0x7c8] sm:$0xff]
        %v1294 = vld [vmem:[%s347 + $0x7d0] sm:$0xff]
        %v1295 = vld [vmem:[%s347 + $0x7d8] sm:$0xff]
        %v1296 = vld [vmem:[%s347 + $0x7e0] sm:$0xff]
        %v1297 = vld [vmem:[%s347 + $0x7e8] sm:$0xff]
        %v1298 = vld [vmem:[%s347 + $0x7f0] sm:$0xff]
        %v1299 = vld [vmem:[%s347 + $0x7f8] sm:$0xff]
        %v1300 = vld [vmem:[%s347 + $0x800] sm:$0xff]
        %v1301 = vld [vmem:[%s347 + $0x808] sm:$0xff]
        %v1302 = vld [vmem:[%s347 + $0x810] sm:$0xff]
        %v1303 = vld [vmem:[%s347 + $0x818] sm:$0xff]
        %v1304 = vld [vmem:[%s347 + $0x820] sm:$0xff]
        %v1305 = vld [vmem:[%s347 + $0x828] sm:$0xff]
        %v1306 = vld [vmem:[%s347 + $0x830] sm:$0xff]
        %v1307 = vld [vmem:[%s347 + $0x838] sm:$0xff]
        %v1308 = vld [vmem:[%s347 + $0x840] sm:$0xff]
        %v1309 = vld [vmem:[%s347 + $0x848] sm:$0xff]
        %v1310 = vld [vmem:[%s347 + $0x850] sm:$0xff]
        %v1311 = vld [vmem:[%s347 + $0x858] sm:$0xff]
        %v1312 = vld [vmem:[%s347 + $0x860] sm:$0xff]
        %v1313 = vld [vmem:[%s347 + $0x868] sm:$0xff]
        %v1314 = vld [vmem:[%s347 + $0x870] sm:$0xff]
        %v1315 = vld [vmem:[%s347 + $0x878] sm:$0xff]
        %v1316 = vld [vmem:[%s347 + $0x880] sm:$0xff]
        %v1317 = vld [vmem:[%s347 + $0x888] sm:$0xff]
        %v1318 = vld [vmem:[%s347 + $0x890] sm:$0xff]
        %v1319 = vld [vmem:[%s347 + $0x898] sm:$0xff]
        %v1320 = vld [vmem:[%s347 + $0x8a0] sm:$0xff]
        %v1321 = vld [vmem:[%s347 + $0x8a8] sm:$0xff]
        %v1322 = vld [vmem:[%s347 + $0x8b0] sm:$0xff]
        %v1323 = vld [vmem:[%s347 + $0x8b8] sm:$0xff]
        %v1324 = vld [vmem:[%s347 + $0x8c0] sm:$0xff]
        %v1325 = vld [vmem:[%s347 + $0x8c8] sm:$0xff]
        %v1326 = vld [vmem:[%s347 + $0x8d0] sm:$0xff]
        %v1327 = vld [vmem:[%s347 + $0x8d8] sm:$0xff]
        %v1328 = vld [vmem:[%s347 + $0x8e0] sm:$0xff]
        %v1329 = vld [vmem:[%s347 + $0x8e8] sm:$0xff]
        %v1330 = vld [vmem:[%s347 + $0x8f0] sm:$0xff]
        %v1331 = vld [vmem:[%s347 + $0x8f8] sm:$0xff]
        %v1332 = vld [vmem:[%s347 + $0x900] sm:$0xff]
        %v1333 = vld [vmem:[%s347 + $0x908] sm:$0xff]
        %v1334 = vld [vmem:[%s347 + $0x910] sm:$0xff]
        %v1335 = vld [vmem:[%s347 + $0x918] sm:$0xff]
        %v1336 = vld [vmem:[%s347 + $0x920] sm:$0xff]
        %v1337 = vld [vmem:[%s347 + $0x928] sm:$0xff]
        %v1338 = vld [vmem:[%s347 + $0x930] sm:$0xff]
        %v1339 = vld [vmem:[%s347 + $0x938] sm:$0xff]
        %v1340 = vld [vmem:[%s347 + $0x940] sm:$0xff]
        %v1341 = vld [vmem:[%s347 + $0x948] sm:$0xff]
        %v1342 = vld [vmem:[%s347 + $0x950] sm:$0xff]
        %v1343 = vld [vmem:[%s347 + $0x958] sm:$0xff]
        %v1344 = vld [vmem:[%s347 + $0x960] sm:$0xff]
        %v1345 = vld [vmem:[%s347 + $0x968] sm:$0xff]
        %v1346 = vld [vmem:[%s347 + $0x970] sm:$0xff]
        %v1347 = vld [vmem:[%s347 + $0x978] sm:$0xff]
        %v1348 = vld [vmem:[%s347 + $0x980] sm:$0xff]
        %v1349 = vld [vmem:[%s347 + $0x988] sm:$0xff]
        %v1350 = vld [vmem:[%s347 + $0x990] sm:$0xff]
        %v1351 = vld [vmem:[%s347 + $0x998] sm:$0xff]
        %v1352 = vld [vmem:[%s347 + $0x9a0] sm:$0xff]
        %v1353 = vld [vmem:[%s347 + $0x9a8] sm:$0xff]
        %v1354 = vld [vmem:[%s347 + $0x9b0] sm:$0xff]
        %v1355 = vld [vmem:[%s347 + $0x9b8] sm:$0xff]
        %v1356 = vld [vmem:[%s347 + $0x9c0] sm:$0xff]
        %v1357 = vld [vmem:[%s347 + $0x9c8] sm:$0xff]
        %v1358 = vld [vmem:[%s347 + $0x9d0] sm:$0xff]
        %v1359 = vld [vmem:[%s347 + $0x9d8] sm:$0xff]
        %v1360 = vld [vmem:[%s347 + $0x9e0] sm:$0xff]
        %v1361 = vld [vmem:[%s347 + $0x9e8] sm:$0xff]
        %v1362 = vld [vmem:[%s347 + $0x9f0] sm:$0xff]
        %v1363 = vld [vmem:[%s347 + $0x9f8] sm:$0xff]
        %v1364 = vld [vmem:[%s347 + $0xa00] sm:$0xff]
        %v1365 = vld [vmem:[%s347 + $0xa08] sm:$0xff]
        %v1366 = vld [vmem:[%s347 + $0xa10] sm:$0xff]
        %v1367 = vld [vmem:[%s347 + $0xa18] sm:$0xff]
        %v1368 = vld [vmem:[%s347 + $0xa20] sm:$0xff]
        %v1369 = vld [vmem:[%s347 + $0xa28] sm:$0xff]
        %v1370 = vld [vmem:[%s347 + $0xa30] sm:$0xff]
        %v1371 = vld [vmem:[%s347 + $0xa38] sm:$0xff]
        %v1372 = vld [vmem:[%s347 + $0xa40] sm:$0xff]
        %v1373 = vld [vmem:[%s347 + $0xa48] sm:$0xff]
        %v1374 = vld [vmem:[%s347 + $0xa50] sm:$0xff]
        %v1375 = vld [vmem:[%s347 + $0xa58] sm:$0xff]
        %v1376 = vld [vmem:[%s347 + $0xa60] sm:$0xff]
        %v1377 = vld [vmem:[%s347 + $0xa68] sm:$0xff]
        %v1378 = vld [vmem:[%s347 + $0xa70] sm:$0xff]
        %v1379 = vld [vmem:[%s347 + $0xa78] sm:$0xff]
        %v1380 = vld [vmem:[%s347 + $0xa80] sm:$0xff]
        %v1381 = vld [vmem:[%s347 + $0xa88] sm:$0xff]
        %v1382 = vld [vmem:[%s347 + $0xa90] sm:$0xff]
        %v1383 = vld [vmem:[%s347 + $0xa98] sm:$0xff]
        %v1384 = vld [vmem:[%s347 + $0xaa0] sm:$0xff]
        %v1385 = vld [vmem:[%s347 + $0xaa8] sm:$0xff]
        %v1386 = vld [vmem:[%s347 + $0xab0] sm:$0xff]
        %v1387 = vld [vmem:[%s347 + $0xab8] sm:$0xff]
        %v1388 = vld [vmem:[%s347 + $0xac0] sm:$0xff]
        %v1389 = vld [vmem:[%s347 + $0xac8] sm:$0xff]
        %v1390 = vld [vmem:[%s347 + $0xad0] sm:$0xff]
        %v1391 = vld [vmem:[%s347 + $0xad8] sm:$0xff]
        %v1392 = vld [vmem:[%s347 + $0xae0] sm:$0xff]
        %v1393 = vld [vmem:[%s347 + $0xae8] sm:$0xff]
        %v1394 = vld [vmem:[%s347 + $0xaf0] sm:$0xff]
        %v1395 = vld [vmem:[%s347 + $0xaf8] sm:$0xff]
        %v1396 = vld [vmem:[%s347 + $0xb00] sm:$0xff]
        %v1397 = vld [vmem:[%s347 + $0xb08] sm:$0xff]
        %v1398 = vld [vmem:[%s347 + $0xb10] sm:$0xff]
        %v1399 = vld [vmem:[%s347 + $0xb18] sm:$0xff]
        %v1400 = vld [vmem:[%s347 + $0xb20] sm:$0xff]
        %v1401 = vld [vmem:[%s347 + $0xb28] sm:$0xff]
        %v1402 = vld [vmem:[%s347 + $0xb30] sm:$0xff]
        %v1403 = vld [vmem:[%s347 + $0xb38] sm:$0xff]
        %v1404 = vld [vmem:[%s347 + $0xb40] sm:$0xff]
        %v1405 = vld [vmem:[%s347 + $0xb48] sm:$0xff]
        %v1406 = vld [vmem:[%s347 + $0xb50] sm:$0xff]
        %v1407 = vld [vmem:[%s347 + $0xb58] sm:$0xff]
        %v1408 = vld [vmem:[%s347 + $0xb60] sm:$0xff]
        %v1409 = vld [vmem:[%s347 + $0xb68] sm:$0xff]
        %v1410 = vld [vmem:[%s347 + $0xb70] sm:$0xff]
        %v1411 = vld [vmem:[%s347 + $0xb78] sm:$0xff]
        %v1412 = vld [vmem:[%s347 + $0xb80] sm:$0xff]
        %v1413 = vld [vmem:[%s347 + $0xb88] sm:$0xff]
        %v1414 = vld [vmem:[%s347 + $0xb90] sm:$0xff]
        %v1415 = vld [vmem:[%s347 + $0xb98] sm:$0xff]
        %v1416 = vld [vmem:[%s347 + $0xba0] sm:$0xff]
        %v1417 = vld [vmem:[%s347 + $0xba8] sm:$0xff]
        %v1418 = vld [vmem:[%s347 + $0xbb0] sm:$0xff]
        %v1419 = vld [vmem:[%s347 + $0xbb8] sm:$0xff]
        %v1420 = vld [vmem:[%s347 + $0xbc0] sm:$0xff]
        %v1421 = vld [vmem:[%s347 + $0xbc8] sm:$0xff]
        %v1422 = vld [vmem:[%s347 + $0xbd0] sm:$0xff]
        %v1423 = vld [vmem:[%s347 + $0xbd8] sm:$0xff]
        %v1424 = vld [vmem:[%s347 + $0xbe0] sm:$0xff]
        %v1425 = vld [vmem:[%s347 + $0xbe8] sm:$0xff]
        %v1426 = vld [vmem:[%s347 + $0xbf0] sm:$0xff]
        %v1427 = vld [vmem:[%s347 + $0xbf8] sm:$0xff]
        %v1428 = vld [vmem:[%s347 + $0xc00] sm:$0xff]
        %v1429 = vld [vmem:[%s347 + $0xc08] sm:$0xff]
        %v1430 = vld [vmem:[%s347 + $0xc10] sm:$0xff]
        %v1431 = vld [vmem:[%s347 + $0xc18] sm:$0xff]
        %v1432 = vld [vmem:[%s347 + $0xc20] sm:$0xff]
        %v1433 = vld [vmem:[%s347 + $0xc28] sm:$0xff]
        %v1434 = vld [vmem:[%s347 + $0xc30] sm:$0xff]
        %v1435 = vld [vmem:[%s347 + $0xc38] sm:$0xff]
        %v1436 = vld [vmem:[%s347 + $0xc40] sm:$0xff]
        %v1437 = vld [vmem:[%s347 + $0xc48] sm:$0xff]
        %v1438 = vld [vmem:[%s347 + $0xc50] sm:$0xff]
        %v1439 = vld [vmem:[%s347 + $0xc58] sm:$0xff]
        %v1440 = vld [vmem:[%s347 + $0xc60] sm:$0xff]
        %v1441 = vld [vmem:[%s347 + $0xc68] sm:$0xff]
        %v1442 = vld [vmem:[%s347 + $0xc70] sm:$0xff]
        %v1443 = vld [vmem:[%s347 + $0xc78] sm:$0xff]
        %v1444 = vld [vmem:[%s347 + $0xc80] sm:$0xff]
        %v1445 = vld [vmem:[%s347 + $0xc88] sm:$0xff]
        %v1446 = vld [vmem:[%s347 + $0xc90] sm:$0xff]
        %v1447 = vld [vmem:[%s347 + $0xc98] sm:$0xff]
        %v1448 = vld [vmem:[%s347 + $0xca0] sm:$0xff]
        %v1449 = vld [vmem:[%s347 + $0xca8] sm:$0xff]
        %v1450 = vld [vmem:[%s347 + $0xcb0] sm:$0xff]
        %v1451 = vld [vmem:[%s347 + $0xcb8] sm:$0xff]
        %v1452 = vld [vmem:[%s347 + $0xcc0] sm:$0xff]
        %v1453 = vld [vmem:[%s347 + $0xcc8] sm:$0xff]
        %v1454 = vld [vmem:[%s347 + $0xcd0] sm:$0xff]
        %v1455 = vld [vmem:[%s347 + $0xcd8] sm:$0xff]
        %v1456 = vld [vmem:[%s347 + $0xce0] sm:$0xff]
        %v1457 = vld [vmem:[%s347 + $0xce8] sm:$0xff]
        %v1458 = vld [vmem:[%s347 + $0xcf0] sm:$0xff]
        %v1459 = vld [vmem:[%s347 + $0xcf8] sm:$0xff]
        %v1460 = vld [vmem:[%s347 + $0xd00] sm:$0xff]
        %v1461 = vld [vmem:[%s347 + $0xd08] sm:$0xff]
        %v1462 = vld [vmem:[%s347 + $0xd10] sm:$0xff]
        %v1463 = vld [vmem:[%s347 + $0xd18] sm:$0xff]
        %v1464 = vld [vmem:[%s347 + $0xd20] sm:$0xff]
        %v1465 = vld [vmem:[%s347 + $0xd28] sm:$0xff]
        %v1466 = vld [vmem:[%s347 + $0xd30] sm:$0xff]
        %v1467 = vld [vmem:[%s347 + $0xd38] sm:$0xff]
        %v1468 = vld [vmem:[%s347 + $0xd40] sm:$0xff]
        %v1469 = vld [vmem:[%s347 + $0xd48] sm:$0xff]
        %v1470 = vld [vmem:[%s347 + $0xd50] sm:$0xff]
        %v1471 = vld [vmem:[%s347 + $0xd58] sm:$0xff]
        %v1472 = vld [vmem:[%s347 + $0xd60] sm:$0xff]
        %v1473 = vld [vmem:[%s347 + $0xd68] sm:$0xff]
        %v1474 = vld [vmem:[%s347 + $0xd70] sm:$0xff]
        %v1475 = vld [vmem:[%s347 + $0xd78] sm:$0xff]
        %v1476 = vld [vmem:[%s347 + $0xd80] sm:$0xff]
        %v1477 = vld [vmem:[%s347 + $0xd88] sm:$0xff]
        %v1478 = vld [vmem:[%s347 + $0xd90] sm:$0xff]
        %v1479 = vld [vmem:[%s347 + $0xd98] sm:$0xff]
        %v1480 = vld [vmem:[%s347 + $0xda0] sm:$0xff]
        %v1481 = vld [vmem:[%s347 + $0xda8] sm:$0xff]
        %v1482 = vld [vmem:[%s347 + $0xdb0] sm:$0xff]
        %v1483 = vld [vmem:[%s347 + $0xdb8] sm:$0xff]
        %v1484 = vld [vmem:[%s347 + $0xdc0] sm:$0xff]
        %v1485 = vld [vmem:[%s347 + $0xdc8] sm:$0xff]
        %v1486 = vld [vmem:[%s347 + $0xdd0] sm:$0xff]
        %v1487 = vld [vmem:[%s347 + $0xdd8] sm:$0xff]
        %v1488 = vld [vmem:[%s347 + $0xde0] sm:$0xff]
        %v1489 = vld [vmem:[%s347 + $0xde8] sm:$0xff]
        %v1490 = vld [vmem:[%s347 + $0xdf0] sm:$0xff]
        %v1491 = vld [vmem:[%s347 + $0xdf8] sm:$0xff]
        %v1492 = vld [vmem:[%s347 + $0xe00] sm:$0xff]
        %v1493 = vld [vmem:[%s347 + $0xe08] sm:$0xff]
        %v1494 = vld [vmem:[%s347 + $0xe10] sm:$0xff]
        %v1495 = vld [vmem:[%s347 + $0xe18] sm:$0xff]
        %v1496 = vld [vmem:[%s347 + $0xe20] sm:$0xff]
        %v1497 = vld [vmem:[%s347 + $0xe28] sm:$0xff]
        %v1498 = vld [vmem:[%s347 + $0xe30] sm:$0xff]
        %v1499 = vld [vmem:[%s347 + $0xe38] sm:$0xff]
        %v1500 = vld [vmem:[%s347 + $0xe40] sm:$0xff]
        %v1501 = vld [vmem:[%s347 + $0xe48] sm:$0xff]
        %v1502 = vld [vmem:[%s347 + $0xe50] sm:$0xff]
        %v1503 = vld [vmem:[%s347 + $0xe58] sm:$0xff]
        %v1504 = vld [vmem:[%s347 + $0xe60] sm:$0xff]
        %v1505 = vld [vmem:[%s347 + $0xe68] sm:$0xff]
        %v1506 = vld [vmem:[%s347 + $0xe70] sm:$0xff]
        %v1507 = vld [vmem:[%s347 + $0xe78] sm:$0xff]
        %v1508 = vld [vmem:[%s347 + $0xe80] sm:$0xff]
        %v1509 = vld [vmem:[%s347 + $0xe88] sm:$0xff]
        %v1510 = vld [vmem:[%s347 + $0xe90] sm:$0xff]
        %v1511 = vld [vmem:[%s347 + $0xe98] sm:$0xff]
        %v1512 = vld [vmem:[%s347 + $0xea0] sm:$0xff]
        %v1513 = vld [vmem:[%s347 + $0xea8] sm:$0xff]
        %v1514 = vld [vmem:[%s347 + $0xeb0] sm:$0xff]
        %v1515 = vld [vmem:[%s347 + $0xeb8] sm:$0xff]
        %v1516 = vld [vmem:[%s347 + $0xec0] sm:$0xff]
        %v1517 = vld [vmem:[%s347 + $0xec8] sm:$0xff]
        %v1518 = vld [vmem:[%s347 + $0xed0] sm:$0xff]
        %v1519 = vld [vmem:[%s347 + $0xed8] sm:$0xff]
        %v1520 = vld [vmem:[%s347 + $0xee0] sm:$0xff]
        %v1521 = vld [vmem:[%s347 + $0xee8] sm:$0xff]
        %v1522 = vld [vmem:[%s347 + $0xef0] sm:$0xff]
        %v1523 = vld [vmem:[%s347 + $0xef8] sm:$0xff]
        %v1524 = vld [vmem:[%s347 + $0xf00] sm:$0xff]
        %v1525 = vld [vmem:[%s347 + $0xf08] sm:$0xff]
        %v1526 = vld [vmem:[%s347 + $0xf10] sm:$0xff]
        %v1527 = vld [vmem:[%s347 + $0xf18] sm:$0xff]
        %v1528 = vld [vmem:[%s347 + $0xf20] sm:$0xff]
        %v1529 = vld [vmem:[%s347 + $0xf28] sm:$0xff]
        %v1530 = vld [vmem:[%s347 + $0xf30] sm:$0xff]
        %v1531 = vld [vmem:[%s347 + $0xf38] sm:$0xff]
        %v1532 = vld [vmem:[%s347 + $0xf40] sm:$0xff]
        %v1533 = vld [vmem:[%s347 + $0xf48] sm:$0xff]
        %v1534 = vld [vmem:[%s347 + $0xf50] sm:$0xff]
        %v1535 = vld [vmem:[%s347 + $0xf58] sm:$0xff]
        %v1536 = vld [vmem:[%s347 + $0xf60] sm:$0xff]
        %v1537 = vld [vmem:[%s347 + $0xf68] sm:$0xff]
        %v1538 = vld [vmem:[%s347 + $0xf70] sm:$0xff]
        %v1539 = vld [vmem:[%s347 + $0xf78] sm:$0xff]
        %v1540 = vld [vmem:[%s347 + $0xf80] sm:$0xff]
        %v1541 = vld [vmem:[%s347 + $0xf88] sm:$0xff]
        %v1542 = vld [vmem:[%s347 + $0xf90] sm:$0xff]
        %v1543 = vld [vmem:[%s347 + $0xf98] sm:$0xff]
        %v1544 = vld [vmem:[%s347 + $0xfa0] sm:$0xff]
        %v1545 = vld [vmem:[%s347 + $0xfa8] sm:$0xff]
        %v1546 = vld [vmem:[%s347 + $0xfb0] sm:$0xff]
        %v1547 = vld [vmem:[%s347 + $0xfb8] sm:$0xff]
        %v1548 = vld [vmem:[%s347 + $0xfc0] sm:$0xff]
        %v1549 = vld [vmem:[%s347 + $0xfc8] sm:$0xff]
        %v1550 = vld [vmem:[%s347 + $0xfd0] sm:$0xff]
        %v1551 = vld [vmem:[%s347 + $0xfd8] sm:$0xff]
        %v1552 = vld [vmem:[%s347 + $0xfe0] sm:$0xff]
        %v1553 = vld [vmem:[%s347 + $0xfe8] sm:$0xff]
        %v1554 = vld [vmem:[%s347 + $0xff0] sm:$0xff]
        %v1555 = vld [vmem:[%s347 + $0xff8] sm:$0xff]
        %v1556 = vld [vmem:[%s347 + $0x1000] sm:$0xff]
        %v1557 = vld [vmem:[%s347 + $0x1008] sm:$0xff]
        %v1558 = vld [vmem:[%s347 + $0x1010] sm:$0xff]
        %v1559 = vld [vmem:[%s347 + $0x1018] sm:$0xff]
        %v1560 = vld [vmem:[%s347 + $0x1020] sm:$0xff]
        %v1561 = vld [vmem:[%s347 + $0x1028] sm:$0xff]
        %v1562 = vld [vmem:[%s347 + $0x1030] sm:$0xff]
        %v1563 = vld [vmem:[%s347 + $0x1038] sm:$0xff]
        %v1564 = vld [vmem:[%s347 + $0x1040] sm:$0xff]
        %v1565 = vld [vmem:[%s347 + $0x1048] sm:$0xff]
        %v1566 = vld [vmem:[%s347 + $0x1050] sm:$0xff]
        %v1567 = vld [vmem:[%s347 + $0x1058] sm:$0xff]
        %v1568 = vld [vmem:[%s347 + $0x1060] sm:$0xff]
        %v1569 = vld [vmem:[%s347 + $0x1068] sm:$0xff]
        %v1570 = vld [vmem:[%s347 + $0x1070] sm:$0xff]
        %v1571 = vld [vmem:[%s347 + $0x1078] sm:$0xff]
        %v1572 = vld [vmem:[%s347 + $0x1080] sm:$0xff]
        %v1573 = vld [vmem:[%s347 + $0x1088] sm:$0xff]
        %v1574 = vld [vmem:[%s347 + $0x1090] sm:$0xff]
        %v1575 = vld [vmem:[%s347 + $0x1098] sm:$0xff]
        %v1576 = vld [vmem:[%s347 + $0x10a0] sm:$0xff]
        %v1577 = vld [vmem:[%s347 + $0x10a8] sm:$0xff]
        %v1578 = vld [vmem:[%s347 + $0x10b0] sm:$0xff]
        %v1579 = vld [vmem:[%s347 + $0x10b8] sm:$0xff]
        %v1580 = vld [vmem:[%s347 + $0x10c0] sm:$0xff]
        %v1581 = vld [vmem:[%s347 + $0x10c8] sm:$0xff]
        %v1582 = vld [vmem:[%s347 + $0x10d0] sm:$0xff]
        %v1583 = vld [vmem:[%s347 + $0x10d8] sm:$0xff]
        %v1584 = vld [vmem:[%s347 + $0x10e0] sm:$0xff]
        %v1585 = vld [vmem:[%s347 + $0x10e8] sm:$0xff]
        %v1586 = vld [vmem:[%s347 + $0x10f0] sm:$0xff]
        %v1587 = vld [vmem:[%s347 + $0x10f8] sm:$0xff]
        %v1588 = vld [vmem:[%s347 + $0x1100] sm:$0xff]
        %v1589 = vld [vmem:[%s347 + $0x1108] sm:$0xff]
        %v1590 = vld [vmem:[%s347 + $0x1110] sm:$0xff]
        %v1591 = vld [vmem:[%s347 + $0x1118] sm:$0xff]
        %v1592 = vld [vmem:[%s347 + $0x1120] sm:$0xff]
        %v1593 = vld [vmem:[%s347 + $0x1128] sm:$0xff]
        %v1594 = vld [vmem:[%s347 + $0x1130] sm:$0xff]
        %v1595 = vld [vmem:[%s347 + $0x1138] sm:$0xff]
        %v1596 = vld [vmem:[%s347 + $0x1140] sm:$0xff]
        %v1597 = vld [vmem:[%s347 + $0x1148] sm:$0xff]
        %v1598 = vld [vmem:[%s347 + $0x1150] sm:$0xff]
        %v1599 = vld [vmem:[%s347 + $0x1158] sm:$0xff]
        %v1600 = vld [vmem:[%s347 + $0x1160] sm:$0xff]
        %v1601 = vld [vmem:[%s347 + $0x1168] sm:$0xff]
        %v1602 = vld [vmem:[%s347 + $0x1170] sm:$0xff]
        %v1603 = vld [vmem:[%s347 + $0x1178] sm:$0xff]
        %v1604 = vld [vmem:[%s347 + $0x1180] sm:$0xff]
        %v1605 = vld [vmem:[%s347 + $0x1188] sm:$0xff]
        %v1606 = vld [vmem:[%s347 + $0x1190] sm:$0xff]
        %v1607 = vld [vmem:[%s347 + $0x1198] sm:$0xff]
        %v1608 = vld [vmem:[%s347 + $0x11a0] sm:$0xff]
        %v1609 = vld [vmem:[%s347 + $0x11a8] sm:$0xff]
        %v1610 = vld [vmem:[%s347 + $0x11b0] sm:$0xff]
        %v1611 = vld [vmem:[%s347 + $0x11b8] sm:$0xff]
        %v1612 = vld [vmem:[%s347 + $0x11c0] sm:$0xff]
        %v1613 = vld [vmem:[%s347 + $0x11c8] sm:$0xff]
        %v1614 = vld [vmem:[%s347 + $0x11d0] sm:$0xff]
        %v1615 = vld [vmem:[%s347 + $0x11d8] sm:$0xff]
        %v1616 = vld [vmem:[%s347 + $0x11e0] sm:$0xff]
        %v1617 = vld [vmem:[%s347 + $0x11e8] sm:$0xff]
        %v1618 = vld [vmem:[%s347 + $0x11f0] sm:$0xff]
        %v1619 = vld [vmem:[%s347 + $0x11f8] sm:$0xff]
        %v1620 = vld [vmem:[%s347 + $0x1200] sm:$0xff]
        %v1621 = vld [vmem:[%s347 + $0x1208] sm:$0xff]
        %v1622 = vld [vmem:[%s347 + $0x1210] sm:$0xff]
        %v1623 = vld [vmem:[%s347 + $0x1218] sm:$0xff]
        %v1624 = vld [vmem:[%s347 + $0x1220] sm:$0xff]
        %v1625 = vld [vmem:[%s347 + $0x1228] sm:$0xff]
        %v1626 = vld [vmem:[%s347 + $0x1230] sm:$0xff]
        %v1627 = vld [vmem:[%s347 + $0x1238] sm:$0xff]
        %v1628 = vld [vmem:[%s347 + $0x1240] sm:$0xff]
        %v1629 = vld [vmem:[%s347 + $0x1248] sm:$0xff]
        %v1630 = vld [vmem:[%s347 + $0x1250] sm:$0xff]
        %v1631 = vld [vmem:[%s347 + $0x1258] sm:$0xff]
        %v1632 = vld [vmem:[%s347 + $0x1260] sm:$0xff]
        %v1633 = vld [vmem:[%s347 + $0x1268] sm:$0xff]
        %v1634 = vld [vmem:[%s347 + $0x1270] sm:$0xff]
        %v1635 = vld [vmem:[%s347 + $0x1278] sm:$0xff]
        %v1636 = vld [vmem:[%s347 + $0x1280] sm:$0xff]
        %v1637 = vld [vmem:[%s347 + $0x1288] sm:$0xff]
        %v1638 = vld [vmem:[%s347 + $0x1290] sm:$0xff]
        %v1639 = vld [vmem:[%s347 + $0x1298] sm:$0xff]
        %v1640 = vld [vmem:[%s347 + $0x12a0] sm:$0xff]
        %v1641 = vld [vmem:[%s347 + $0x12a8] sm:$0xff]
        %v1642 = vld [vmem:[%s347 + $0x12b0] sm:$0xff]
        %v1643 = vld [vmem:[%s347 + $0x12b8] sm:$0xff]
        %v1644 = vld [vmem:[%s347 + $0x12c0] sm:$0xff]
        %v1645 = vld [vmem:[%s347 + $0x12c8] sm:$0xff]
        %v1646 = vld [vmem:[%s347 + $0x12d0] sm:$0xff]
        %v1647 = vld [vmem:[%s347 + $0x12d8] sm:$0xff]
        %v1648 = vld [vmem:[%s347 + $0x12e0] sm:$0xff]
        %v1649 = vld [vmem:[%s347 + $0x12e8] sm:$0xff]
        %v1650 = vld [vmem:[%s347 + $0x12f0] sm:$0xff]
        %v1651 = vld [vmem:[%s347 + $0x12f8] sm:$0xff]
        %v1652 = vld [vmem:[%s347 + $0x1300] sm:$0xff]
        %v1653 = vld [vmem:[%s347 + $0x1308] sm:$0xff]
        %v1654 = vld [vmem:[%s347 + $0x1310] sm:$0xff]
        %v1655 = vld [vmem:[%s347 + $0x1318] sm:$0xff]
        %v1656 = vld [vmem:[%s347 + $0x1320] sm:$0xff]
        %v1657 = vld [vmem:[%s347 + $0x1328] sm:$0xff]
        %v1658 = vld [vmem:[%s347 + $0x1330] sm:$0xff]
        %v1659 = vld [vmem:[%s347 + $0x1338] sm:$0xff]
        %v1660 = vld [vmem:[%s347 + $0x1340] sm:$0xff]
        %v1661 = vld [vmem:[%s347 + $0x1348] sm:$0xff]
        %v1662 = vld [vmem:[%s347 + $0x1350] sm:$0xff]
        %v1663 = vld [vmem:[%s347 + $0x1358] sm:$0xff]
        %v1664 = vld [vmem:[%s347 + $0x1360] sm:$0xff]
        %v1665 = vld [vmem:[%s347 + $0x1368] sm:$0xff]
        %v1666 = vld [vmem:[%s347 + $0x1370] sm:$0xff]
        %v1667 = vld [vmem:[%s347 + $0x1378] sm:$0xff]
        %v1668 = vld [vmem:[%s347 + $0x1380] sm:$0xff]
        %v1669 = vld [vmem:[%s347 + $0x1388] sm:$0xff]
        %v1670 = vld [vmem:[%s347 + $0x1390] sm:$0xff]
        %v1671 = vld [vmem:[%s347 + $0x1398] sm:$0xff]
        %v1672 = vld [vmem:[%s347 + $0x13a0] sm:$0xff]
        %v1673 = vld [vmem:[%s347 + $0x13a8] sm:$0xff]
        %v1674 = vld [vmem:[%s347 + $0x13b0] sm:$0xff]
        %v1675 = vld [vmem:[%s347 + $0x13b8] sm:$0xff]
        %v1676 = vld [vmem:[%s347 + $0x13c0] sm:$0xff]
        %v1677 = vld [vmem:[%s347 + $0x13c8] sm:$0xff]
        %v1678 = vld [vmem:[%s347 + $0x13d0] sm:$0xff]
        %v1679 = vld [vmem:[%s347 + $0x13d8] sm:$0xff]
        %v1680 = vld [vmem:[%s347 + $0x13e0] sm:$0xff]
        %v1681 = vld [vmem:[%s347 + $0x13e8] sm:$0xff]
        %v1682 = vld [vmem:[%s347 + $0x13f0] sm:$0xff]
        %v1683 = vld [vmem:[%s347 + $0x13f8] sm:$0xff]
        %v1684 = vld [vmem:[%s347 + $0x1400] sm:$0xff]
        %v1685 = vld [vmem:[%s347 + $0x1408] sm:$0xff]
        %v1686 = vld [vmem:[%s347 + $0x1410] sm:$0xff]
        %v1687 = vld [vmem:[%s347 + $0x1418] sm:$0xff]
        %v1688 = vld [vmem:[%s347 + $0x1420] sm:$0xff]
        %v1689 = vld [vmem:[%s347 + $0x1428] sm:$0xff]
        %v1690 = vld [vmem:[%s347 + $0x1430] sm:$0xff]
        %v1691 = vld [vmem:[%s347 + $0x1438] sm:$0xff]
        %v1692 = vld [vmem:[%s347 + $0x1440] sm:$0xff]
        %v1693 = vld [vmem:[%s347 + $0x1448] sm:$0xff]
        %v1694 = vld [vmem:[%s347 + $0x1450] sm:$0xff]
        %v1695 = vld [vmem:[%s347 + $0x1458] sm:$0xff]
        %v1696 = vld [vmem:[%s347 + $0x1460] sm:$0xff]
        %v1697 = vld [vmem:[%s347 + $0x1468] sm:$0xff]
        %v1698 = vld [vmem:[%s347 + $0x1470] sm:$0xff]
        %v1699 = vld [vmem:[%s347 + $0x1478] sm:$0xff]
        %v1700 = vld [vmem:[%s347 + $0x1480] sm:$0xff]
        %v1701 = vld [vmem:[%s347 + $0x1488] sm:$0xff]
        %v1702 = vld [vmem:[%s347 + $0x1490] sm:$0xff]
        %v1703 = vld [vmem:[%s347 + $0x1498] sm:$0xff]
        %v1704 = vld [vmem:[%s347 + $0x14a0] sm:$0xff]
        %v1705 = vld [vmem:[%s347 + $0x14a8] sm:$0xff]
        %v1706 = vld [vmem:[%s347 + $0x14b0] sm:$0xff]
        %v1707 = vld [vmem:[%s347 + $0x14b8] sm:$0xff]
        %v1708 = vld [vmem:[%s347 + $0x14c0] sm:$0xff]
        %v1709 = vld [vmem:[%s347 + $0x14c8] sm:$0xff]
        %v1710 = vld [vmem:[%s347 + $0x14d0] sm:$0xff]
        %v1711 = vld [vmem:[%s347 + $0x14d8] sm:$0xff]
        %v1712 = vld [vmem:[%s347 + $0x14e0] sm:$0xff]
        %v1713 = vld [vmem:[%s347 + $0x14e8] sm:$0xff]
        %v1714 = vld [vmem:[%s347 + $0x14f0] sm:$0xff]
        %v1715 = vld [vmem:[%s347 + $0x14f8] sm:$0xff]
        %v1716 = vld [vmem:[%s347 + $0x1500] sm:$0xff]
        %v1717 = vld [vmem:[%s347 + $0x1508] sm:$0xff]
        %v1718 = vld [vmem:[%s347 + $0x1510] sm:$0xff]
        %v1719 = vld [vmem:[%s347 + $0x1518] sm:$0xff]
        %v1720 = vld [vmem:[%s347 + $0x1520] sm:$0xff]
        %v1721 = vld [vmem:[%s347 + $0x1528] sm:$0xff]
        %v1722 = vld [vmem:[%s347 + $0x1530] sm:$0xff]
        %v1723 = vld [vmem:[%s347 + $0x1538] sm:$0xff]
        %v1724 = vld [vmem:[%s347 + $0x1540] sm:$0xff]
        %v1725 = vld [vmem:[%s347 + $0x1548] sm:$0xff]
        %v1726 = vld [vmem:[%s347 + $0x1550] sm:$0xff]
        %v1727 = vld [vmem:[%s347 + $0x1558] sm:$0xff]
        %v1728 = vld [vmem:[%s347 + $0x1560] sm:$0xff]
        %v1729 = vld [vmem:[%s347 + $0x1568] sm:$0xff]
        %v1730 = vld [vmem:[%s347 + $0x1570] sm:$0xff]
        %v1731 = vld [vmem:[%s347 + $0x1578] sm:$0xff]
        %v1732 = vld [vmem:[%s347 + $0x1580] sm:$0xff]
        %v1733 = vld [vmem:[%s347 + $0x1588] sm:$0xff]
        %v1734 = vld [vmem:[%s347 + $0x1590] sm:$0xff]
        %v1735 = vld [vmem:[%s347 + $0x1598] sm:$0xff]
        %v1736 = vld [vmem:[%s347 + $0x15a0] sm:$0xff]
        %v1737 = vld [vmem:[%s347 + $0x15a8] sm:$0xff]
        %v1738 = vld [vmem:[%s347 + $0x15b0] sm:$0xff]
        %v1739 = vld [vmem:[%s347 + $0x15b8] sm:$0xff]
        %v1740 = vld [vmem:[%s347 + $0x15c0] sm:$0xff]
        %v1741 = vld [vmem:[%s347 + $0x15c8] sm:$0xff]
        %v1742 = vld [vmem:[%s347 + $0x15d0] sm:$0xff]
        %v1743 = vld [vmem:[%s347 + $0x15d8] sm:$0xff]
        %v1744 = vld [vmem:[%s347 + $0x15e0] sm:$0xff]
        %v1745 = vld [vmem:[%s347 + $0x15e8] sm:$0xff]
        %v1746 = vld [vmem:[%s347 + $0x15f0] sm:$0xff]
        %v1747 = vld [vmem:[%s347 + $0x15f8] sm:$0xff]
        %v1748 = vld [vmem:[%s347 + $0x1600] sm:$0xff]
        %v1749 = vld [vmem:[%s347 + $0x1608] sm:$0xff]
        %v1750 = vld [vmem:[%s347 + $0x1610] sm:$0xff]
        %v1751 = vld [vmem:[%s347 + $0x1618] sm:$0xff]
        %v1752 = vld [vmem:[%s347 + $0x1620] sm:$0xff]
        %v1753 = vld [vmem:[%s347 + $0x1628] sm:$0xff]
        %v1754 = vld [vmem:[%s347 + $0x1630] sm:$0xff]
        %v1755 = vld [vmem:[%s347 + $0x1638] sm:$0xff]
        %v1756 = vld [vmem:[%s347 + $0x1640] sm:$0xff]
        %v1757 = vld [vmem:[%s347 + $0x1648] sm:$0xff]
        %v1758 = vld [vmem:[%s347 + $0x1650] sm:$0xff]
        %v1759 = vld [vmem:[%s347 + $0x1658] sm:$0xff]
        %v1760 = vld [vmem:[%s347 + $0x1660] sm:$0xff]
        %v1761 = vld [vmem:[%s347 + $0x1668] sm:$0xff]
        %v1762 = vld [vmem:[%s347 + $0x1670] sm:$0xff]
        %v1763 = vld [vmem:[%s347 + $0x1678] sm:$0xff]
        %v1764 = vld [vmem:[%s347 + $0x1680] sm:$0xff]
        %v1765 = vld [vmem:[%s347 + $0x1688] sm:$0xff]
        %v1766 = vld [vmem:[%s347 + $0x1690] sm:$0xff]
        %v1767 = vld [vmem:[%s347 + $0x1698] sm:$0xff]
        %v1768 = vld [vmem:[%s347 + $0x16a0] sm:$0xff]
        %v1769 = vld [vmem:[%s347 + $0x16a8] sm:$0xff]
        %v1770 = vld [vmem:[%s347 + $0x16b0] sm:$0xff]
        %v1771 = vld [vmem:[%s347 + $0x16b8] sm:$0xff]
        %v1772 = vld [vmem:[%s347 + $0x16c0] sm:$0xff]
        %v1773 = vld [vmem:[%s347 + $0x16c8] sm:$0xff]
        %v1774 = vld [vmem:[%s347 + $0x16d0] sm:$0xff]
        %v1775 = vld [vmem:[%s347 + $0x16d8] sm:$0xff]
        %v1776 = vld [vmem:[%s347 + $0x16e0] sm:$0xff]
        %v1777 = vld [vmem:[%s347 + $0x16e8] sm:$0xff]
        %v1778 = vld [vmem:[%s347 + $0x16f0] sm:$0xff]
        %v1779 = vld [vmem:[%s347 + $0x16f8] sm:$0xff]
        %v1780 = vld [vmem:[%s347 + $0x1700] sm:$0xff]
        %v1781 = vld [vmem:[%s347 + $0x1708] sm:$0xff]
        %v1782 = vld [vmem:[%s347 + $0x1710] sm:$0xff]
        %v1783 = vld [vmem:[%s347 + $0x1718] sm:$0xff]
        %v1784 = vld [vmem:[%s347 + $0x1720] sm:$0xff]
        %v1785 = vld [vmem:[%s347 + $0x1728] sm:$0xff]
        %v1786 = vld [vmem:[%s347 + $0x1730] sm:$0xff]
        %v1787 = vld [vmem:[%s347 + $0x1738] sm:$0xff]
        %v1788 = vld [vmem:[%s347 + $0x1740] sm:$0xff]
        %v1789 = vld [vmem:[%s347 + $0x1748] sm:$0xff]
        %v1790 = vld [vmem:[%s347 + $0x1750] sm:$0xff]
        %v1791 = vld [vmem:[%s347 + $0x1758] sm:$0xff]
        %v1792 = vld [vmem:[%s347 + $0x1760] sm:$0xff]
        %v1793 = vld [vmem:[%s347 + $0x1768] sm:$0xff]
        %v1794 = vld [vmem:[%s347 + $0x1770] sm:$0xff]
        %v1795 = vld [vmem:[%s347 + $0x1778] sm:$0xff]
        %v1796 = vld [vmem:[%s347 + $0x1780] sm:$0xff]
        %v1797 = vld [vmem:[%s347 + $0x1788] sm:$0xff]
        %v1798 = vld [vmem:[%s347 + $0x1790] sm:$0xff]
        %v1799 = vld [vmem:[%s347 + $0x1798] sm:$0xff]
        %v1800 = vld [vmem:[%s347 + $0x17a0] sm:$0xff]
        %v1801 = vld [vmem:[%s347 + $0x17a8] sm:$0xff]
        %v1802 = vld [vmem:[%s347 + $0x17b0] sm:$0xff]
        %v1803 = vld [vmem:[%s347 + $0x17b8] sm:$0xff]
        %v1804 = vld [vmem:[%s347 + $0x17c0] sm:$0xff]
        %v1805 = vld [vmem:[%s347 + $0x17c8] sm:$0xff]
        %v1806 = vld [vmem:[%s347 + $0x17d0] sm:$0xff]
        %v1807 = vld [vmem:[%s347 + $0x17d8] sm:$0xff]
        %v1808 = vld [vmem:[%s347 + $0x17e0] sm:$0xff]
        %v1809 = vld [vmem:[%s347 + $0x17e8] sm:$0xff]
        %v1810 = vld [vmem:[%s347 + $0x17f0] sm:$0xff]
        %v1811 = vld [vmem:[%s347 + $0x17f8] sm:$0xff]
        %v1812 = vld [vmem:[%s347 + $0x1800] sm:$0xff]
        %v1813 = vld [vmem:[%s347 + $0x1808] sm:$0xff]
        %v1814 = vld [vmem:[%s347 + $0x1810] sm:$0xff]
        %v1815 = vld [vmem:[%s347 + $0x1818] sm:$0xff]
        %v1816 = vld [vmem:[%s347 + $0x1820] sm:$0xff]
        %v1817 = vld [vmem:[%s347 + $0x1828] sm:$0xff]
        %v1818 = vld [vmem:[%s347 + $0x1830] sm:$0xff]
        %v1819 = vld [vmem:[%s347 + $0x1838] sm:$0xff]
        %v1820 = vld [vmem:[%s347 + $0x1840] sm:$0xff]
        %v1821 = vld [vmem:[%s347 + $0x1848] sm:$0xff]
        %v1822 = vld [vmem:[%s347 + $0x1850] sm:$0xff]
        %v1823 = vld [vmem:[%s347 + $0x1858] sm:$0xff]
        %v1824 = vld [vmem:[%s347 + $0x1860] sm:$0xff]
        %v1825 = vld [vmem:[%s347 + $0x1868] sm:$0xff]
        %v1826 = vld [vmem:[%s347 + $0x1870] sm:$0xff]
        %v1827 = vld [vmem:[%s347 + $0x1878] sm:$0xff]
        %v1828 = vld [vmem:[%s347 + $0x1880] sm:$0xff]
        %v1829 = vld [vmem:[%s347 + $0x1888] sm:$0xff]
        %v1830 = vld [vmem:[%s347 + $0x1890] sm:$0xff]
        %v1831 = vld [vmem:[%s347 + $0x1898] sm:$0xff]
        %v1832 = vld [vmem:[%s347 + $0x18a0] sm:$0xff]
        %v1833 = vld [vmem:[%s347 + $0x18a8] sm:$0xff]
        %v1834 = vld [vmem:[%s347 + $0x18b0] sm:$0xff]
        %v1835 = vld [vmem:[%s347 + $0x18b8] sm:$0xff]
        %v1836 = vld [vmem:[%s347 + $0x18c0] sm:$0xff]
        %v1837 = vld [vmem:[%s347 + $0x18c8] sm:$0xff]
        %v1838 = vld [vmem:[%s347 + $0x18d0] sm:$0xff]
        %v1839 = vld [vmem:[%s347 + $0x18d8] sm:$0xff]
        %v1840 = vld [vmem:[%s347 + $0x18e0] sm:$0xff]
        %v1841 = vld [vmem:[%s347 + $0x18e8] sm:$0xff]
        %v1842 = vld [vmem:[%s347 + $0x18f0] sm:$0xff]
        %v1843 = vld [vmem:[%s347 + $0x18f8] sm:$0xff]
        %v1844 = vld [vmem:[%s347 + $0x1900] sm:$0xff]
        %v1845 = vld [vmem:[%s347 + $0x1908] sm:$0xff]
        %v1846 = vld [vmem:[%s347 + $0x1910] sm:$0xff]
        %v1847 = vld [vmem:[%s347 + $0x1918] sm:$0xff]
        %v1848 = vld [vmem:[%s347 + $0x1920] sm:$0xff]
        %v1849 = vld [vmem:[%s347 + $0x1928] sm:$0xff]
        %v1850 = vld [vmem:[%s347 + $0x1930] sm:$0xff]
        %v1851 = vld [vmem:[%s347 + $0x1938] sm:$0xff]
        %v1852 = vld [vmem:[%s347 + $0x1940] sm:$0xff]
        %v1853 = vld [vmem:[%s347 + $0x1948] sm:$0xff]
        %v1854 = vld [vmem:[%s347 + $0x1950] sm:$0xff]
        %v1855 = vld [vmem:[%s347 + $0x1958] sm:$0xff]
        %v1856 = vld [vmem:[%s347 + $0x1960] sm:$0xff]
        %v1857 = vld [vmem:[%s347 + $0x1968] sm:$0xff]
        %v1858 = vld [vmem:[%s347 + $0x1970] sm:$0xff]
        %v1859 = vld [vmem:[%s347 + $0x1978] sm:$0xff]
        %v1860 = vld [vmem:[%s347 + $0x1980] sm:$0xff]
        %v1861 = vld [vmem:[%s347 + $0x1988] sm:$0xff]
        %v1862 = vld [vmem:[%s347 + $0x1990] sm:$0xff]
        %v1863 = vld [vmem:[%s347 + $0x1998] sm:$0xff]
        %v1864 = vld [vmem:[%s347 + $0x19a0] sm:$0xff]
        %v1865 = vld [vmem:[%s347 + $0x19a8] sm:$0xff]
        %v1866 = vld [vmem:[%s347 + $0x19b0] sm:$0xff]
        %v1867 = vld [vmem:[%s347 + $0x19b8] sm:$0xff]
        %v1868 = vld [vmem:[%s347 + $0x19c0] sm:$0xff]
        %v1869 = vld [vmem:[%s347 + $0x19c8] sm:$0xff]
        %v1870 = vld [vmem:[%s347 + $0x19d0] sm:$0xff]
        %v1871 = vld [vmem:[%s347 + $0x19d8] sm:$0xff]
        %v1872 = vld [vmem:[%s347 + $0x19e0] sm:$0xff]
        %v1873 = vld [vmem:[%s347 + $0x19e8] sm:$0xff]
        %v1874 = vld [vmem:[%s347 + $0x19f0] sm:$0xff]
        %v1875 = vld [vmem:[%s347 + $0x19f8] sm:$0xff]
        %v1876 = vld [vmem:[%s347 + $0x1a00] sm:$0xff]
        %v1877 = vld [vmem:[%s347 + $0x1a08] sm:$0xff]
        %v1878 = vld [vmem:[%s347 + $0x1a10] sm:$0xff]
        %v1879 = vld [vmem:[%s347 + $0x1a18] sm:$0xff]
        %v1880 = vld [vmem:[%s347 + $0x1a20] sm:$0xff]
        %v1881 = vld [vmem:[%s347 + $0x1a28] sm:$0xff]
        %v1882 = vld [vmem:[%s347 + $0x1a30] sm:$0xff]
        %v1883 = vld [vmem:[%s347 + $0x1a38] sm:$0xff]
        %v1884 = vld [vmem:[%s347 + $0x1a40] sm:$0xff]
        %v1885 = vld [vmem:[%s347 + $0x1a48] sm:$0xff]
        %v1886 = vld [vmem:[%s347 + $0x1a50] sm:$0xff]
        %v1887 = vld [vmem:[%s347 + $0x1a58] sm:$0xff]
        %v1888 = vld [vmem:[%s347 + $0x1a60] sm:$0xff]
        %v1889 = vld [vmem:[%s347 + $0x1a68] sm:$0xff]
        %v1890 = vld [vmem:[%s347 + $0x1a70] sm:$0xff]
        %v1891 = vld [vmem:[%s347 + $0x1a78] sm:$0xff]
        %v1892 = vld [vmem:[%s347 + $0x1a80] sm:$0xff]
        %v1893 = vld [vmem:[%s347 + $0x1a88] sm:$0xff]
        %v1894 = vld [vmem:[%s347 + $0x1a90] sm:$0xff]
        %v1895 = vld [vmem:[%s347 + $0x1a98] sm:$0xff]
        %v1896 = vld [vmem:[%s347 + $0x1aa0] sm:$0xff]
        %v1897 = vld [vmem:[%s347 + $0x1aa8] sm:$0xff]
        %v1898 = vld [vmem:[%s347 + $0x1ab0] sm:$0xff]
        %v1899 = vld [vmem:[%s347 + $0x1ab8] sm:$0xff]
        %v1900 = vld [vmem:[%s347 + $0x1ac0] sm:$0xff]
        %v1901 = vld [vmem:[%s347 + $0x1ac8] sm:$0xff]
        %v1902 = vld [vmem:[%s347 + $0x1ad0] sm:$0xff]
        %v1903 = vld [vmem:[%s347 + $0x1ad8] sm:$0xff]
        %v1904 = vld [vmem:[%s347 + $0x1ae0] sm:$0xff]
        %v1905 = vld [vmem:[%s347 + $0x1ae8] sm:$0xff]
        %v1906 = vld [vmem:[%s347 + $0x1af0] sm:$0xff]
        %v1907 = vld [vmem:[%s347 + $0x1af8] sm:$0xff]
        %v1908 = vld [vmem:[%s347 + $0x1b00] sm:$0xff]
        %v1909 = vld [vmem:[%s347 + $0x1b08] sm:$0xff]
        %v1910 = vld [vmem:[%s347 + $0x1b10] sm:$0xff]
        %v1911 = vld [vmem:[%s347 + $0x1b18] sm:$0xff]
        %v1912 = vld [vmem:[%s347 + $0x1b20] sm:$0xff]
        %v1913 = vld [vmem:[%s347 + $0x1b28] sm:$0xff]
        %v1914 = vld [vmem:[%s347 + $0x1b30] sm:$0xff]
        %v1915 = vld [vmem:[%s347 + $0x1b38] sm:$0xff]
        %v1916 = vld [vmem:[%s347 + $0x1b40] sm:$0xff]
        %v1917 = vld [vmem:[%s347 + $0x1b48] sm:$0xff]
        %v1918 = vld [vmem:[%s347 + $0x1b50] sm:$0xff]
        %v1919 = vld [vmem:[%s347 + $0x1b58] sm:$0xff]
        %v1920 = vld [vmem:[%s347 + $0x1b60] sm:$0xff]
        %v1921 = vld [vmem:[%s347 + $0x1b68] sm:$0xff]
        %v1922 = vld [vmem:[%s347 + $0x1b70] sm:$0xff]
        %v1923 = vld [vmem:[%s347 + $0x1b78] sm:$0xff]
        %v1924 = vld [vmem:[%s347 + $0x1b80] sm:$0xff]
        %v1925 = vld [vmem:[%s347 + $0x1b88] sm:$0xff]
        %v1926 = vld [vmem:[%s347 + $0x1b90] sm:$0xff]
        %v1927 = vld [vmem:[%s347 + $0x1b98] sm:$0xff]
        %v1928 = vld [vmem:[%s347 + $0x1ba0] sm:$0xff]
        %v1929 = vld [vmem:[%s347 + $0x1ba8] sm:$0xff]
        %v1930 = vld [vmem:[%s347 + $0x1bb0] sm:$0xff]
        %v1931 = vld [vmem:[%s347 + $0x1bb8] sm:$0xff]
        %v1932 = vld [vmem:[%s347 + $0x1bc0] sm:$0xff]
        %v1933 = vld [vmem:[%s347 + $0x1bc8] sm:$0xff]
        %v1934 = vld [vmem:[%s347 + $0x1bd0] sm:$0xff]
        %v1935 = vld [vmem:[%s347 + $0x1bd8] sm:$0xff]
        %v1936 = vld [vmem:[%s347 + $0x1be0] sm:$0xff]
        %v1937 = vld [vmem:[%s347 + $0x1be8] sm:$0xff]
        %v1938 = vld [vmem:[%s347 + $0x1bf0] sm:$0xff]
        %v1939 = vld [vmem:[%s347 + $0x1bf8] sm:$0xff]
        %v1940 = vld [vmem:[%s347 + $0x1c00] sm:$0xff]
        %v1941 = vld [vmem:[%s347 + $0x1c08] sm:$0xff]
        %v1942 = vld [vmem:[%s347 + $0x1c10] sm:$0xff]
        %v1943 = vld [vmem:[%s347 + $0x1c18] sm:$0xff]
        %v1944 = vld [vmem:[%s347 + $0x1c20] sm:$0xff]
        %v1945 = vld [vmem:[%s347 + $0x1c28] sm:$0xff]
        %v1946 = vld [vmem:[%s347 + $0x1c30] sm:$0xff]
        %v1947 = vld [vmem:[%s347 + $0x1c38] sm:$0xff]
        %v1948 = vld [vmem:[%s347 + $0x1c40] sm:$0xff]
        %v1949 = vld [vmem:[%s347 + $0x1c48] sm:$0xff]
        %v1950 = vld [vmem:[%s347 + $0x1c50] sm:$0xff]
        %v1951 = vld [vmem:[%s347 + $0x1c58] sm:$0xff]
        %v1952 = vld [vmem:[%s347 + $0x1c60] sm:$0xff]
        %v1953 = vld [vmem:[%s347 + $0x1c68] sm:$0xff]
        %v1954 = vld [vmem:[%s347 + $0x1c70] sm:$0xff]
        %v1955 = vld [vmem:[%s347 + $0x1c78] sm:$0xff]
        %v1956 = vld [vmem:[%s347 + $0x1c80] sm:$0xff]
        %v1957 = vld [vmem:[%s347 + $0x1c88] sm:$0xff]
        %v1958 = vld [vmem:[%s347 + $0x1c90] sm:$0xff]
        %v1959 = vld [vmem:[%s347 + $0x1c98] sm:$0xff]
        %v1960 = vld [vmem:[%s347 + $0x1ca0] sm:$0xff]
        %v1961 = vld [vmem:[%s347 + $0x1ca8] sm:$0xff]
        %v1962 = vld [vmem:[%s347 + $0x1cb0] sm:$0xff]
        %v1963 = vld [vmem:[%s347 + $0x1cb8] sm:$0xff]
        %v1964 = vld [vmem:[%s347 + $0x1cc0] sm:$0xff]
        %v1965 = vld [vmem:[%s347 + $0x1cc8] sm:$0xff]
        %v1966 = vld [vmem:[%s347 + $0x1cd0] sm:$0xff]
        %v1967 = vld [vmem:[%s347 + $0x1cd8] sm:$0xff]
        %v1968 = vld [vmem:[%s347 + $0x1ce0] sm:$0xff]
        %v1969 = vld [vmem:[%s347 + $0x1ce8] sm:$0xff]
        %v1970 = vld [vmem:[%s347 + $0x1cf0] sm:$0xff]
        %v1971 = vld [vmem:[%s347 + $0x1cf8] sm:$0xff]
        %v1972 = vld [vmem:[%s347 + $0x1d00] sm:$0xff]
        %v1973 = vld [vmem:[%s347 + $0x1d08] sm:$0xff]
        %v1974 = vld [vmem:[%s347 + $0x1d10] sm:$0xff]
        %v1975 = vld [vmem:[%s347 + $0x1d18] sm:$0xff]
        %v1976 = vld [vmem:[%s347 + $0x1d20] sm:$0xff]
        %v1977 = vld [vmem:[%s347 + $0x1d28] sm:$0xff]
        %v1978 = vld [vmem:[%s347 + $0x1d30] sm:$0xff]
        %v1979 = vld [vmem:[%s347 + $0x1d38] sm:$0xff]
        %v1980 = vld [vmem:[%s347 + $0x1d40] sm:$0xff]
        %v1981 = vld [vmem:[%s347 + $0x1d48] sm:$0xff]
        %v1982 = vld [vmem:[%s347 + $0x1d50] sm:$0xff]
        %v1983 = vld [vmem:[%s347 + $0x1d58] sm:$0xff]
        %v1984 = vld [vmem:[%s347 + $0x1d60] sm:$0xff]
        %v1985 = vld [vmem:[%s347 + $0x1d68] sm:$0xff]
        %v1986 = vld [vmem:[%s347 + $0x1d70] sm:$0xff]
        %v1987 = vld [vmem:[%s347 + $0x1d78] sm:$0xff]
        %v1988 = vld [vmem:[%s347 + $0x1d80] sm:$0xff]
        %v1989 = vld [vmem:[%s347 + $0x1d88] sm:$0xff]
        %v1990 = vld [vmem:[%s347 + $0x1d90] sm:$0xff]
        %v1991 = vld [vmem:[%s347 + $0x1d98] sm:$0xff]
        %v1992 = vld [vmem:[%s347 + $0x1da0] sm:$0xff]
        %v1993 = vld [vmem:[%s347 + $0x1da8] sm:$0xff]
        %v1994 = vld [vmem:[%s347 + $0x1db0] sm:$0xff]
        %v1995 = vld [vmem:[%s347 + $0x1db8] sm:$0xff]
        %v1996 = vld [vmem:[%s347 + $0x1dc0] sm:$0xff]
        %v1997 = vld [vmem:[%s347 + $0x1dc8] sm:$0xff]
        %v1998 = vld [vmem:[%s347 + $0x1dd0] sm:$0xff]
        %v1999 = vld [vmem:[%s347 + $0x1dd8] sm:$0xff]
        %v2000 = vld [vmem:[%s347 + $0x1de0] sm:$0xff]
        %v2001 = vld [vmem:[%s347 + $0x1de8] sm:$0xff]
        %v2002 = vld [vmem:[%s347 + $0x1df0] sm:$0xff]
        %v2003 = vld [vmem:[%s347 + $0x1df8] sm:$0xff]
        %v2004 = vld [vmem:[%s347 + $0x1e00] sm:$0xff]
        %v2005 = vld [vmem:[%s347 + $0x1e08] sm:$0xff]
        %v2006 = vld [vmem:[%s347 + $0x1e10] sm:$0xff]
        %v2007 = vld [vmem:[%s347 + $0x1e18] sm:$0xff]
        %v2008 = vld [vmem:[%s347 + $0x1e20] sm:$0xff]
        %v2009 = vld [vmem:[%s347 + $0x1e28] sm:$0xff]
        %v2010 = vld [vmem:[%s347 + $0x1e30] sm:$0xff]
        %v2011 = vld [vmem:[%s347 + $0x1e38] sm:$0xff]
        %v2012 = vld [vmem:[%s347 + $0x1e40] sm:$0xff]
        %v2013 = vld [vmem:[%s347 + $0x1e48] sm:$0xff]
        %v2014 = vld [vmem:[%s347 + $0x1e50] sm:$0xff]
        %v2015 = vld [vmem:[%s347 + $0x1e58] sm:$0xff]
        %v2016 = vld [vmem:[%s347 + $0x1e60] sm:$0xff]
        %v2017 = vld [vmem:[%s347 + $0x1e68] sm:$0xff]
        %v2018 = vld [vmem:[%s347 + $0x1e70] sm:$0xff]
        %v2019 = vld [vmem:[%s347 + $0x1e78] sm:$0xff]
        %v2020 = vld [vmem:[%s347 + $0x1e80] sm:$0xff]
        %v2021 = vld [vmem:[%s347 + $0x1e88] sm:$0xff]
        %v2022 = vld [vmem:[%s347 + $0x1e90] sm:$0xff]
        %v2023 = vld [vmem:[%s347 + $0x1e98] sm:$0xff]
        %v2024 = vld [vmem:[%s347 + $0x1ea0] sm:$0xff]
        %v2025 = vld [vmem:[%s347 + $0x1ea8] sm:$0xff]
        %v2026 = vld [vmem:[%s347 + $0x1eb0] sm:$0xff]
        %v2027 = vld [vmem:[%s347 + $0x1eb8] sm:$0xff]
        %v2028 = vld [vmem:[%s347 + $0x1ec0] sm:$0xff]
        %v2029 = vld [vmem:[%s347 + $0x1ec8] sm:$0xff]
        %v2030 = vld [vmem:[%s347 + $0x1ed0] sm:$0xff]
        %v2031 = vld [vmem:[%s347 + $0x1ed8] sm:$0xff]
        %v2032 = vld [vmem:[%s347 + $0x1ee0] sm:$0xff]
        %v2033 = vld [vmem:[%s347 + $0x1ee8] sm:$0xff]
        %v2034 = vld [vmem:[%s347 + $0x1ef0] sm:$0xff]
        %v2035 = vld [vmem:[%s347 + $0x1ef8] sm:$0xff]
        %v2036 = vld [vmem:[%s347 + $0x1f00] sm:$0xff]
        %v2037 = vld [vmem:[%s347 + $0x1f08] sm:$0xff]
        %v2038 = vld [vmem:[%s347 + $0x1f10] sm:$0xff]
        %v2039 = vld [vmem:[%s347 + $0x1f18] sm:$0xff]
        %v2040 = vld [vmem:[%s347 + $0x1f20] sm:$0xff]
        %v2041 = vld [vmem:[%s347 + $0x1f28] sm:$0xff]
        %v2042 = vld [vmem:[%s347 + $0x1f30] sm:$0xff]
        %v2043 = vld [vmem:[%s347 + $0x1f38] sm:$0xff]
        %v2044 = vld [vmem:[%s347 + $0x1f40] sm:$0xff]
        %v2045 = vld [vmem:[%s347 + $0x1f48] sm:$0xff]
        %v2046 = vld [vmem:[%s347 + $0x1f50] sm:$0xff]
        %v2047 = vld [vmem:[%s347 + $0x1f58] sm:$0xff]
        %v2048 = vld [vmem:[%s347 + $0x1f60] sm:$0xff]
        %v2049 = vld [vmem:[%s347 + $0x1f68] sm:$0xff]
        %v2050 = vld [vmem:[%s347 + $0x1f70] sm:$0xff]
        %v2051 = vld [vmem:[%s347 + $0x1f78] sm:$0xff]
        %v2052 = vld [vmem:[%s347 + $0x1f80] sm:$0xff]
        %v2053 = vld [vmem:[%s347 + $0x1f88] sm:$0xff]
        %v2054 = vld [vmem:[%s347 + $0x1f90] sm:$0xff]
        %v2055 = vld [vmem:[%s347 + $0x1f98] sm:$0xff]
        %v2056 = vld [vmem:[%s347 + $0x1fa0] sm:$0xff]
        %v2057 = vld [vmem:[%s347 + $0x1fa8] sm:$0xff]
        %v2058 = vld [vmem:[%s347 + $0x1fb0] sm:$0xff]
        %v2059 = vld [vmem:[%s347 + $0x1fb8] sm:$0xff]
        %v2060 = vld [vmem:[%s347 + $0x1fc0] sm:$0xff]
        %v2061 = vld [vmem:[%s347 + $0x1fc8] sm:$0xff]
        %v2062 = vld [vmem:[%s347 + $0x1fd0] sm:$0xff]
        %v2063 = vld [vmem:[%s347 + $0x1fd8] sm:$0xff]
        %v2064 = vld [vmem:[%s347 + $0x1fe0] sm:$0xff]
        %v2065 = vld [vmem:[%s347 + $0x1fe8] sm:$0xff]
        %v2066 = vld [vmem:[%s347 + $0x1ff0] sm:$0xff]
        %v2067 = vld [vmem:[%s347 + $0x1ff8] sm:$0xff]
        %2068 = vmatpush.msra.mxu0 %v1164
        %2069 = vmatpush.msra.mxu0 %v1156
        %2070 = vmatpush.msra.mxu0 %v1148
        %2071 = vmatpush.msra.mxu0 %v1140
        %2072 = vmatpush.msra.mxu0 %v1132
        %2073 = vmatpush.msra.mxu0 %v1124
        %2074 = vmatpush.msra.mxu0 %v1116
        %2075 = vmatpush.msra.mxu0 %v1108
        %2076 = vmatpush.msra.mxu0 %v1100
        %2077 = vmatpush.msra.mxu0 %v1092
        %2078 = vmatpush.msra.mxu0 %v1084
        %2079 = vmatpush.msra.mxu0 %v1076
        %2080 = vmatpush.msra.mxu0 %v1068
        %2081 = vmatpush.msra.mxu0 %v1060
        %2082 = vmatpush.msra.mxu0 %v1052
        %2083 = vmatpush.msra.mxu0 %v1044
        %2084 = vmatmul.f32.gmra.mxu0 %v1028
        %v2085 = vpop.f32.mrf.mxu0
        %v2086 = vadd.f32 0.0, %v2085
        %2087 = vdwg.mxu0
        %2088 = vmatpush.msra.mxu0 %v1292
        %2089 = vmatpush.msra.mxu0 %v1284
        %2090 = vmatpush.msra.mxu0 %v1276
        %2091 = vmatpush.msra.mxu0 %v1268
        %2092 = vmatpush.msra.mxu0 %v1260
        %2093 = vmatpush.msra.mxu0 %v1252
        %2094 = vmatpush.msra.mxu0 %v1244
        %2095 = vmatpush.msra.mxu0 %v1236
        %2096 = vmatpush.msra.mxu0 %v1228
        %2097 = vmatpush.msra.mxu0 %v1220
        %2098 = vmatpush.msra.mxu0 %v1212
        %2099 = vmatpush.msra.mxu0 %v1204
        %2100 = vmatpush.msra.mxu0 %v1196
        %2101 = vmatpush.msra.mxu0 %v1188
        %2102 = vmatpush.msra.mxu0 %v1180
        %2103 = vmatpush.msra.mxu0 %v1172
        %2104 = vmatmul.f32.gmra.mxu0 %v1029
        %v2105 = vpop.f32.mrf.mxu0
        %v2106 = vadd.f32 %v2086, %v2105
        %2107 = vdwg.mxu0
        %2108 = vmatpush.msra.mxu0 %v1420
        %2109 = vmatpush.msra.mxu0 %v1412
        %2110 = vmatpush.msra.mxu0 %v1404
        %2111 = vmatpush.msra.mxu0 %v1396
        %2112 = vmatpush.msra.mxu0 %v1388
        %2113 = vmatpush.msra.mxu0 %v1380
        %2114 = vmatpush.msra.mxu0 %v1372
        %2115 = vmatpush.msra.mxu0 %v1364
        %2116 = vmatpush.msra.mxu0 %v1356
        %2117 = vmatpush.msra.mxu0 %v1348
        %2118 = vmatpush.msra.mxu0 %v1340
        %2119 = vmatpush.msra.mxu0 %v1332
        %2120 = vmatpush.msra.mxu0 %v1324
        %2121 = vmatpush.msra.mxu0 %v1316
        %2122 = vmatpush.msra.mxu0 %v1308
        %2123 = vmatpush.msra.mxu0 %v1300
        %2124 = vmatmul.f32.gmra.mxu0 %v1030
        %v2125 = vpop.f32.mrf.mxu0
        %v2126 = vadd.f32 %v2106, %v2125
        %2127 = vdwg.mxu0
        %2128 = vmatpush.msra.mxu0 %v1548
        %2129 = vmatpush.msra.mxu0 %v1540
        %2130 = vmatpush.msra.mxu0 %v1532
        %2131 = vmatpush.msra.mxu0 %v1524
        %2132 = vmatpush.msra.mxu0 %v1516
        %2133 = vmatpush.msra.mxu0 %v1508
        %2134 = vmatpush.msra.mxu0 %v1500
        %2135 = vmatpush.msra.mxu0 %v1492
        %2136 = vmatpush.msra.mxu0 %v1484
        %2137 = vmatpush.msra.mxu0 %v1476
        %2138 = vmatpush.msra.mxu0 %v1468
        %2139 = vmatpush.msra.mxu0 %v1460
        %2140 = vmatpush.msra.mxu0 %v1452
        %2141 = vmatpush.msra.mxu0 %v1444
        %2142 = vmatpush.msra.mxu0 %v1436
        %2143 = vmatpush.msra.mxu0 %v1428
        %2144 = vmatmul.f32.gmra.mxu0 %v1031
        %v2145 = vpop.f32.mrf.mxu0
        %v2146 = vadd.f32 %v2126, %v2145
        %2147 = vdwg.mxu0
        %2148 = vmatpush.msra.mxu0 %v1676
        %2149 = vmatpush.msra.mxu0 %v1668
        %2150 = vmatpush.msra.mxu0 %v1660
        %2151 = vmatpush.msra.mxu0 %v1652
        %2152 = vmatpush.msra.mxu0 %v1644
        %2153 = vmatpush.msra.mxu0 %v1636
        %2154 = vmatpush.msra.mxu0 %v1628
        %2155 = vmatpush.msra.mxu0 %v1620
        %2156 = vmatpush.msra.mxu0 %v1612
        %2157 = vmatpush.msra.mxu0 %v1604
        %2158 = vmatpush.msra.mxu0 %v1596
        %2159 = vmatpush.msra.mxu0 %v1588
        %2160 = vmatpush.msra.mxu0 %v1580
        %2161 = vmatpush.msra.mxu0 %v1572
        %2162 = vmatpush.msra.mxu0 %v1564
        %2163 = vmatpush.msra.mxu0 %v1556
        %2164 = vmatmul.f32.gmra.mxu0 %v1032
        %v2165 = vpop.f32.mrf.mxu0
        %v2166 = vadd.f32 %v2146, %v2165
        %2167 = vdwg.mxu0
        %2168 = vmatpush.msra.mxu0 %v1804
        %2169 = vmatpush.msra.mxu0 %v1796
        %2170 = vmatpush.msra.mxu0 %v1788
        %2171 = vmatpush.msra.mxu0 %v1780
        %2172 = vmatpush.msra.mxu0 %v1772
        %2173 = vmatpush.msra.mxu0 %v1764
        %2174 = vmatpush.msra.mxu0 %v1756
        %2175 = vmatpush.msra.mxu0 %v1748
        %2176 = vmatpush.msra.mxu0 %v1740
        %2177 = vmatpush.msra.mxu0 %v1732
        %2178 = vmatpush.msra.mxu0 %v1724
        %2179 = vmatpush.msra.mxu0 %v1716
        %2180 = vmatpush.msra.mxu0 %v1708
        %2181 = vmatpush.msra.mxu0 %v1700
        %2182 = vmatpush.msra.mxu0 %v1692
        %2183 = vmatpush.msra.mxu0 %v1684
        %2184 = vmatmul.f32.gmra.mxu0 %v1033
        %v2185 = vpop.f32.mrf.mxu0
        %v2186 = vadd.f32 %v2166, %v2185
        %2187 = vdwg.mxu0
        %2188 = vmatpush.msra.mxu0 %v1932
        %2189 = vmatpush.msra.mxu0 %v1924
        %2190 = vmatpush.msra.mxu0 %v1916
        %2191 = vmatpush.msra.mxu0 %v1908
        %2192 = vmatpush.msra.mxu0 %v1900
        %2193 = vmatpush.msra.mxu0 %v1892
        %2194 = vmatpush.msra.mxu0 %v1884
        %2195 = vmatpush.msra.mxu0 %v1876
        %2196 = vmatpush.msra.mxu0 %v1868
        %2197 = vmatpush.msra.mxu0 %v1860
        %2198 = vmatpush.msra.mxu0 %v1852
        %2199 = vmatpush.msra.mxu0 %v1844
        %2200 = vmatpush.msra.mxu0 %v1836
        %2201 = vmatpush.msra.mxu0 %v1828
        %2202 = vmatpush.msra.mxu0 %v1820
        %2203 = vmatpush.msra.mxu0 %v1812
        %2204 = vmatmul.f32.gmra.mxu0 %v1034
        %v2205 = vpop.f32.mrf.mxu0
        %v2206 = vadd.f32 %v2186, %v2205
        %2207 = vdwg.mxu0
        %2208 = vmatpush.msra.mxu0 %v2060
        %2209 = vmatpush.msra.mxu0 %v2052
        %2210 = vmatpush.msra.mxu0 %v2044
        %2211 = vmatpush.msra.mxu0 %v2036
        %2212 = vmatpush.msra.mxu0 %v2028
        %2213 = vmatpush.msra.mxu0 %v2020
        %2214 = vmatpush.msra.mxu0 %v2012
        %2215 = vmatpush.msra.mxu0 %v2004
        %2216 = vmatpush.msra.mxu0 %v1996
        %2217 = vmatpush.msra.mxu0 %v1988
        %2218 = vmatpush.msra.mxu0 %v1980
        %2219 = vmatpush.msra.mxu0 %v1972
        %2220 = vmatpush.msra.mxu0 %v1964
        %2221 = vmatpush.msra.mxu0 %v1956
        %2222 = vmatpush.msra.mxu0 %v1948
        %2223 = vmatpush.msra.mxu0 %v1940
        %2224 = vmatmul.f32.gmra.mxu0 %v1035
        %v2225 = vpop.f32.mrf.mxu0
        %v2226 = vadd.f32 %v2206, %v2225
        %2227 = vdwg.mxu0
        %2228 = vmatpush.msra.mxu0 %v1165
        %2229 = vmatpush.msra.mxu0 %v1157
        %2230 = vmatpush.msra.mxu0 %v1149
        %2231 = vmatpush.msra.mxu0 %v1141
        %2232 = vmatpush.msra.mxu0 %v1133
        %2233 = vmatpush.msra.mxu0 %v1125
        %2234 = vmatpush.msra.mxu0 %v1117
        %2235 = vmatpush.msra.mxu0 %v1109
        %2236 = vmatpush.msra.mxu0 %v1101
        %2237 = vmatpush.msra.mxu0 %v1093
        %2238 = vmatpush.msra.mxu0 %v1085
        %2239 = vmatpush.msra.mxu0 %v1077
        %2240 = vmatpush.msra.mxu0 %v1069
        %2241 = vmatpush.msra.mxu0 %v1061
        %2242 = vmatpush.msra.mxu0 %v1053
        %2243 = vmatpush.msra.mxu0 %v1045
        %2244 = vmatmul.f32.gmra.mxu0 %v1028
        %v2245 = vpop.f32.mrf.mxu0
        %v2246 = vadd.f32 0.0, %v2245
        %2247 = vdwg.mxu0
        %2248 = vmatpush.msra.mxu0 %v1293
        %2249 = vmatpush.msra.mxu0 %v1285
        %2250 = vmatpush.msra.mxu0 %v1277
        %2251 = vmatpush.msra.mxu0 %v1269
        %2252 = vmatpush.msra.mxu0 %v1261
        %2253 = vmatpush.msra.mxu0 %v1253
        %2254 = vmatpush.msra.mxu0 %v1245
        %2255 = vmatpush.msra.mxu0 %v1237
        %2256 = vmatpush.msra.mxu0 %v1229
        %2257 = vmatpush.msra.mxu0 %v1221
        %2258 = vmatpush.msra.mxu0 %v1213
        %2259 = vmatpush.msra.mxu0 %v1205
        %2260 = vmatpush.msra.mxu0 %v1197
        %2261 = vmatpush.msra.mxu0 %v1189
        %2262 = vmatpush.msra.mxu0 %v1181
        %2263 = vmatpush.msra.mxu0 %v1173
        %2264 = vmatmul.f32.gmra.mxu0 %v1029
        %v2265 = vpop.f32.mrf.mxu0
        %v2266 = vadd.f32 %v2246, %v2265
        %2267 = vdwg.mxu0
        %2268 = vmatpush.msra.mxu0 %v1421
        %2269 = vmatpush.msra.mxu0 %v1413
        %2270 = vmatpush.msra.mxu0 %v1405
        %2271 = vmatpush.msra.mxu0 %v1397
        %2272 = vmatpush.msra.mxu0 %v1389
        %2273 = vmatpush.msra.mxu0 %v1381
        %2274 = vmatpush.msra.mxu0 %v1373
        %2275 = vmatpush.msra.mxu0 %v1365
        %2276 = vmatpush.msra.mxu0 %v1357
        %2277 = vmatpush.msra.mxu0 %v1349
        %2278 = vmatpush.msra.mxu0 %v1341
        %2279 = vmatpush.msra.mxu0 %v1333
        %2280 = vmatpush.msra.mxu0 %v1325
        %2281 = vmatpush.msra.mxu0 %v1317
        %2282 = vmatpush.msra.mxu0 %v1309
        %2283 = vmatpush.msra.mxu0 %v1301
        %2284 = vmatmul.f32.gmra.mxu0 %v1030
        %v2285 = vpop.f32.mrf.mxu0
        %v2286 = vadd.f32 %v2266, %v2285
        %2287 = vdwg.mxu0
        %2288 = vmatpush.msra.mxu0 %v1549
        %2289 = vmatpush.msra.mxu0 %v1541
        %2290 = vmatpush.msra.mxu0 %v1533
        %2291 = vmatpush.msra.mxu0 %v1525
        %2292 = vmatpush.msra.mxu0 %v1517
        %2293 = vmatpush.msra.mxu0 %v1509
        %2294 = vmatpush.msra.mxu0 %v1501
        %2295 = vmatpush.msra.mxu0 %v1493
        %2296 = vmatpush.msra.mxu0 %v1485
        %2297 = vmatpush.msra.mxu0 %v1477
        %2298 = vmatpush.msra.mxu0 %v1469
        %2299 = vmatpush.msra.mxu0 %v1461
        %2300 = vmatpush.msra.mxu0 %v1453
        %2301 = vmatpush.msra.mxu0 %v1445
        %2302 = vmatpush.msra.mxu0 %v1437
        %2303 = vmatpush.msra.mxu0 %v1429
        %2304 = vmatmul.f32.gmra.mxu0 %v1031
        %v2305 = vpop.f32.mrf.mxu0
        %v2306 = vadd.f32 %v2286, %v2305
        %2307 = vdwg.mxu0
        %2308 = vmatpush.msra.mxu0 %v1677
        %2309 = vmatpush.msra.mxu0 %v1669
        %2310 = vmatpush.msra.mxu0 %v1661
        %2311 = vmatpush.msra.mxu0 %v1653
        %2312 = vmatpush.msra.mxu0 %v1645
        %2313 = vmatpush.msra.mxu0 %v1637
        %2314 = vmatpush.msra.mxu0 %v1629
        %2315 = vmatpush.msra.mxu0 %v1621
        %2316 = vmatpush.msra.mxu0 %v1613
        %2317 = vmatpush.msra.mxu0 %v1605
        %2318 = vmatpush.msra.mxu0 %v1597
        %2319 = vmatpush.msra.mxu0 %v1589
        %2320 = vmatpush.msra.mxu0 %v1581
        %2321 = vmatpush.msra.mxu0 %v1573
        %2322 = vmatpush.msra.mxu0 %v1565
        %2323 = vmatpush.msra.mxu0 %v1557
        %2324 = vmatmul.f32.gmra.mxu0 %v1032
        %v2325 = vpop.f32.mrf.mxu0
        %v2326 = vadd.f32 %v2306, %v2325
        %2327 = vdwg.mxu0
        %2328 = vmatpush.msra.mxu0 %v1805
        %2329 = vmatpush.msra.mxu0 %v1797
        %2330 = vmatpush.msra.mxu0 %v1789
        %2331 = vmatpush.msra.mxu0 %v1781
        %2332 = vmatpush.msra.mxu0 %v1773
        %2333 = vmatpush.msra.mxu0 %v1765
        %2334 = vmatpush.msra.mxu0 %v1757
        %2335 = vmatpush.msra.mxu0 %v1749
        %2336 = vmatpush.msra.mxu0 %v1741
        %2337 = vmatpush.msra.mxu0 %v1733
        %2338 = vmatpush.msra.mxu0 %v1725
        %2339 = vmatpush.msra.mxu0 %v1717
        %2340 = vmatpush.msra.mxu0 %v1709
        %2341 = vmatpush.msra.mxu0 %v1701
        %2342 = vmatpush.msra.mxu0 %v1693
        %2343 = vmatpush.msra.mxu0 %v1685
        %2344 = vmatmul.f32.gmra.mxu0 %v1033
        %v2345 = vpop.f32.mrf.mxu0
        %v2346 = vadd.f32 %v2326, %v2345
        %2347 = vdwg.mxu0
        %2348 = vmatpush.msra.mxu0 %v1933
        %2349 = vmatpush.msra.mxu0 %v1925
        %2350 = vmatpush.msra.mxu0 %v1917
        %2351 = vmatpush.msra.mxu0 %v1909
        %2352 = vmatpush.msra.mxu0 %v1901
        %2353 = vmatpush.msra.mxu0 %v1893
        %2354 = vmatpush.msra.mxu0 %v1885
        %2355 = vmatpush.msra.mxu0 %v1877
        %2356 = vmatpush.msra.mxu0 %v1869
        %2357 = vmatpush.msra.mxu0 %v1861
        %2358 = vmatpush.msra.mxu0 %v1853
        %2359 = vmatpush.msra.mxu0 %v1845
        %2360 = vmatpush.msra.mxu0 %v1837
        %2361 = vmatpush.msra.mxu0 %v1829
        %2362 = vmatpush.msra.mxu0 %v1821
        %2363 = vmatpush.msra.mxu0 %v1813
        %2364 = vmatmul.f32.gmra.mxu0 %v1034
        %v2365 = vpop.f32.mrf.mxu0
        %v2366 = vadd.f32 %v2346, %v2365
        %2367 = vdwg.mxu0
        %2368 = vmatpush.msra.mxu0 %v2061
        %2369 = vmatpush.msra.mxu0 %v2053
        %2370 = vmatpush.msra.mxu0 %v2045
        %2371 = vmatpush.msra.mxu0 %v2037
        %2372 = vmatpush.msra.mxu0 %v2029
        %2373 = vmatpush.msra.mxu0 %v2021
        %2374 = vmatpush.msra.mxu0 %v2013
        %2375 = vmatpush.msra.mxu0 %v2005
        %2376 = vmatpush.msra.mxu0 %v1997
        %2377 = vmatpush.msra.mxu0 %v1989
        %2378 = vmatpush.msra.mxu0 %v1981
        %2379 = vmatpush.msra.mxu0 %v1973
        %2380 = vmatpush.msra.mxu0 %v1965
        %2381 = vmatpush.msra.mxu0 %v1957
        %2382 = vmatpush.msra.mxu0 %v1949
        %2383 = vmatpush.msra.mxu0 %v1941
        %2384 = vmatmul.f32.gmra.mxu0 %v1035
        %v2385 = vpop.f32.mrf.mxu0
        %v2386 = vadd.f32 %v2366, %v2385
        %2387 = vdwg.mxu0
        %2388 = vmatpush.msra.mxu0 %v1166
        %2389 = vmatpush.msra.mxu0 %v1158
        %2390 = vmatpush.msra.mxu0 %v1150
        %2391 = vmatpush.msra.mxu0 %v1142
        %2392 = vmatpush.msra.mxu0 %v1134
        %2393 = vmatpush.msra.mxu0 %v1126
        %2394 = vmatpush.msra.mxu0 %v1118
        %2395 = vmatpush.msra.mxu0 %v1110
        %2396 = vmatpush.msra.mxu0 %v1102
        %2397 = vmatpush.msra.mxu0 %v1094
        %2398 = vmatpush.msra.mxu0 %v1086
        %2399 = vmatpush.msra.mxu0 %v1078
        %2400 = vmatpush.msra.mxu0 %v1070
        %2401 = vmatpush.msra.mxu0 %v1062
        %2402 = vmatpush.msra.mxu0 %v1054
        %2403 = vmatpush.msra.mxu0 %v1046
        %2404 = vmatmul.f32.gmra.mxu0 %v1028
        %v2405 = vpop.f32.mrf.mxu0
        %v2406 = vadd.f32 0.0, %v2405
        %2407 = vdwg.mxu0
        %2408 = vmatpush.msra.mxu0 %v1294
        %2409 = vmatpush.msra.mxu0 %v1286
        %2410 = vmatpush.msra.mxu0 %v1278
        %2411 = vmatpush.msra.mxu0 %v1270
        %2412 = vmatpush.msra.mxu0 %v1262
        %2413 = vmatpush.msra.mxu0 %v1254
        %2414 = vmatpush.msra.mxu0 %v1246
        %2415 = vmatpush.msra.mxu0 %v1238
        %2416 = vmatpush.msra.mxu0 %v1230
        %2417 = vmatpush.msra.mxu0 %v1222
        %2418 = vmatpush.msra.mxu0 %v1214
        %2419 = vmatpush.msra.mxu0 %v1206
        %2420 = vmatpush.msra.mxu0 %v1198
        %2421 = vmatpush.msra.mxu0 %v1190
        %2422 = vmatpush.msra.mxu0 %v1182
        %2423 = vmatpush.msra.mxu0 %v1174
        %2424 = vmatmul.f32.gmra.mxu0 %v1029
        %v2425 = vpop.f32.mrf.mxu0
        %v2426 = vadd.f32 %v2406, %v2425
        %2427 = vdwg.mxu0
        %2428 = vmatpush.msra.mxu0 %v1422
        %2429 = vmatpush.msra.mxu0 %v1414
        %2430 = vmatpush.msra.mxu0 %v1406
        %2431 = vmatpush.msra.mxu0 %v1398
        %2432 = vmatpush.msra.mxu0 %v1390
        %2433 = vmatpush.msra.mxu0 %v1382
        %2434 = vmatpush.msra.mxu0 %v1374
        %2435 = vmatpush.msra.mxu0 %v1366
        %2436 = vmatpush.msra.mxu0 %v1358
        %2437 = vmatpush.msra.mxu0 %v1350
        %2438 = vmatpush.msra.mxu0 %v1342
        %2439 = vmatpush.msra.mxu0 %v1334
        %2440 = vmatpush.msra.mxu0 %v1326
        %2441 = vmatpush.msra.mxu0 %v1318
        %2442 = vmatpush.msra.mxu0 %v1310
        %2443 = vmatpush.msra.mxu0 %v1302
        %2444 = vmatmul.f32.gmra.mxu0 %v1030
        %v2445 = vpop.f32.mrf.mxu0
        %v2446 = vadd.f32 %v2426, %v2445
        %2447 = vdwg.mxu0
        %2448 = vmatpush.msra.mxu0 %v1550
        %2449 = vmatpush.msra.mxu0 %v1542
        %2450 = vmatpush.msra.mxu0 %v1534
        %2451 = vmatpush.msra.mxu0 %v1526
        %2452 = vmatpush.msra.mxu0 %v1518
        %2453 = vmatpush.msra.mxu0 %v1510
        %2454 = vmatpush.msra.mxu0 %v1502
        %2455 = vmatpush.msra.mxu0 %v1494
        %2456 = vmatpush.msra.mxu0 %v1486
        %2457 = vmatpush.msra.mxu0 %v1478
        %2458 = vmatpush.msra.mxu0 %v1470
        %2459 = vmatpush.msra.mxu0 %v1462
        %2460 = vmatpush.msra.mxu0 %v1454
        %2461 = vmatpush.msra.mxu0 %v1446
        %2462 = vmatpush.msra.mxu0 %v1438
        %2463 = vmatpush.msra.mxu0 %v1430
        %2464 = vmatmul.f32.gmra.mxu0 %v1031
        %v2465 = vpop.f32.mrf.mxu0
        %v2466 = vadd.f32 %v2446, %v2465
        %2467 = vdwg.mxu0
        %2468 = vmatpush.msra.mxu0 %v1678
        %2469 = vmatpush.msra.mxu0 %v1670
        %2470 = vmatpush.msra.mxu0 %v1662
        %2471 = vmatpush.msra.mxu0 %v1654
        %2472 = vmatpush.msra.mxu0 %v1646
        %2473 = vmatpush.msra.mxu0 %v1638
        %2474 = vmatpush.msra.mxu0 %v1630
        %2475 = vmatpush.msra.mxu0 %v1622
        %2476 = vmatpush.msra.mxu0 %v1614
        %2477 = vmatpush.msra.mxu0 %v1606
        %2478 = vmatpush.msra.mxu0 %v1598
        %2479 = vmatpush.msra.mxu0 %v1590
        %2480 = vmatpush.msra.mxu0 %v1582
        %2481 = vmatpush.msra.mxu0 %v1574
        %2482 = vmatpush.msra.mxu0 %v1566
        %2483 = vmatpush.msra.mxu0 %v1558
        %2484 = vmatmul.f32.gmra.mxu0 %v1032
        %v2485 = vpop.f32.mrf.mxu0
        %v2486 = vadd.f32 %v2466, %v2485
        %2487 = vdwg.mxu0
        %2488 = vmatpush.msra.mxu0 %v1806
        %2489 = vmatpush.msra.mxu0 %v1798
        %2490 = vmatpush.msra.mxu0 %v1790
        %2491 = vmatpush.msra.mxu0 %v1782
        %2492 = vmatpush.msra.mxu0 %v1774
        %2493 = vmatpush.msra.mxu0 %v1766
        %2494 = vmatpush.msra.mxu0 %v1758
        %2495 = vmatpush.msra.mxu0 %v1750
        %2496 = vmatpush.msra.mxu0 %v1742
        %2497 = vmatpush.msra.mxu0 %v1734
        %2498 = vmatpush.msra.mxu0 %v1726
        %2499 = vmatpush.msra.mxu0 %v1718
        %2500 = vmatpush.msra.mxu0 %v1710
        %2501 = vmatpush.msra.mxu0 %v1702
        %2502 = vmatpush.msra.mxu0 %v1694
        %2503 = vmatpush.msra.mxu0 %v1686
        %2504 = vmatmul.f32.gmra.mxu0 %v1033
        %v2505 = vpop.f32.mrf.mxu0
        %v2506 = vadd.f32 %v2486, %v2505
        %2507 = vdwg.mxu0
        %2508 = vmatpush.msra.mxu0 %v1934
        %2509 = vmatpush.msra.mxu0 %v1926
        %2510 = vmatpush.msra.mxu0 %v1918
        %2511 = vmatpush.msra.mxu0 %v1910
        %2512 = vmatpush.msra.mxu0 %v1902
        %2513 = vmatpush.msra.mxu0 %v1894
        %2514 = vmatpush.msra.mxu0 %v1886
        %2515 = vmatpush.msra.mxu0 %v1878
        %2516 = vmatpush.msra.mxu0 %v1870
        %2517 = vmatpush.msra.mxu0 %v1862
        %2518 = vmatpush.msra.mxu0 %v1854
        %2519 = vmatpush.msra.mxu0 %v1846
        %2520 = vmatpush.msra.mxu0 %v1838
        %2521 = vmatpush.msra.mxu0 %v1830
        %2522 = vmatpush.msra.mxu0 %v1822
        %2523 = vmatpush.msra.mxu0 %v1814
        %2524 = vmatmul.f32.gmra.mxu0 %v1034
        %v2525 = vpop.f32.mrf.mxu0
        %v2526 = vadd.f32 %v2506, %v2525
        %2527 = vdwg.mxu0
        %2528 = vmatpush.msra.mxu0 %v2062
        %2529 = vmatpush.msra.mxu0 %v2054
        %2530 = vmatpush.msra.mxu0 %v2046
        %2531 = vmatpush.msra.mxu0 %v2038
        %2532 = vmatpush.msra.mxu0 %v2030
        %2533 = vmatpush.msra.mxu0 %v2022
        %2534 = vmatpush.msra.mxu0 %v2014
        %2535 = vmatpush.msra.mxu0 %v2006
        %2536 = vmatpush.msra.mxu0 %v1998
        %2537 = vmatpush.msra.mxu0 %v1990
        %2538 = vmatpush.msra.mxu0 %v1982
        %2539 = vmatpush.msra.mxu0 %v1974
        %2540 = vmatpush.msra.mxu0 %v1966
        %2541 = vmatpush.msra.mxu0 %v1958
        %2542 = vmatpush.msra.mxu0 %v1950
        %2543 = vmatpush.msra.mxu0 %v1942
        %2544 = vmatmul.f32.gmra.mxu0 %v1035
        %v2545 = vpop.f32.mrf.mxu0
        %v2546 = vadd.f32 %v2526, %v2545
        %2547 = vdwg.mxu0
        %2548 = vmatpush.msra.mxu0 %v1167
        %2549 = vmatpush.msra.mxu0 %v1159
        %2550 = vmatpush.msra.mxu0 %v1151
        %2551 = vmatpush.msra.mxu0 %v1143
        %2552 = vmatpush.msra.mxu0 %v1135
        %2553 = vmatpush.msra.mxu0 %v1127
        %2554 = vmatpush.msra.mxu0 %v1119
        %2555 = vmatpush.msra.mxu0 %v1111
        %2556 = vmatpush.msra.mxu0 %v1103
        %2557 = vmatpush.msra.mxu0 %v1095
        %2558 = vmatpush.msra.mxu0 %v1087
        %2559 = vmatpush.msra.mxu0 %v1079
        %2560 = vmatpush.msra.mxu0 %v1071
        %2561 = vmatpush.msra.mxu0 %v1063
        %2562 = vmatpush.msra.mxu0 %v1055
        %2563 = vmatpush.msra.mxu0 %v1047
        %2564 = vmatmul.f32.gmra.mxu0 %v1028
        %v2565 = vpop.f32.mrf.mxu0
        %v2566 = vadd.f32 0.0, %v2565
        %2567 = vdwg.mxu0
        %2568 = vmatpush.msra.mxu0 %v1295
        %2569 = vmatpush.msra.mxu0 %v1287
        %2570 = vmatpush.msra.mxu0 %v1279
        %2571 = vmatpush.msra.mxu0 %v1271
        %2572 = vmatpush.msra.mxu0 %v1263
        %2573 = vmatpush.msra.mxu0 %v1255
        %2574 = vmatpush.msra.mxu0 %v1247
        %2575 = vmatpush.msra.mxu0 %v1239
        %2576 = vmatpush.msra.mxu0 %v1231
        %2577 = vmatpush.msra.mxu0 %v1223
        %2578 = vmatpush.msra.mxu0 %v1215
        %2579 = vmatpush.msra.mxu0 %v1207
        %2580 = vmatpush.msra.mxu0 %v1199
        %2581 = vmatpush.msra.mxu0 %v1191
        %2582 = vmatpush.msra.mxu0 %v1183
        %2583 = vmatpush.msra.mxu0 %v1175
        %2584 = vmatmul.f32.gmra.mxu0 %v1029
        %v2585 = vpop.f32.mrf.mxu0
        %v2586 = vadd.f32 %v2566, %v2585
        %2587 = vdwg.mxu0
        %2588 = vmatpush.msra.mxu0 %v1423
        %2589 = vmatpush.msra.mxu0 %v1415
        %2590 = vmatpush.msra.mxu0 %v1407
        %2591 = vmatpush.msra.mxu0 %v1399
        %2592 = vmatpush.msra.mxu0 %v1391
        %2593 = vmatpush.msra.mxu0 %v1383
        %2594 = vmatpush.msra.mxu0 %v1375
        %2595 = vmatpush.msra.mxu0 %v1367
        %2596 = vmatpush.msra.mxu0 %v1359
        %2597 = vmatpush.msra.mxu0 %v1351
        %2598 = vmatpush.msra.mxu0 %v1343
        %2599 = vmatpush.msra.mxu0 %v1335
        %2600 = vmatpush.msra.mxu0 %v1327
        %2601 = vmatpush.msra.mxu0 %v1319
        %2602 = vmatpush.msra.mxu0 %v1311
        %2603 = vmatpush.msra.mxu0 %v1303
        %2604 = vmatmul.f32.gmra.mxu0 %v1030
        %v2605 = vpop.f32.mrf.mxu0
        %v2606 = vadd.f32 %v2586, %v2605
        %2607 = vdwg.mxu0
        %2608 = vmatpush.msra.mxu0 %v1551
        %2609 = vmatpush.msra.mxu0 %v1543
        %2610 = vmatpush.msra.mxu0 %v1535
        %2611 = vmatpush.msra.mxu0 %v1527
        %2612 = vmatpush.msra.mxu0 %v1519
        %2613 = vmatpush.msra.mxu0 %v1511
        %2614 = vmatpush.msra.mxu0 %v1503
        %2615 = vmatpush.msra.mxu0 %v1495
        %2616 = vmatpush.msra.mxu0 %v1487
        %2617 = vmatpush.msra.mxu0 %v1479
        %2618 = vmatpush.msra.mxu0 %v1471
        %2619 = vmatpush.msra.mxu0 %v1463
        %2620 = vmatpush.msra.mxu0 %v1455
        %2621 = vmatpush.msra.mxu0 %v1447
        %2622 = vmatpush.msra.mxu0 %v1439
        %2623 = vmatpush.msra.mxu0 %v1431
        %2624 = vmatmul.f32.gmra.mxu0 %v1031
        %v2625 = vpop.f32.mrf.mxu0
        %v2626 = vadd.f32 %v2606, %v2625
        %2627 = vdwg.mxu0
        %2628 = vmatpush.msra.mxu0 %v1679
        %2629 = vmatpush.msra.mxu0 %v1671
        %2630 = vmatpush.msra.mxu0 %v1663
        %2631 = vmatpush.msra.mxu0 %v1655
        %2632 = vmatpush.msra.mxu0 %v1647
        %2633 = vmatpush.msra.mxu0 %v1639
        %2634 = vmatpush.msra.mxu0 %v1631
        %2635 = vmatpush.msra.mxu0 %v1623
        %2636 = vmatpush.msra.mxu0 %v1615
        %2637 = vmatpush.msra.mxu0 %v1607
        %2638 = vmatpush.msra.mxu0 %v1599
        %2639 = vmatpush.msra.mxu0 %v1591
        %2640 = vmatpush.msra.mxu0 %v1583
        %2641 = vmatpush.msra.mxu0 %v1575
        %2642 = vmatpush.msra.mxu0 %v1567
        %2643 = vmatpush.msra.mxu0 %v1559
        %2644 = vmatmul.f32.gmra.mxu0 %v1032
        %v2645 = vpop.f32.mrf.mxu0
        %v2646 = vadd.f32 %v2626, %v2645
        %2647 = vdwg.mxu0
        %2648 = vmatpush.msra.mxu0 %v1807
        %2649 = vmatpush.msra.mxu0 %v1799
        %2650 = vmatpush.msra.mxu0 %v1791
        %2651 = vmatpush.msra.mxu0 %v1783
        %2652 = vmatpush.msra.mxu0 %v1775
        %2653 = vmatpush.msra.mxu0 %v1767
        %2654 = vmatpush.msra.mxu0 %v1759
        %2655 = vmatpush.msra.mxu0 %v1751
        %2656 = vmatpush.msra.mxu0 %v1743
        %2657 = vmatpush.msra.mxu0 %v1735
        %2658 = vmatpush.msra.mxu0 %v1727
        %2659 = vmatpush.msra.mxu0 %v1719
        %2660 = vmatpush.msra.mxu0 %v1711
        %2661 = vmatpush.msra.mxu0 %v1703
        %2662 = vmatpush.msra.mxu0 %v1695
        %2663 = vmatpush.msra.mxu0 %v1687
        %2664 = vmatmul.f32.gmra.mxu0 %v1033
        %v2665 = vpop.f32.mrf.mxu0
        %v2666 = vadd.f32 %v2646, %v2665
        %2667 = vdwg.mxu0
        %2668 = vmatpush.msra.mxu0 %v1935
        %2669 = vmatpush.msra.mxu0 %v1927
        %2670 = vmatpush.msra.mxu0 %v1919
        %2671 = vmatpush.msra.mxu0 %v1911
        %2672 = vmatpush.msra.mxu0 %v1903
        %2673 = vmatpush.msra.mxu0 %v1895
        %2674 = vmatpush.msra.mxu0 %v1887
        %2675 = vmatpush.msra.mxu0 %v1879
        %2676 = vmatpush.msra.mxu0 %v1871
        %2677 = vmatpush.msra.mxu0 %v1863
        %2678 = vmatpush.msra.mxu0 %v1855
        %2679 = vmatpush.msra.mxu0 %v1847
        %2680 = vmatpush.msra.mxu0 %v1839
        %2681 = vmatpush.msra.mxu0 %v1831
        %2682 = vmatpush.msra.mxu0 %v1823
        %2683 = vmatpush.msra.mxu0 %v1815
        %2684 = vmatmul.f32.gmra.mxu0 %v1034
        %v2685 = vpop.f32.mrf.mxu0
        %v2686 = vadd.f32 %v2666, %v2685
        %2687 = vdwg.mxu0
        %2688 = vmatpush.msra.mxu0 %v2063
        %2689 = vmatpush.msra.mxu0 %v2055
        %2690 = vmatpush.msra.mxu0 %v2047
        %2691 = vmatpush.msra.mxu0 %v2039
        %2692 = vmatpush.msra.mxu0 %v2031
        %2693 = vmatpush.msra.mxu0 %v2023
        %2694 = vmatpush.msra.mxu0 %v2015
        %2695 = vmatpush.msra.mxu0 %v2007
        %2696 = vmatpush.msra.mxu0 %v1999
        %2697 = vmatpush.msra.mxu0 %v1991
        %2698 = vmatpush.msra.mxu0 %v1983
        %2699 = vmatpush.msra.mxu0 %v1975
        %2700 = vmatpush.msra.mxu0 %v1967
        %2701 = vmatpush.msra.mxu0 %v1959
        %2702 = vmatpush.msra.mxu0 %v1951
        %2703 = vmatpush.msra.mxu0 %v1943
        %2704 = vmatmul.f32.gmra.mxu0 %v1035
        %v2705 = vpop.f32.mrf.mxu0
        %v2706 = vadd.f32 %v2686, %v2705
        %2707 = vdwg.mxu0
        %2708 = vmatpush.msra.mxu0 %v1168
        %2709 = vmatpush.msra.mxu0 %v1160
        %2710 = vmatpush.msra.mxu0 %v1152
        %2711 = vmatpush.msra.mxu0 %v1144
        %2712 = vmatpush.msra.mxu0 %v1136
        %2713 = vmatpush.msra.mxu0 %v1128
        %2714 = vmatpush.msra.mxu0 %v1120
        %2715 = vmatpush.msra.mxu0 %v1112
        %2716 = vmatpush.msra.mxu0 %v1104
        %2717 = vmatpush.msra.mxu0 %v1096
        %2718 = vmatpush.msra.mxu0 %v1088
        %2719 = vmatpush.msra.mxu0 %v1080
        %2720 = vmatpush.msra.mxu0 %v1072
        %2721 = vmatpush.msra.mxu0 %v1064
        %2722 = vmatpush.msra.mxu0 %v1056
        %2723 = vmatpush.msra.mxu0 %v1048
        %2724 = vmatmul.f32.gmra.mxu0 %v1028
        %v2725 = vpop.f32.mrf.mxu0
        %v2726 = vadd.f32 0.0, %v2725
        %2727 = vdwg.mxu0
        %2728 = vmatpush.msra.mxu0 %v1296
        %2729 = vmatpush.msra.mxu0 %v1288
        %2730 = vmatpush.msra.mxu0 %v1280
        %2731 = vmatpush.msra.mxu0 %v1272
        %2732 = vmatpush.msra.mxu0 %v1264
        %2733 = vmatpush.msra.mxu0 %v1256
        %2734 = vmatpush.msra.mxu0 %v1248
        %2735 = vmatpush.msra.mxu0 %v1240
        %2736 = vmatpush.msra.mxu0 %v1232
        %2737 = vmatpush.msra.mxu0 %v1224
        %2738 = vmatpush.msra.mxu0 %v1216
        %2739 = vmatpush.msra.mxu0 %v1208
        %2740 = vmatpush.msra.mxu0 %v1200
        %2741 = vmatpush.msra.mxu0 %v1192
        %2742 = vmatpush.msra.mxu0 %v1184
        %2743 = vmatpush.msra.mxu0 %v1176
        %2744 = vmatmul.f32.gmra.mxu0 %v1029
        %v2745 = vpop.f32.mrf.mxu0
        %v2746 = vadd.f32 %v2726, %v2745
        %2747 = vdwg.mxu0
        %2748 = vmatpush.msra.mxu0 %v1424
        %2749 = vmatpush.msra.mxu0 %v1416
        %2750 = vmatpush.msra.mxu0 %v1408
        %2751 = vmatpush.msra.mxu0 %v1400
        %2752 = vmatpush.msra.mxu0 %v1392
        %2753 = vmatpush.msra.mxu0 %v1384
        %2754 = vmatpush.msra.mxu0 %v1376
        %2755 = vmatpush.msra.mxu0 %v1368
        %2756 = vmatpush.msra.mxu0 %v1360
        %2757 = vmatpush.msra.mxu0 %v1352
        %2758 = vmatpush.msra.mxu0 %v1344
        %2759 = vmatpush.msra.mxu0 %v1336
        %2760 = vmatpush.msra.mxu0 %v1328
        %2761 = vmatpush.msra.mxu0 %v1320
        %2762 = vmatpush.msra.mxu0 %v1312
        %2763 = vmatpush.msra.mxu0 %v1304
        %2764 = vmatmul.f32.gmra.mxu0 %v1030
        %v2765 = vpop.f32.mrf.mxu0
        %v2766 = vadd.f32 %v2746, %v2765
        %2767 = vdwg.mxu0
        %2768 = vmatpush.msra.mxu0 %v1552
        %2769 = vmatpush.msra.mxu0 %v1544
        %2770 = vmatpush.msra.mxu0 %v1536
        %2771 = vmatpush.msra.mxu0 %v1528
        %2772 = vmatpush.msra.mxu0 %v1520
        %2773 = vmatpush.msra.mxu0 %v1512
        %2774 = vmatpush.msra.mxu0 %v1504
        %2775 = vmatpush.msra.mxu0 %v1496
        %2776 = vmatpush.msra.mxu0 %v1488
        %2777 = vmatpush.msra.mxu0 %v1480
        %2778 = vmatpush.msra.mxu0 %v1472
        %2779 = vmatpush.msra.mxu0 %v1464
        %2780 = vmatpush.msra.mxu0 %v1456
        %2781 = vmatpush.msra.mxu0 %v1448
        %2782 = vmatpush.msra.mxu0 %v1440
        %2783 = vmatpush.msra.mxu0 %v1432
        %2784 = vmatmul.f32.gmra.mxu0 %v1031
        %v2785 = vpop.f32.mrf.mxu0
        %v2786 = vadd.f32 %v2766, %v2785
        %2787 = vdwg.mxu0
        %2788 = vmatpush.msra.mxu0 %v1680
        %2789 = vmatpush.msra.mxu0 %v1672
        %2790 = vmatpush.msra.mxu0 %v1664
        %2791 = vmatpush.msra.mxu0 %v1656
        %2792 = vmatpush.msra.mxu0 %v1648
        %2793 = vmatpush.msra.mxu0 %v1640
        %2794 = vmatpush.msra.mxu0 %v1632
        %2795 = vmatpush.msra.mxu0 %v1624
        %2796 = vmatpush.msra.mxu0 %v1616
        %2797 = vmatpush.msra.mxu0 %v1608
        %2798 = vmatpush.msra.mxu0 %v1600
        %2799 = vmatpush.msra.mxu0 %v1592
        %2800 = vmatpush.msra.mxu0 %v1584
        %2801 = vmatpush.msra.mxu0 %v1576
        %2802 = vmatpush.msra.mxu0 %v1568
        %2803 = vmatpush.msra.mxu0 %v1560
        %2804 = vmatmul.f32.gmra.mxu0 %v1032
        %v2805 = vpop.f32.mrf.mxu0
        %v2806 = vadd.f32 %v2786, %v2805
        %2807 = vdwg.mxu0
        %2808 = vmatpush.msra.mxu0 %v1808
        %2809 = vmatpush.msra.mxu0 %v1800
        %2810 = vmatpush.msra.mxu0 %v1792
        %2811 = vmatpush.msra.mxu0 %v1784
        %2812 = vmatpush.msra.mxu0 %v1776
        %2813 = vmatpush.msra.mxu0 %v1768
        %2814 = vmatpush.msra.mxu0 %v1760
        %2815 = vmatpush.msra.mxu0 %v1752
        %2816 = vmatpush.msra.mxu0 %v1744
        %2817 = vmatpush.msra.mxu0 %v1736
        %2818 = vmatpush.msra.mxu0 %v1728
        %2819 = vmatpush.msra.mxu0 %v1720
        %2820 = vmatpush.msra.mxu0 %v1712
        %2821 = vmatpush.msra.mxu0 %v1704
        %2822 = vmatpush.msra.mxu0 %v1696
        %2823 = vmatpush.msra.mxu0 %v1688
        %2824 = vmatmul.f32.gmra.mxu0 %v1033
        %v2825 = vpop.f32.mrf.mxu0
        %v2826 = vadd.f32 %v2806, %v2825
        %2827 = vdwg.mxu0
        %2828 = vmatpush.msra.mxu0 %v1936
        %2829 = vmatpush.msra.mxu0 %v1928
        %2830 = vmatpush.msra.mxu0 %v1920
        %2831 = vmatpush.msra.mxu0 %v1912
        %2832 = vmatpush.msra.mxu0 %v1904
        %2833 = vmatpush.msra.mxu0 %v1896
        %2834 = vmatpush.msra.mxu0 %v1888
        %2835 = vmatpush.msra.mxu0 %v1880
        %2836 = vmatpush.msra.mxu0 %v1872
        %2837 = vmatpush.msra.mxu0 %v1864
        %2838 = vmatpush.msra.mxu0 %v1856
        %2839 = vmatpush.msra.mxu0 %v1848
        %2840 = vmatpush.msra.mxu0 %v1840
        %2841 = vmatpush.msra.mxu0 %v1832
        %2842 = vmatpush.msra.mxu0 %v1824
        %2843 = vmatpush.msra.mxu0 %v1816
        %2844 = vmatmul.f32.gmra.mxu0 %v1034
        %v2845 = vpop.f32.mrf.mxu0
        %v2846 = vadd.f32 %v2826, %v2845
        %2847 = vdwg.mxu0
        %2848 = vmatpush.msra.mxu0 %v2064
        %2849 = vmatpush.msra.mxu0 %v2056
        %2850 = vmatpush.msra.mxu0 %v2048
        %2851 = vmatpush.msra.mxu0 %v2040
        %2852 = vmatpush.msra.mxu0 %v2032
        %2853 = vmatpush.msra.mxu0 %v2024
        %2854 = vmatpush.msra.mxu0 %v2016
        %2855 = vmatpush.msra.mxu0 %v2008
        %2856 = vmatpush.msra.mxu0 %v2000
        %2857 = vmatpush.msra.mxu0 %v1992
        %2858 = vmatpush.msra.mxu0 %v1984
        %2859 = vmatpush.msra.mxu0 %v1976
        %2860 = vmatpush.msra.mxu0 %v1968
        %2861 = vmatpush.msra.mxu0 %v1960
        %2862 = vmatpush.msra.mxu0 %v1952
        %2863 = vmatpush.msra.mxu0 %v1944
        %2864 = vmatmul.f32.gmra.mxu0 %v1035
        %v2865 = vpop.f32.mrf.mxu0
        %v2866 = vadd.f32 %v2846, %v2865
        %2867 = vdwg.mxu0
        %2868 = vmatpush.msra.mxu0 %v1169
        %2869 = vmatpush.msra.mxu0 %v1161
        %2870 = vmatpush.msra.mxu0 %v1153
        %2871 = vmatpush.msra.mxu0 %v1145
        %2872 = vmatpush.msra.mxu0 %v1137
        %2873 = vmatpush.msra.mxu0 %v1129
        %2874 = vmatpush.msra.mxu0 %v1121
        %2875 = vmatpush.msra.mxu0 %v1113
        %2876 = vmatpush.msra.mxu0 %v1105
        %2877 = vmatpush.msra.mxu0 %v1097
        %2878 = vmatpush.msra.mxu0 %v1089
        %2879 = vmatpush.msra.mxu0 %v1081
        %2880 = vmatpush.msra.mxu0 %v1073
        %2881 = vmatpush.msra.mxu0 %v1065
        %2882 = vmatpush.msra.mxu0 %v1057
        %2883 = vmatpush.msra.mxu0 %v1049
        %2884 = vmatmul.f32.gmra.mxu0 %v1028
        %v2885 = vpop.f32.mrf.mxu0
        %v2886 = vadd.f32 0.0, %v2885
        %2887 = vdwg.mxu0
        %2888 = vmatpush.msra.mxu0 %v1297
        %2889 = vmatpush.msra.mxu0 %v1289
        %2890 = vmatpush.msra.mxu0 %v1281
        %2891 = vmatpush.msra.mxu0 %v1273
        %2892 = vmatpush.msra.mxu0 %v1265
        %2893 = vmatpush.msra.mxu0 %v1257
        %2894 = vmatpush.msra.mxu0 %v1249
        %2895 = vmatpush.msra.mxu0 %v1241
        %2896 = vmatpush.msra.mxu0 %v1233
        %2897 = vmatpush.msra.mxu0 %v1225
        %2898 = vmatpush.msra.mxu0 %v1217
        %2899 = vmatpush.msra.mxu0 %v1209
        %2900 = vmatpush.msra.mxu0 %v1201
        %2901 = vmatpush.msra.mxu0 %v1193
        %2902 = vmatpush.msra.mxu0 %v1185
        %2903 = vmatpush.msra.mxu0 %v1177
        %2904 = vmatmul.f32.gmra.mxu0 %v1029
        %v2905 = vpop.f32.mrf.mxu0
        %v2906 = vadd.f32 %v2886, %v2905
        %2907 = vdwg.mxu0
        %2908 = vmatpush.msra.mxu0 %v1425
        %2909 = vmatpush.msra.mxu0 %v1417
        %2910 = vmatpush.msra.mxu0 %v1409
        %2911 = vmatpush.msra.mxu0 %v1401
        %2912 = vmatpush.msra.mxu0 %v1393
        %2913 = vmatpush.msra.mxu0 %v1385
        %2914 = vmatpush.msra.mxu0 %v1377
        %2915 = vmatpush.msra.mxu0 %v1369
        %2916 = vmatpush.msra.mxu0 %v1361
        %2917 = vmatpush.msra.mxu0 %v1353
        %2918 = vmatpush.msra.mxu0 %v1345
        %2919 = vmatpush.msra.mxu0 %v1337
        %2920 = vmatpush.msra.mxu0 %v1329
        %2921 = vmatpush.msra.mxu0 %v1321
        %2922 = vmatpush.msra.mxu0 %v1313
        %2923 = vmatpush.msra.mxu0 %v1305
        %2924 = vmatmul.f32.gmra.mxu0 %v1030
        %v2925 = vpop.f32.mrf.mxu0
        %v2926 = vadd.f32 %v2906, %v2925
        %2927 = vdwg.mxu0
        %2928 = vmatpush.msra.mxu0 %v1553
        %2929 = vmatpush.msra.mxu0 %v1545
        %2930 = vmatpush.msra.mxu0 %v1537
        %2931 = vmatpush.msra.mxu0 %v1529
        %2932 = vmatpush.msra.mxu0 %v1521
        %2933 = vmatpush.msra.mxu0 %v1513
        %2934 = vmatpush.msra.mxu0 %v1505
        %2935 = vmatpush.msra.mxu0 %v1497
        %2936 = vmatpush.msra.mxu0 %v1489
        %2937 = vmatpush.msra.mxu0 %v1481
        %2938 = vmatpush.msra.mxu0 %v1473
        %2939 = vmatpush.msra.mxu0 %v1465
        %2940 = vmatpush.msra.mxu0 %v1457
        %2941 = vmatpush.msra.mxu0 %v1449
        %2942 = vmatpush.msra.mxu0 %v1441
        %2943 = vmatpush.msra.mxu0 %v1433
        %2944 = vmatmul.f32.gmra.mxu0 %v1031
        %v2945 = vpop.f32.mrf.mxu0
        %v2946 = vadd.f32 %v2926, %v2945
        %2947 = vdwg.mxu0
        %2948 = vmatpush.msra.mxu0 %v1681
        %2949 = vmatpush.msra.mxu0 %v1673
        %2950 = vmatpush.msra.mxu0 %v1665
        %2951 = vmatpush.msra.mxu0 %v1657
        %2952 = vmatpush.msra.mxu0 %v1649
        %2953 = vmatpush.msra.mxu0 %v1641
        %2954 = vmatpush.msra.mxu0 %v1633
        %2955 = vmatpush.msra.mxu0 %v1625
        %2956 = vmatpush.msra.mxu0 %v1617
        %2957 = vmatpush.msra.mxu0 %v1609
        %2958 = vmatpush.msra.mxu0 %v1601
        %2959 = vmatpush.msra.mxu0 %v1593
        %2960 = vmatpush.msra.mxu0 %v1585
        %2961 = vmatpush.msra.mxu0 %v1577
        %2962 = vmatpush.msra.mxu0 %v1569
        %2963 = vmatpush.msra.mxu0 %v1561
        %2964 = vmatmul.f32.gmra.mxu0 %v1032
        %v2965 = vpop.f32.mrf.mxu0
        %v2966 = vadd.f32 %v2946, %v2965
        %2967 = vdwg.mxu0
        %2968 = vmatpush.msra.mxu0 %v1809
        %2969 = vmatpush.msra.mxu0 %v1801
        %2970 = vmatpush.msra.mxu0 %v1793
        %2971 = vmatpush.msra.mxu0 %v1785
        %2972 = vmatpush.msra.mxu0 %v1777
        %2973 = vmatpush.msra.mxu0 %v1769
        %2974 = vmatpush.msra.mxu0 %v1761
        %2975 = vmatpush.msra.mxu0 %v1753
        %2976 = vmatpush.msra.mxu0 %v1745
        %2977 = vmatpush.msra.mxu0 %v1737
        %2978 = vmatpush.msra.mxu0 %v1729
        %2979 = vmatpush.msra.mxu0 %v1721
        %2980 = vmatpush.msra.mxu0 %v1713
        %2981 = vmatpush.msra.mxu0 %v1705
        %2982 = vmatpush.msra.mxu0 %v1697
        %2983 = vmatpush.msra.mxu0 %v1689
        %2984 = vmatmul.f32.gmra.mxu0 %v1033
        %v2985 = vpop.f32.mrf.mxu0
        %v2986 = vadd.f32 %v2966, %v2985
        %2987 = vdwg.mxu0
        %2988 = vmatpush.msra.mxu0 %v1937
        %2989 = vmatpush.msra.mxu0 %v1929
        %2990 = vmatpush.msra.mxu0 %v1921
        %2991 = vmatpush.msra.mxu0 %v1913
        %2992 = vmatpush.msra.mxu0 %v1905
        %2993 = vmatpush.msra.mxu0 %v1897
        %2994 = vmatpush.msra.mxu0 %v1889
        %2995 = vmatpush.msra.mxu0 %v1881
        %2996 = vmatpush.msra.mxu0 %v1873
        %2997 = vmatpush.msra.mxu0 %v1865
        %2998 = vmatpush.msra.mxu0 %v1857
        %2999 = vmatpush.msra.mxu0 %v1849
        %3000 = vmatpush.msra.mxu0 %v1841
        %3001 = vmatpush.msra.mxu0 %v1833
        %3002 = vmatpush.msra.mxu0 %v1825
        %3003 = vmatpush.msra.mxu0 %v1817
        %3004 = vmatmul.f32.gmra.mxu0 %v1034
        %v3005 = vpop.f32.mrf.mxu0
        %v3006 = vadd.f32 %v2986, %v3005
        %3007 = vdwg.mxu0
        %3008 = vmatpush.msra.mxu0 %v2065
        %3009 = vmatpush.msra.mxu0 %v2057
        %3010 = vmatpush.msra.mxu0 %v2049
        %3011 = vmatpush.msra.mxu0 %v2041
        %3012 = vmatpush.msra.mxu0 %v2033
        %3013 = vmatpush.msra.mxu0 %v2025
        %3014 = vmatpush.msra.mxu0 %v2017
        %3015 = vmatpush.msra.mxu0 %v2009
        %3016 = vmatpush.msra.mxu0 %v2001
        %3017 = vmatpush.msra.mxu0 %v1993
        %3018 = vmatpush.msra.mxu0 %v1985
        %3019 = vmatpush.msra.mxu0 %v1977
        %3020 = vmatpush.msra.mxu0 %v1969
        %3021 = vmatpush.msra.mxu0 %v1961
        %3022 = vmatpush.msra.mxu0 %v1953
        %3023 = vmatpush.msra.mxu0 %v1945
        %3024 = vmatmul.f32.gmra.mxu0 %v1035
        %v3025 = vpop.f32.mrf.mxu0
        %v3026 = vadd.f32 %v3006, %v3025
        %3027 = vdwg.mxu0
        %3028 = vmatpush.msra.mxu0 %v1170
        %3029 = vmatpush.msra.mxu0 %v1162
        %3030 = vmatpush.msra.mxu0 %v1154
        %3031 = vmatpush.msra.mxu0 %v1146
        %3032 = vmatpush.msra.mxu0 %v1138
        %3033 = vmatpush.msra.mxu0 %v1130
        %3034 = vmatpush.msra.mxu0 %v1122
        %3035 = vmatpush.msra.mxu0 %v1114
        %3036 = vmatpush.msra.mxu0 %v1106
        %3037 = vmatpush.msra.mxu0 %v1098
        %3038 = vmatpush.msra.mxu0 %v1090
        %3039 = vmatpush.msra.mxu0 %v1082
        %3040 = vmatpush.msra.mxu0 %v1074
        %3041 = vmatpush.msra.mxu0 %v1066
        %3042 = vmatpush.msra.mxu0 %v1058
        %3043 = vmatpush.msra.mxu0 %v1050
        %3044 = vmatmul.f32.gmra.mxu0 %v1028
        %v3045 = vpop.f32.mrf.mxu0
        %v3046 = vadd.f32 0.0, %v3045
        %3047 = vdwg.mxu0
        %3048 = vmatpush.msra.mxu0 %v1298
        %3049 = vmatpush.msra.mxu0 %v1290
        %3050 = vmatpush.msra.mxu0 %v1282
        %3051 = vmatpush.msra.mxu0 %v1274
        %3052 = vmatpush.msra.mxu0 %v1266
        %3053 = vmatpush.msra.mxu0 %v1258
        %3054 = vmatpush.msra.mxu0 %v1250
        %3055 = vmatpush.msra.mxu0 %v1242
        %3056 = vmatpush.msra.mxu0 %v1234
        %3057 = vmatpush.msra.mxu0 %v1226
        %3058 = vmatpush.msra.mxu0 %v1218
        %3059 = vmatpush.msra.mxu0 %v1210
        %3060 = vmatpush.msra.mxu0 %v1202
        %3061 = vmatpush.msra.mxu0 %v1194
        %3062 = vmatpush.msra.mxu0 %v1186
        %3063 = vmatpush.msra.mxu0 %v1178
        %3064 = vmatmul.f32.gmra.mxu0 %v1029
        %v3065 = vpop.f32.mrf.mxu0
        %v3066 = vadd.f32 %v3046, %v3065
        %3067 = vdwg.mxu0
        %3068 = vmatpush.msra.mxu0 %v1426
        %3069 = vmatpush.msra.mxu0 %v1418
        %3070 = vmatpush.msra.mxu0 %v1410
        %3071 = vmatpush.msra.mxu0 %v1402
        %3072 = vmatpush.msra.mxu0 %v1394
        %3073 = vmatpush.msra.mxu0 %v1386
        %3074 = vmatpush.msra.mxu0 %v1378
        %3075 = vmatpush.msra.mxu0 %v1370
        %3076 = vmatpush.msra.mxu0 %v1362
        %3077 = vmatpush.msra.mxu0 %v1354
        %3078 = vmatpush.msra.mxu0 %v1346
        %3079 = vmatpush.msra.mxu0 %v1338
        %3080 = vmatpush.msra.mxu0 %v1330
        %3081 = vmatpush.msra.mxu0 %v1322
        %3082 = vmatpush.msra.mxu0 %v1314
        %3083 = vmatpush.msra.mxu0 %v1306
        %3084 = vmatmul.f32.gmra.mxu0 %v1030
        %v3085 = vpop.f32.mrf.mxu0
        %v3086 = vadd.f32 %v3066, %v3085
        %3087 = vdwg.mxu0
        %3088 = vmatpush.msra.mxu0 %v1554
        %3089 = vmatpush.msra.mxu0 %v1546
        %3090 = vmatpush.msra.mxu0 %v1538
        %3091 = vmatpush.msra.mxu0 %v1530
        %3092 = vmatpush.msra.mxu0 %v1522
        %3093 = vmatpush.msra.mxu0 %v1514
        %3094 = vmatpush.msra.mxu0 %v1506
        %3095 = vmatpush.msra.mxu0 %v1498
        %3096 = vmatpush.msra.mxu0 %v1490
        %3097 = vmatpush.msra.mxu0 %v1482
        %3098 = vmatpush.msra.mxu0 %v1474
        %3099 = vmatpush.msra.mxu0 %v1466
        %3100 = vmatpush.msra.mxu0 %v1458
        %3101 = vmatpush.msra.mxu0 %v1450
        %3102 = vmatpush.msra.mxu0 %v1442
        %3103 = vmatpush.msra.mxu0 %v1434
        %3104 = vmatmul.f32.gmra.mxu0 %v1031
        %v3105 = vpop.f32.mrf.mxu0
        %v3106 = vadd.f32 %v3086, %v3105
        %3107 = vdwg.mxu0
        %3108 = vmatpush.msra.mxu0 %v1682
        %3109 = vmatpush.msra.mxu0 %v1674
        %3110 = vmatpush.msra.mxu0 %v1666
        %3111 = vmatpush.msra.mxu0 %v1658
        %3112 = vmatpush.msra.mxu0 %v1650
        %3113 = vmatpush.msra.mxu0 %v1642
        %3114 = vmatpush.msra.mxu0 %v1634
        %3115 = vmatpush.msra.mxu0 %v1626
        %3116 = vmatpush.msra.mxu0 %v1618
        %3117 = vmatpush.msra.mxu0 %v1610
        %3118 = vmatpush.msra.mxu0 %v1602
        %3119 = vmatpush.msra.mxu0 %v1594
        %3120 = vmatpush.msra.mxu0 %v1586
        %3121 = vmatpush.msra.mxu0 %v1578
        %3122 = vmatpush.msra.mxu0 %v1570
        %3123 = vmatpush.msra.mxu0 %v1562
        %3124 = vmatmul.f32.gmra.mxu0 %v1032
        %v3125 = vpop.f32.mrf.mxu0
        %v3126 = vadd.f32 %v3106, %v3125
        %3127 = vdwg.mxu0
        %3128 = vmatpush.msra.mxu0 %v1810
        %3129 = vmatpush.msra.mxu0 %v1802
        %3130 = vmatpush.msra.mxu0 %v1794
        %3131 = vmatpush.msra.mxu0 %v1786
        %3132 = vmatpush.msra.mxu0 %v1778
        %3133 = vmatpush.msra.mxu0 %v1770
        %3134 = vmatpush.msra.mxu0 %v1762
        %3135 = vmatpush.msra.mxu0 %v1754
        %3136 = vmatpush.msra.mxu0 %v1746
        %3137 = vmatpush.msra.mxu0 %v1738
        %3138 = vmatpush.msra.mxu0 %v1730
        %3139 = vmatpush.msra.mxu0 %v1722
        %3140 = vmatpush.msra.mxu0 %v1714
        %3141 = vmatpush.msra.mxu0 %v1706
        %3142 = vmatpush.msra.mxu0 %v1698
        %3143 = vmatpush.msra.mxu0 %v1690
        %3144 = vmatmul.f32.gmra.mxu0 %v1033
        %v3145 = vpop.f32.mrf.mxu0
        %v3146 = vadd.f32 %v3126, %v3145
        %3147 = vdwg.mxu0
        %3148 = vmatpush.msra.mxu0 %v1938
        %3149 = vmatpush.msra.mxu0 %v1930
        %3150 = vmatpush.msra.mxu0 %v1922
        %3151 = vmatpush.msra.mxu0 %v1914
        %3152 = vmatpush.msra.mxu0 %v1906
        %3153 = vmatpush.msra.mxu0 %v1898
        %3154 = vmatpush.msra.mxu0 %v1890
        %3155 = vmatpush.msra.mxu0 %v1882
        %3156 = vmatpush.msra.mxu0 %v1874
        %3157 = vmatpush.msra.mxu0 %v1866
        %3158 = vmatpush.msra.mxu0 %v1858
        %3159 = vmatpush.msra.mxu0 %v1850
        %3160 = vmatpush.msra.mxu0 %v1842
        %3161 = vmatpush.msra.mxu0 %v1834
        %3162 = vmatpush.msra.mxu0 %v1826
        %3163 = vmatpush.msra.mxu0 %v1818
        %3164 = vmatmul.f32.gmra.mxu0 %v1034
        %v3165 = vpop.f32.mrf.mxu0
        %v3166 = vadd.f32 %v3146, %v3165
        %3167 = vdwg.mxu0
        %3168 = vmatpush.msra.mxu0 %v2066
        %3169 = vmatpush.msra.mxu0 %v2058
        %3170 = vmatpush.msra.mxu0 %v2050
        %3171 = vmatpush.msra.mxu0 %v2042
        %3172 = vmatpush.msra.mxu0 %v2034
        %3173 = vmatpush.msra.mxu0 %v2026
        %3174 = vmatpush.msra.mxu0 %v2018
        %3175 = vmatpush.msra.mxu0 %v2010
        %3176 = vmatpush.msra.mxu0 %v2002
        %3177 = vmatpush.msra.mxu0 %v1994
        %3178 = vmatpush.msra.mxu0 %v1986
        %3179 = vmatpush.msra.mxu0 %v1978
        %3180 = vmatpush.msra.mxu0 %v1970
        %3181 = vmatpush.msra.mxu0 %v1962
        %3182 = vmatpush.msra.mxu0 %v1954
        %3183 = vmatpush.msra.mxu0 %v1946
        %3184 = vmatmul.f32.gmra.mxu0 %v1035
        %v3185 = vpop.f32.mrf.mxu0
        %v3186 = vadd.f32 %v3166, %v3185
        %3187 = vdwg.mxu0
        %3188 = vmatpush.msra.mxu0 %v1171
        %3189 = vmatpush.msra.mxu0 %v1163
        %3190 = vmatpush.msra.mxu0 %v1155
        %3191 = vmatpush.msra.mxu0 %v1147
        %3192 = vmatpush.msra.mxu0 %v1139
        %3193 = vmatpush.msra.mxu0 %v1131
        %3194 = vmatpush.msra.mxu0 %v1123
        %3195 = vmatpush.msra.mxu0 %v1115
        %3196 = vmatpush.msra.mxu0 %v1107
        %3197 = vmatpush.msra.mxu0 %v1099
        %3198 = vmatpush.msra.mxu0 %v1091
        %3199 = vmatpush.msra.mxu0 %v1083
        %3200 = vmatpush.msra.mxu0 %v1075
        %3201 = vmatpush.msra.mxu0 %v1067
        %3202 = vmatpush.msra.mxu0 %v1059
        %3203 = vmatpush.msra.mxu0 %v1051
        %3204 = vmatmul.f32.gmra.mxu0 %v1028
        %v3205 = vpop.f32.mrf.mxu0
        %v3206 = vadd.f32 0.0, %v3205
        %3207 = vdwg.mxu0
        %3208 = vmatpush.msra.mxu0 %v1299
        %3209 = vmatpush.msra.mxu0 %v1291
        %3210 = vmatpush.msra.mxu0 %v1283
        %3211 = vmatpush.msra.mxu0 %v1275
        %3212 = vmatpush.msra.mxu0 %v1267
        %3213 = vmatpush.msra.mxu0 %v1259
        %3214 = vmatpush.msra.mxu0 %v1251
        %3215 = vmatpush.msra.mxu0 %v1243
        %3216 = vmatpush.msra.mxu0 %v1235
        %3217 = vmatpush.msra.mxu0 %v1227
        %3218 = vmatpush.msra.mxu0 %v1219
        %3219 = vmatpush.msra.mxu0 %v1211
        %3220 = vmatpush.msra.mxu0 %v1203
        %3221 = vmatpush.msra.mxu0 %v1195
        %3222 = vmatpush.msra.mxu0 %v1187
        %3223 = vmatpush.msra.mxu0 %v1179
        %3224 = vmatmul.f32.gmra.mxu0 %v1029
        %v3225 = vpop.f32.mrf.mxu0
        %v3226 = vadd.f32 %v3206, %v3225
        %3227 = vdwg.mxu0
        %3228 = vmatpush.msra.mxu0 %v1427
        %3229 = vmatpush.msra.mxu0 %v1419
        %3230 = vmatpush.msra.mxu0 %v1411
        %3231 = vmatpush.msra.mxu0 %v1403
        %3232 = vmatpush.msra.mxu0 %v1395
        %3233 = vmatpush.msra.mxu0 %v1387
        %3234 = vmatpush.msra.mxu0 %v1379
        %3235 = vmatpush.msra.mxu0 %v1371
        %3236 = vmatpush.msra.mxu0 %v1363
        %3237 = vmatpush.msra.mxu0 %v1355
        %3238 = vmatpush.msra.mxu0 %v1347
        %3239 = vmatpush.msra.mxu0 %v1339
        %3240 = vmatpush.msra.mxu0 %v1331
        %3241 = vmatpush.msra.mxu0 %v1323
        %3242 = vmatpush.msra.mxu0 %v1315
        %3243 = vmatpush.msra.mxu0 %v1307
        %3244 = vmatmul.f32.gmra.mxu0 %v1030
        %v3245 = vpop.f32.mrf.mxu0
        %v3246 = vadd.f32 %v3226, %v3245
        %3247 = vdwg.mxu0
        %3248 = vmatpush.msra.mxu0 %v1555
        %3249 = vmatpush.msra.mxu0 %v1547
        %3250 = vmatpush.msra.mxu0 %v1539
        %3251 = vmatpush.msra.mxu0 %v1531
        %3252 = vmatpush.msra.mxu0 %v1523
        %3253 = vmatpush.msra.mxu0 %v1515
        %3254 = vmatpush.msra.mxu0 %v1507
        %3255 = vmatpush.msra.mxu0 %v1499
        %3256 = vmatpush.msra.mxu0 %v1491
        %3257 = vmatpush.msra.mxu0 %v1483
        %3258 = vmatpush.msra.mxu0 %v1475
        %3259 = vmatpush.msra.mxu0 %v1467
        %3260 = vmatpush.msra.mxu0 %v1459
        %3261 = vmatpush.msra.mxu0 %v1451
        %3262 = vmatpush.msra.mxu0 %v1443
        %3263 = vmatpush.msra.mxu0 %v1435
        %3264 = vmatmul.f32.gmra.mxu0 %v1031
        %v3265 = vpop.f32.mrf.mxu0
        %v3266 = vadd.f32 %v3246, %v3265
        %3267 = vdwg.mxu0
        %3268 = vmatpush.msra.mxu0 %v1683
        %3269 = vmatpush.msra.mxu0 %v1675
        %3270 = vmatpush.msra.mxu0 %v1667
        %3271 = vmatpush.msra.mxu0 %v1659
        %3272 = vmatpush.msra.mxu0 %v1651
        %3273 = vmatpush.msra.mxu0 %v1643
        %3274 = vmatpush.msra.mxu0 %v1635
        %3275 = vmatpush.msra.mxu0 %v1627
        %3276 = vmatpush.msra.mxu0 %v1619
        %3277 = vmatpush.msra.mxu0 %v1611
        %3278 = vmatpush.msra.mxu0 %v1603
        %3279 = vmatpush.msra.mxu0 %v1595
        %3280 = vmatpush.msra.mxu0 %v1587
        %3281 = vmatpush.msra.mxu0 %v1579
        %3282 = vmatpush.msra.mxu0 %v1571
        %3283 = vmatpush.msra.mxu0 %v1563
        %3284 = vmatmul.f32.gmra.mxu0 %v1032
        %v3285 = vpop.f32.mrf.mxu0
        %v3286 = vadd.f32 %v3266, %v3285
        %3287 = vdwg.mxu0
        %3288 = vmatpush.msra.mxu0 %v1811
        %3289 = vmatpush.msra.mxu0 %v1803
        %3290 = vmatpush.msra.mxu0 %v1795
        %3291 = vmatpush.msra.mxu0 %v1787
        %3292 = vmatpush.msra.mxu0 %v1779
        %3293 = vmatpush.msra.mxu0 %v1771
        %3294 = vmatpush.msra.mxu0 %v1763
        %3295 = vmatpush.msra.mxu0 %v1755
        %3296 = vmatpush.msra.mxu0 %v1747
        %3297 = vmatpush.msra.mxu0 %v1739
        %3298 = vmatpush.msra.mxu0 %v1731
        %3299 = vmatpush.msra.mxu0 %v1723
        %3300 = vmatpush.msra.mxu0 %v1715
        %3301 = vmatpush.msra.mxu0 %v1707
        %3302 = vmatpush.msra.mxu0 %v1699
        %3303 = vmatpush.msra.mxu0 %v1691
        %3304 = vmatmul.f32.gmra.mxu0 %v1033
        %v3305 = vpop.f32.mrf.mxu0
        %v3306 = vadd.f32 %v3286, %v3305
        %3307 = vdwg.mxu0
        %3308 = vmatpush.msra.mxu0 %v1939
        %3309 = vmatpush.msra.mxu0 %v1931
        %3310 = vmatpush.msra.mxu0 %v1923
        %3311 = vmatpush.msra.mxu0 %v1915
        %3312 = vmatpush.msra.mxu0 %v1907
        %3313 = vmatpush.msra.mxu0 %v1899
        %3314 = vmatpush.msra.mxu0 %v1891
        %3315 = vmatpush.msra.mxu0 %v1883
        %3316 = vmatpush.msra.mxu0 %v1875
        %3317 = vmatpush.msra.mxu0 %v1867
        %3318 = vmatpush.msra.mxu0 %v1859
        %3319 = vmatpush.msra.mxu0 %v1851
        %3320 = vmatpush.msra.mxu0 %v1843
        %3321 = vmatpush.msra.mxu0 %v1835
        %3322 = vmatpush.msra.mxu0 %v1827
        %3323 = vmatpush.msra.mxu0 %v1819
        %3324 = vmatmul.f32.gmra.mxu0 %v1034
        %v3325 = vpop.f32.mrf.mxu0
        %v3326 = vadd.f32 %v3306, %v3325
        %3327 = vdwg.mxu0
        %3328 = vmatpush.msra.mxu0 %v2067
        %3329 = vmatpush.msra.mxu0 %v2059
        %3330 = vmatpush.msra.mxu0 %v2051
        %3331 = vmatpush.msra.mxu0 %v2043
        %3332 = vmatpush.msra.mxu0 %v2035
        %3333 = vmatpush.msra.mxu0 %v2027
        %3334 = vmatpush.msra.mxu0 %v2019
        %3335 = vmatpush.msra.mxu0 %v2011
        %3336 = vmatpush.msra.mxu0 %v2003
        %3337 = vmatpush.msra.mxu0 %v1995
        %3338 = vmatpush.msra.mxu0 %v1987
        %3339 = vmatpush.msra.mxu0 %v1979
        %3340 = vmatpush.msra.mxu0 %v1971
        %3341 = vmatpush.msra.mxu0 %v1963
        %3342 = vmatpush.msra.mxu0 %v1955
        %3343 = vmatpush.msra.mxu0 %v1947
        %3344 = vmatmul.f32.gmra.mxu0 %v1035
        %v3345 = vpop.f32.mrf.mxu0
        %v3346 = vadd.f32 %v3326, %v3345
        %3347 = vdwg.mxu0
        %v3348 = vadd.f32 %v1036, %v2226
        %v3349 = vadd.f32 %v1037, %v2386
        %v3350 = vadd.f32 %v1038, %v2546
        %v3351 = vadd.f32 %v1039, %v2706
        %v3352 = vadd.f32 %v1040, %v2866
        %v3353 = vadd.f32 %v1041, %v3026
        %v3354 = vadd.f32 %v1042, %v3186
        %v3355 = vadd.f32 %v1043, %v3346
        %3356 = vst [vmem:[#allocation2] sm:$0xff] %v3348
        %3357 = vst [vmem:[#allocation2 + $0x8] sm:$0xff] %v3349
        %3358 = vst [vmem:[#allocation2 + $0x10] sm:$0xff] %v3350
        %3359 = vst [vmem:[#allocation2 + $0x18] sm:$0xff] %v3351
        %3360 = vst [vmem:[#allocation2 + $0x20] sm:$0xff] %v3352
        %3361 = vst [vmem:[#allocation2 + $0x28] sm:$0xff] %v3353
        %3362 = vst [vmem:[#allocation2 + $0x30] sm:$0xff] %v3354
        %3363 = vst [vmem:[#allocation2 + $0x38] sm:$0xff] %v3355
        %p3364 = scmp.eq.s32.totalorder %s30, 1
        // Predicated region
        $region73: #{critic_forward.1} parent=43 // pred_check
          %p3365 = pneg %p3364
        $region74: #{critic_forward.1} parent=43 // pred_check_branch
          %3367 = sbr.rel (%p3365) target = $region76
        $region75: #{critic_forward.1} parent=43 // pred_region
          %v3368 = vld [vmem:[#allocation2] sm:$0xff]
          %v3369 = vld [vmem:[#allocation2 + $0x8] sm:$0xff]
          %v3370 = vld [vmem:[#allocation2 + $0x10] sm:$0xff]
          %v3371 = vld [vmem:[#allocation2 + $0x18] sm:$0xff]
          %v3372 = vld [vmem:[#allocation2 + $0x20] sm:$0xff]
          %v3373 = vld [vmem:[#allocation2 + $0x28] sm:$0xff]
          %v3374 = vld [vmem:[#allocation2 + $0x30] sm:$0xff]
          %v3375 = vld [vmem:[#allocation2 + $0x38] sm:$0xff]
          %v3376 = vld [vmem:[%s357] sm:$0xff]
          %v3378 = vperm.slane %v3376, 0
          %v3379 = vperm.slane %v3376, 1
          %v3380 = vperm.slane %v3376, 2
          %v3381 = vperm.slane %v3376, 3
          %v3382 = vperm.slane %v3376, 4
          %v3383 = vperm.slane %v3376, 5
          %v3384 = vperm.slane %v3376, 6
          %v3385 = vperm.slane %v3376, 7
          %v3394 = vadd.f32 %v3368, %v3378
          %v3395 = vadd.f32 %v3369, %v3379
          %v3396 = vadd.f32 %v3370, %v3380
          %v3397 = vadd.f32 %v3371, %v3381
          %v3398 = vadd.f32 %v3372, %v3382
          %v3399 = vadd.f32 %v3373, %v3383
          %v3400 = vadd.f32 %v3374, %v3384
          %v3401 = vadd.f32 %v3375, %v3385
          %v3402 = vmax.f32 %v3394, 0.0
          %v3403 = vmax.f32 %v3395, 0.0
          %v3404 = vmax.f32 %v3396, 0.0
          %v3405 = vmax.f32 %v3397, 0.0
          %v3406 = vmax.f32 %v3398, 0.0
          %v3407 = vmax.f32 %v3399, 0.0
          %v3408 = vmax.f32 %v3400, 0.0
          %v3409 = vmax.f32 %v3401, 0.0
          %v3410 = vld [vmem:[%s367] sm:$0xff]
          %v3412 = vperm.slane %v3410, 0
          %v3413 = vperm.slane %v3410, 1
          %v3414 = vperm.slane %v3410, 2
          %v3415 = vperm.slane %v3410, 3
          %v3416 = vperm.slane %v3410, 4
          %v3417 = vperm.slane %v3410, 5
          %v3418 = vperm.slane %v3410, 6
          %v3419 = vperm.slane %v3410, 7
          %v3428 = vmul.f32 %v3402, %v3412
          %v3429 = vmul.f32 %v3403, %v3413
          %v3430 = vmul.f32 %v3404, %v3414
          %v3431 = vmul.f32 %v3405, %v3415
          %v3432 = vmul.f32 %v3406, %v3416
          %v3433 = vmul.f32 %v3407, %v3417
          %v3434 = vmul.f32 %v3408, %v3418
          %v3435 = vmul.f32 %v3409, %v3419
          %v3436 = vadd.f32 %v3428, %v3429
          %v3437 = vadd.f32 %v3436, %v3430
          %v3438 = vadd.f32 %v3437, %v3431
          %v3439 = vadd.f32 %v3438, %v3432
          %v3440 = vadd.f32 %v3439, %v3433
          %v3441 = vadd.f32 %v3440, %v3434
          %v3442 = vadd.f32 %v3441, %v3435
          %3443 = vadd.xlane.f32.xlu0 %v3442
          %v3444 = vpop.xlane.xlu0 %3443
          %vm3445 = vcmask 7168
          %3446 = vst.msk [vmem:[%s413] sm:$0xff] %vm3445, %v3444
        $region76: #{critic_forward.1} parent=43 // pred_fallthru
          _
        %p3447 = scmp.lt.s32.totalorder %s29, 1
        %s3448 = scalar_select %p3447, %s29, 1
        %s3449 = smul.addr %s3448, 8
        %s3450 = scalar_lea.vmem %s6, %s3449
        // Predicated region
        $region77: #{critic_forward.1} parent=43 // pred_check
          %p3451 = pneg %p198
        $region78: #{critic_forward.1} parent=43 // pred_check_branch
          %3453 = sbr.rel (%p3451) target = $region80
        $region79: #{critic_forward.1} parent=43 // pred_region
          _
        $region80: #{critic_forward.1} parent=43 // pred_fallthru
          _
      $region44: #{critic_forward.1} parent=5 // pred_fallthru
        _
      %p3454 = scmp.le.s32.totalorder 2, %s20
      // Predicated region
      $region81: #{critic_forward.1} parent=5 // pred_check
        %p3455 = pneg %p3454
      $region82: #{critic_forward.1} parent=5 // pred_check_branch
        %3457 = sbr.rel (%p3455) target = $region84
      $region83: #{critic_forward.1} parent=5 // pred_region
        %s3458 = ssub.s32 %s20, 2
        // Predicated region
        $region85: #{critic_forward.1} parent=83 // pred_check
          %p3459 = pneg %p204
        $region86: #{critic_forward.1} parent=83 // pred_check_branch
          %3461 = sbr.rel (%p3459) target = $region88
        $region87: #{critic_forward.1} parent=83 // pred_region
          %p3462 = scmp.lt.s32.totalorder %s31, 1
          %s3463 = scalar_select %p3462, %s31, 1
          %s3464 = smul.addr %s3463, 8
          %s3465 = scalar_lea.vmem %s6, %s3464
        $region88: #{critic_forward.1} parent=83 // pred_fallthru
          _
      $region84: #{critic_forward.1} parent=5 // pred_fallthru
        _
    $region6: #{critic_forward.1} parent=1 // loop_footer
      %s24 = sadd.s32 1, %s20
    $region7: #{critic_forward.1} parent=1 // loop_footer_branch
      %19 = sbr.rel target = $region3
    $region8: #{critic_forward.1} parent=1 // loop_exit
      _
    %3466 = vsyncpa [#allocation4], 1
    %s3467 = scalar_lea.sflag [#allocation4], 1
    %3468 = vsyncpa %s3467, 1
    %3469 = vsyncpa [#allocation6], 1
    %3470 = vsyncpa [#allocation9], 1
    %s3471 = scalar_lea.sflag [#allocation9], 1
    %3472 = vsyncpa %s3471, 1
    %3473 = vsyncpa [#allocation12], 1
    %s3474 = scalar_lea.sflag [#allocation12], 1
    %3475 = vsyncpa %s3474, 1

</llo_original>
